<compile_context>
chip_gen: v7x
topology: tpu7x:2x2x1
jax: 0.10.0
libtpu: 0.0.40
codegen_flags: <defaults>
</compile_context>

<pallas_src>
import functools

import jax
import jax.numpy as jnp
from jax.experimental import pallas as pl
from jax.experimental.pallas import tpu as pltpu

_LANE = 128
_SUBLANE = 8


def _round_up(n, m):
    return ((n + m - 1) // m) * m


def _pick_time_tile(T, max_tile=32):
    """Largest divisor of T that is <= max_tile (time steps per grid iteration)."""
    tt = min(T, max_tile)
    while T % tt:
        tt -= 1
    return tt


def _gru_recurrent_kernel(gi_ref, whh_any, bhn_ref, out_ref,
                          h_scratch, whh_vmem, dma_sem,
                          *, time_tile, hp, emit_sequence):
    """One grid step == `time_tile` time steps of the GRU recurrence.

    gi_ref : (Tt, Bp, 3Hp) precomputed x@W_ih^T + b_ih (+ b_hh for r/z gates)
    whh_any: (Hp, 3Hp) weights left in HBM (pl.ANY); copied once into whh_vmem
    bhn_ref: (1, Hp) b_hh for the n gate (must stay inside the r-multiply)
    out_ref: (Tt, Bp, Hp) hidden sequence, or (1, Bp, Hp) final state only
    """
    @pl.when(pl.program_id(0) == 0)
    def _init():
        h_scratch[...] = jnp.zeros_like(h_scratch)
        cp = pltpu.make_async_copy(whh_any, whh_vmem, dma_sem)
        cp.start()
        cp.wait()

    w_hh = whh_vmem[...]          # (Hp, 3Hp) bf16, loaded once per layer
    b_hn = bhn_ref[...]           # (1, Hp)   f32

    def step(t, h_prev):
        gi = gi_ref[t]            # (Bp, 3Hp) f32
        gh = jnp.dot(h_prev.astype(w_hh.dtype), w_hh,
                     preferred_element_type=jnp.float32)   # (Bp, 3Hp) f32
        r = jax.nn.sigmoid(gi[:, 0 * hp:1 * hp] + gh[:, 0 * hp:1 * hp])
        z = jax.nn.sigmoid(gi[:, 1 * hp:2 * hp] + gh[:, 1 * hp:2 * hp])
        n = jnp.tanh(gi[:, 2 * hp:3 * hp] + r * (gh[:, 2 * hp:3 * hp] + b_hn))
        h_new = (1.0 - z) * n + z * h_prev
        if emit_sequence:
            out_ref[t] = h_new.astype(out_ref.dtype)
        return h_new

    h_final = jax.lax.fori_loop(0, time_tile, step, h_scratch[...], unroll=True)
    h_scratch[...] = h_final

    if not emit_sequence:
        @pl.when(pl.program_id(0) == pl.num_programs(0) - 1)
        def _finalize():
            out_ref[0] = h_final.astype(out_ref.dtype)


def _gru_recurrent_layer(gi, w_hh_t, b_hh_n, *, emit_sequence, time_tile):
    """Run the recurrent part of one GRU layer over the full (padded) sequence."""
    T, Bp, H3p = gi.shape
    Hp = H3p // 3
    n_chunks = T // time_tile

    kernel = functools.partial(_gru_recurrent_kernel,
                               time_tile=time_tile, hp=Hp,
                               emit_sequence=emit_sequence)

    if emit_sequence:
        out_shape = jax.ShapeDtypeStruct((T, Bp, Hp), jnp.float32)
        out_spec = pl.BlockSpec((time_tile, Bp, Hp), lambda t: (t, 0, 0))
    else:
        out_shape = jax.ShapeDtypeStruct((1, Bp, Hp), jnp.float32)
        out_spec = pl.BlockSpec((1, Bp, Hp), lambda t: (0, 0, 0))

    return pl.pallas_call(
        kernel,
        out_shape=out_shape,
        grid_spec=pltpu.PrefetchScalarGridSpec(
            num_scalar_prefetch=0,
            grid=(n_chunks,),
            in_specs=[
                pl.BlockSpec((time_tile, Bp, H3p), lambda t: (t, 0, 0)),
                pl.BlockSpec(memory_space=pl.ANY),      # W_hh stays in HBM; copied once
                pl.BlockSpec((1, Hp), lambda t: (0, 0)),
            ],
            out_specs=out_spec,
            scratch_shapes=[
                pltpu.VMEM((Bp, Hp), jnp.float32),       # carried hidden state
                pltpu.VMEM((Hp, H3p), w_hh_t.dtype),     # single-buffered W_hh
                pltpu.SemaphoreType.DMA,
            ],
        ),
        compiler_params=pltpu.CompilerParams(
            dimension_semantics=("arbitrary",),          # serial time recurrence
        ),
    )(gi, w_hh_t, b_hh_n)


def _prep_layer_params(p, H, Hp, Dp, weight_dtype):
    """Pad PyTorch-layout GRU params to lane-dense shapes, gate order [r, z, n]."""
    d_in = p["w_ih"].shape[1]

    w_ih = p["w_ih"].reshape(3, H, d_in).astype(jnp.float32)
    w_ih = jnp.pad(w_ih, ((0, 0), (0, Hp - H), (0, Dp - d_in)))
    w_ih_t = jnp.transpose(w_ih, (2, 0, 1)).reshape(Dp, 3 * Hp).astype(weight_dtype)

    w_hh = p["w_hh"].reshape(3, H, H).astype(jnp.float32)
    w_hh = jnp.pad(w_hh, ((0, 0), (0, Hp - H), (0, Hp - H)))
    w_hh_t = jnp.transpose(w_hh, (2, 0, 1)).reshape(Hp, 3 * Hp).astype(weight_dtype)

    b_ih = jnp.pad(p["b_ih"].reshape(3, H).astype(jnp.float32), ((0, 0), (0, Hp - H)))
    b_hh = jnp.pad(p["b_hh"].reshape(3, H).astype(jnp.float32), ((0, 0), (0, Hp - H)))

    # Fold b_ih fully and b_hh for the r/z gates into the hoisted gi precompute;
    # b_hh for the n gate must stay inside the r-multiply -> passed to the kernel.
    gi_bias = b_ih.at[0].add(b_hh[0]).at[1].add(b_hh[1]).reshape(3 * Hp)
    b_hh_n = b_hh[2].reshape(1, Hp)
    return w_ih_t, w_hh_t, gi_bias, b_hh_n


def gru_uni_to_linear(x_btd, params, weight_dtype=jnp.bfloat16):
    """Forward pass of GRU_uni_toLinear.

    x_btd:  (B, T, input_size), batch_first like PyTorch.
    params: list (per layer) of dicts with 'w_ih' (3H, D_in), 'w_hh' (3H, H),
            'b_ih' (3H,), 'b_hh' (3H,)   -- gate order [r, z, n].
    returns (B, H) == r_out[:, -1, :]
    """
    B, T, _ = x_btd.shape
    H = params[0]["w_hh"].shape[1]
    Hp = _round_up(H, _LANE)
    Bp = _round_up(B, _SUBLANE)
    tt = _pick_time_tile(T)

    seq = jnp.transpose(x_btd, (1, 0, 2)).astype(jnp.float32)   # (T, B, D)
    seq = jnp.pad(seq, ((0, 0), (0, Bp - B), (0, 0)))            # (T, Bp, D)

    n_layers = len(params)
    for li, p in enumerate(params):
        d_in = p["w_ih"].shape[1]
        Dp = _round_up(d_in, _LANE)
        if seq.shape[-1] < Dp:
            seq = jnp.pad(seq, ((0, 0), (0, 0), (0, Dp - seq.shape[-1])))

        w_ih_t, w_hh_t, gi_bias, b_hh_n = _prep_layer_params(p, H, Hp, Dp, weight_dtype)

        # Hoisted non-recurrent input projection: one (T*Bp, Dp) x (Dp, 3Hp) matmul.
        gi = jnp.dot(seq.reshape(T * Bp, Dp).astype(weight_dtype), w_ih_t,
                     preferred_element_type=jnp.float32)
        gi = gi.reshape(T, Bp, 3 * Hp) + gi_bias

        last = li == n_layers - 1
        seq = _gru_recurrent_layer(gi, w_hh_t, b_hh_n,
                                   emit_sequence=not last, time_tile=tt)

    return seq[-1, :B, :H]   # last time step of the top layer -> (B, H)


def init_gru_params(key, input_size, hidden_size, num_layers):
    """Deterministic init matching PyTorch GRU parameter shapes (U(-k, k), k=1/sqrt(H))."""
    k = 1.0 / jnp.sqrt(jnp.float32(hidden_size))
    params = []
    for layer in range(num_layers):
        d_in = input_size if layer == 0 else hidden_size
        key, k1, k2, k3, k4 = jax.random.split(key, 5)
        params.append({
            "w_ih": jax.random.uniform(k1, (3 * hidden_size, d_in), jnp.float32, -k, k),
            "w_hh": jax.random.uniform(k2, (3 * hidden_size, hidden_size), jnp.float32, -k, k),
            "b_ih": jax.random.uniform(k3, (3 * hidden_size,), jnp.float32, -k, k),
            "b_hh": jax.random.uniform(k4, (3 * hidden_size,), jnp.float32, -k, k),
        })
    return params


def _gru_reference(x_btd, params, weight_dtype=jnp.bfloat16):
    """Pure-JAX reference (same math as torch.nn.GRU forward, bf16 matmul inputs)."""
    B = x_btd.shape[0]
    h_seq = jnp.transpose(x_btd, (1, 0, 2)).astype(jnp.float32)  # (T, B, D)
    for p in params:
        H = p["w_hh"].shape[1]
        w_ih_t = p["w_ih"].T.astype(weight_dtype)
        w_hh_t = p["w_hh"].T.astype(weight_dtype)
        b_ih = p["b_ih"].astype(jnp.float32)
        b_hh = p["b_hh"].astype(jnp.float32)

        def step(h, x_t):
            gi = jnp.dot(x_t.astype(weight_dtype), w_ih_t,
                         preferred_element_type=jnp.float32) + b_ih
            gh = jnp.dot(h.astype(weight_dtype), w_hh_t,
                         preferred_element_type=jnp.float32) + b_hh
            r = jax.nn.sigmoid(gi[:, :H] + gh[:, :H])
            z = jax.nn.sigmoid(gi[:, H:2 * H] + gh[:, H:2 * H])
            n = jnp.tanh(gi[:, 2 * H:] + r * gh[:, 2 * H:])
            h_new = (1.0 - z) * n + z * h
            return h_new, h_new

        _, outs = jax.lax.scan(step, jnp.zeros((B, H), jnp.float32), h_seq)
        h_seq = outs
    return h_seq[-1]


if __name__ == "__main__":
    B, T, INPUT_SIZE, HIDDEN_SIZE, NUM_LAYERS = 2, 8, 16, 32, 2

    key = jax.random.PRNGKey(0)
    key_x, key_p = jax.random.split(key)
    x = jax.random.normal(key_x, (B, T, INPUT_SIZE), jnp.float32)
    params = init_gru_params(key_p, INPUT_SIZE, HIDDEN_SIZE, NUM_LAYERS)

    out = jax.block_until_ready(jax.jit(gru_uni_to_linear)(x, params))
    ref = jax.block_until_ready(_gru_reference(x, params))

    assert out.shape == (B, HIDDEN_SIZE), out.shape
    max_err = float(jnp.max(jnp.abs(out - ref)))
    assert jnp.allclose(out, ref, atol=1e-3, rtol=1e-3), max_err

    print("KERNEL_OK")
</pallas_src>

<mosaic_0001>
module attributes {stable_mosaic.version = 11 : i64} {
  func.func @_gru_recurrent_kernel(%arg0: i32, %arg1: memref<8x8x384xf32, #tpu.memory_space<vmem>>, %arg2: memref<128x384xbf16, #tpu.memory_space<any>>, %arg3: memref<1x128xf32, #tpu.memory_space<vmem>>, %arg4: memref<8x8x128xf32, #tpu.memory_space<vmem>>, %arg5: memref<8x128xf32, #tpu.memory_space<vmem>>, %arg6: memref<128x384xbf16, #tpu.memory_space<vmem>>, %arg7: memref<!tpu.dma_semaphore, #tpu.memory_space<semaphore_mem>>) attributes {dimension_semantics = [#tpu.dimension_semantics<arbitrary>], iteration_bounds = array<i64: 1>, scalar_prefetch = 0 : i64, scratch_operands = 3 : i64, tpu.core_type = #tpu.core_type<tc>, window_params = [{transform_indices = @transform_0, window_bounds = array<i64: 8, 8, 384>}, {}, {pipeline_mode = #tpu.pipeline_mode<synchronous>, transform_indices = @transform_2, window_bounds = array<i64: 1, 128>}, {transform_indices = @transform_3, window_bounds = array<i64: 8, 8, 128>}]} {
    %c0_i32 = arith.constant 0 : i32
    %0 = arith.cmpi eq, %arg0, %c0_i32 : i32
    %1 = arith.extui %0 : i1 to i32
    %c0_i32_0 = arith.constant 0 : i32
    %2 = arith.cmpi ne, %1, %c0_i32_0 : i32
    scf.if %2 {
      %cst_72 = arith.constant 0.000000e+00 : f32
      %303 = vector.broadcast %cst_72 : f32 to vector<8x128xf32>
      %c0_73 = arith.constant 0 : index
      %c0_74 = arith.constant 0 : index
      %304 = vector.load %arg5[%c0_73, %c0_74] : memref<8x128xf32, #tpu.memory_space<vmem>>, vector<8x128xf32>
      tpu.vector_store %arg5[%c0_73, %c0_74], %303 {strides = array<i32>} : memref<8x128xf32, #tpu.memory_space<vmem>>, vector<8x128xf32>,
      tpu.enqueue_dma source(%arg2 : memref<128x384xbf16, #tpu.memory_space<any>>) target(%arg6 : memref<128x384xbf16, #tpu.memory_space<vmem>>) target_semaphore(%arg7 : memref<!tpu.dma_semaphore, #tpu.memory_space<semaphore_mem>>)
      tpu.wait_dma2 semaphore(%arg7 : memref<!tpu.dma_semaphore, #tpu.memory_space<semaphore_mem>>) src(%arg2 : memref<128x384xbf16, #tpu.memory_space<any>>) dst(%arg6 : memref<128x384xbf16, #tpu.memory_space<vmem>>)
    } else {
    }
    %c0 = arith.constant 0 : index
    %c0_1 = arith.constant 0 : index
    %3 = vector.load %arg6[%c0, %c0_1] : memref<128x384xbf16, #tpu.memory_space<vmem>>, vector<128x384xbf16>
    %c0_2 = arith.constant 0 : index
    %c0_3 = arith.constant 0 : index
    %4 = vector.load %arg3[%c0_2, %c0_3] : memref<1x128xf32, #tpu.memory_space<vmem>>, vector<1x128xf32>
    %c0_4 = arith.constant 0 : index
    %c0_5 = arith.constant 0 : index
    %5 = vector.load %arg5[%c0_4, %c0_5] : memref<8x128xf32, #tpu.memory_space<vmem>>, vector<8x128xf32>
    %c0_i32_6 = arith.constant 0 : i32
    %6 = arith.index_cast %c0_i32_6 : i32 to index
    %c0_7 = arith.constant 0 : index
    %c0_8 = arith.constant 0 : index
    %7 = vector.load %arg1[%6, %c0_7, %c0_8] : memref<8x8x384xf32, #tpu.memory_space<vmem>>, vector<1x8x384xf32>
    %8 = vector.shape_cast %7 : vector<1x8x384xf32> to vector<8x384xf32>
    %9 = arith.truncf %5 : vector<8x128xf32> to vector<8x128xbf16>
    %cst = arith.constant dense<0.000000e+00> : vector<8x384xf32>
    %10 = tpu.matmul %9, %3, %cst {dimension_numbers = #tpu.dot_dimension_numbers<[1], [0], [0], [1], [0, 0, 1, 1], [], []>} : vector<8x128xbf16>, vector<128x384xbf16>, vector<8x384xf32> -> vector<8x384xf32>
    %11 = vector.extract_strided_slice %8 {offsets = [0, 0], sizes = [8, 128], strides = [1, 1]} : vector<8x384xf32> to vector<8x128xf32>
    %12 = vector.extract_strided_slice %10 {offsets = [0, 0], sizes = [8, 128], strides = [1, 1]} : vector<8x384xf32> to vector<8x128xf32>
    %13 = arith.addf %11, %12 : vector<8x128xf32>
    %14 = arith.negf %13 : vector<8x128xf32>
    %15 = math.exp %14 : vector<8x128xf32>
    %cst_9 = arith.constant 1.000000e+00 : f32
    %16 = vector.broadcast %cst_9 : f32 to vector<8x128xf32>
    %17 = arith.addf %16, %15 : vector<8x128xf32>
    %18 = arith.divf %16, %17 : vector<8x128xf32>
    %19 = vector.extract_strided_slice %8 {offsets = [0, 128], sizes = [8, 128], strides = [1, 1]} : vector<8x384xf32> to vector<8x128xf32>
    %20 = vector.extract_strided_slice %10 {offsets = [0, 128], sizes = [8, 128], strides = [1, 1]} : vector<8x384xf32> to vector<8x128xf32>
    %21 = arith.addf %19, %20 : vector<8x128xf32>
    %22 = arith.negf %21 : vector<8x128xf32>
    %23 = math.exp %22 : vector<8x128xf32>
    %cst_10 = arith.constant 1.000000e+00 : f32
    %24 = vector.broadcast %cst_10 : f32 to vector<8x128xf32>
    %25 = arith.addf %24, %23 : vector<8x128xf32>
    %26 = arith.divf %24, %25 : vector<8x128xf32>
    %27 = vector.extract_strided_slice %8 {offsets = [0, 256], sizes = [8, 128], strides = [1, 1]} : vector<8x384xf32> to vector<8x128xf32>
    %28 = vector.extract_strided_slice %10 {offsets = [0, 256], sizes = [8, 128], strides = [1, 1]} : vector<8x384xf32> to vector<8x128xf32>
    %29 = vector.broadcast %4 : vector<1x128xf32> to vector<8x128xf32>
    %30 = arith.addf %28, %29 : vector<8x128xf32>
    %31 = arith.mulf %18, %30 : vector<8x128xf32>
    %32 = arith.addf %27, %31 : vector<8x128xf32>
    %33 = math.tanh %32 : vector<8x128xf32>
    %cst_11 = arith.constant 1.000000e+00 : f32
    %34 = vector.broadcast %cst_11 : f32 to vector<8x128xf32>
    %35 = arith.subf %34, %26 : vector<8x128xf32>
    %36 = arith.mulf %35, %33 : vector<8x128xf32>
    %37 = arith.mulf %26, %5 : vector<8x128xf32>
    %38 = arith.addf %36, %37 : vector<8x128xf32>
    %39 = arith.index_cast %c0_i32_6 : i32 to index
    %c0_12 = arith.constant 0 : index
    %c0_13 = arith.constant 0 : index
    %40 = vector.load %arg4[%39, %c0_12, %c0_13] : memref<8x8x128xf32, #tpu.memory_space<vmem>>, vector<1x8x128xf32>
    %41 = vector.shape_cast %40 : vector<1x8x128xf32> to vector<8x128xf32>
    %42 = vector.shape_cast %38 : vector<8x128xf32> to vector<1x8x128xf32>
    tpu.vector_store %arg4[%39, %c0_12, %c0_13], %42 {strides = array<i32>} : memref<8x8x128xf32, #tpu.memory_space<vmem>>, vector<1x8x128xf32>,
    %c1_i32 = arith.constant 1 : i32
    %43 = arith.index_cast %c1_i32 : i32 to index
    %c0_14 = arith.constant 0 : index
    %c0_15 = arith.constant 0 : index
    %44 = vector.load %arg1[%43, %c0_14, %c0_15] : memref<8x8x384xf32, #tpu.memory_space<vmem>>, vector<1x8x384xf32>
    %45 = vector.shape_cast %44 : vector<1x8x384xf32> to vector<8x384xf32>
    %46 = arith.truncf %38 : vector<8x128xf32> to vector<8x128xbf16>
    %cst_16 = arith.constant dense<0.000000e+00> : vector<8x384xf32>
    %47 = tpu.matmul %46, %3, %cst_16 {dimension_numbers = #tpu.dot_dimension_numbers<[1], [0], [0], [1], [0, 0, 1, 1], [], []>} : vector<8x128xbf16>, vector<128x384xbf16>, vector<8x384xf32> -> vector<8x384xf32>
    %48 = vector.extract_strided_slice %45 {offsets = [0, 0], sizes = [8, 128], strides = [1, 1]} : vector<8x384xf32> to vector<8x128xf32>
    %49 = vector.extract_strided_slice %47 {offsets = [0, 0], sizes = [8, 128], strides = [1, 1]} : vector<8x384xf32> to vector<8x128xf32>
    %50 = arith.addf %48, %49 : vector<8x128xf32>
    %51 = arith.negf %50 : vector<8x128xf32>
    %52 = math.exp %51 : vector<8x128xf32>
    %cst_17 = arith.constant 1.000000e+00 : f32
    %53 = vector.broadcast %cst_17 : f32 to vector<8x128xf32>
    %54 = arith.addf %53, %52 : vector<8x128xf32>
    %55 = arith.divf %53, %54 : vector<8x128xf32>
    %56 = vector.extract_strided_slice %45 {offsets = [0, 128], sizes = [8, 128], strides = [1, 1]} : vector<8x384xf32> to vector<8x128xf32>
    %57 = vector.extract_strided_slice %47 {offsets = [0, 128], sizes = [8, 128], strides = [1, 1]} : vector<8x384xf32> to vector<8x128xf32>
    %58 = arith.addf %56, %57 : vector<8x128xf32>
    %59 = arith.negf %58 : vector<8x128xf32>
    %60 = math.exp %59 : vector<8x128xf32>
    %cst_18 = arith.constant 1.000000e+00 : f32
    %61 = vector.broadcast %cst_18 : f32 to vector<8x128xf32>
    %62 = arith.addf %61, %60 : vector<8x128xf32>
    %63 = arith.divf %61, %62 : vector<8x128xf32>
    %64 = vector.extract_strided_slice %45 {offsets = [0, 256], sizes = [8, 128], strides = [1, 1]} : vector<8x384xf32> to vector<8x128xf32>
    %65 = vector.extract_strided_slice %47 {offsets = [0, 256], sizes = [8, 128], strides = [1, 1]} : vector<8x384xf32> to vector<8x128xf32>
    %66 = vector.broadcast %4 : vector<1x128xf32> to vector<8x128xf32>
    %67 = arith.addf %65, %66 : vector<8x128xf32>
    %68 = arith.mulf %55, %67 : vector<8x128xf32>
    %69 = arith.addf %64, %68 : vector<8x128xf32>
    %70 = math.tanh %69 : vector<8x128xf32>
    %cst_19 = arith.constant 1.000000e+00 : f32
    %71 = vector.broadcast %cst_19 : f32 to vector<8x128xf32>
    %72 = arith.subf %71, %63 : vector<8x128xf32>
    %73 = arith.mulf %72, %70 : vector<8x128xf32>
    %74 = arith.mulf %63, %38 : vector<8x128xf32>
    %75 = arith.addf %73, %74 : vector<8x128xf32>
    %76 = arith.index_cast %c1_i32 : i32 to index
    %c0_20 = arith.constant 0 : index
    %c0_21 = arith.constant 0 : index
    %77 = vector.load %arg4[%76, %c0_20, %c0_21] : memref<8x8x128xf32, #tpu.memory_space<vmem>>, vector<1x8x128xf32>
    %78 = vector.shape_cast %77 : vector<1x8x128xf32> to vector<8x128xf32>
    %79 = vector.shape_cast %75 : vector<8x128xf32> to vector<1x8x128xf32>
    tpu.vector_store %arg4[%76, %c0_20, %c0_21], %79 {strides = array<i32>} : memref<8x8x128xf32, #tpu.memory_space<vmem>>, vector<1x8x128xf32>,
    %c2_i32 = arith.constant 2 : i32
    %80 = arith.index_cast %c2_i32 : i32 to index
    %c0_22 = arith.constant 0 : index
    %c0_23 = arith.constant 0 : index
    %81 = vector.load %arg1[%80, %c0_22, %c0_23] : memref<8x8x384xf32, #tpu.memory_space<vmem>>, vector<1x8x384xf32>
    %82 = vector.shape_cast %81 : vector<1x8x384xf32> to vector<8x384xf32>
    %83 = arith.truncf %75 : vector<8x128xf32> to vector<8x128xbf16>
    %cst_24 = arith.constant dense<0.000000e+00> : vector<8x384xf32>
    %84 = tpu.matmul %83, %3, %cst_24 {dimension_numbers = #tpu.dot_dimension_numbers<[1], [0], [0], [1], [0, 0, 1, 1], [], []>} : vector<8x128xbf16>, vector<128x384xbf16>, vector<8x384xf32> -> vector<8x384xf32>
    %85 = vector.extract_strided_slice %82 {offsets = [0, 0], sizes = [8, 128], strides = [1, 1]} : vector<8x384xf32> to vector<8x128xf32>
    %86 = vector.extract_strided_slice %84 {offsets = [0, 0], sizes = [8, 128], strides = [1, 1]} : vector<8x384xf32> to vector<8x128xf32>
    %87 = arith.addf %85, %86 : vector<8x128xf32>
    %88 = arith.negf %87 : vector<8x128xf32>
    %89 = math.exp %88 : vector<8x128xf32>
    %cst_25 = arith.constant 1.000000e+00 : f32
    %90 = vector.broadcast %cst_25 : f32 to vector<8x128xf32>
    %91 = arith.addf %90, %89 : vector<8x128xf32>
    %92 = arith.divf %90, %91 : vector<8x128xf32>
    %93 = vector.extract_strided_slice %82 {offsets = [0, 128], sizes = [8, 128], strides = [1, 1]} : vector<8x384xf32> to vector<8x128xf32>
    %94 = vector.extract_strided_slice %84 {offsets = [0, 128], sizes = [8, 128], strides = [1, 1]} : vector<8x384xf32> to vector<8x128xf32>
    %95 = arith.addf %93, %94 : vector<8x128xf32>
    %96 = arith.negf %95 : vector<8x128xf32>
    %97 = math.exp %96 : vector<8x128xf32>
    %cst_26 = arith.constant 1.000000e+00 : f32
    %98 = vector.broadcast %cst_26 : f32 to vector<8x128xf32>
    %99 = arith.addf %98, %97 : vector<8x128xf32>
    %100 = arith.divf %98, %99 : vector<8x128xf32>
    %101 = vector.extract_strided_slice %82 {offsets = [0, 256], sizes = [8, 128], strides = [1, 1]} : vector<8x384xf32> to vector<8x128xf32>
    %102 = vector.extract_strided_slice %84 {offsets = [0, 256], sizes = [8, 128], strides = [1, 1]} : vector<8x384xf32> to vector<8x128xf32>
    %103 = vector.broadcast %4 : vector<1x128xf32> to vector<8x128xf32>
    %104 = arith.addf %102, %103 : vector<8x128xf32>
    %105 = arith.mulf %92, %104 : vector<8x128xf32>
    %106 = arith.addf %101, %105 : vector<8x128xf32>
    %107 = math.tanh %106 : vector<8x128xf32>
    %cst_27 = arith.constant 1.000000e+00 : f32
    %108 = vector.broadcast %cst_27 : f32 to vector<8x128xf32>
    %109 = arith.subf %108, %100 : vector<8x128xf32>
    %110 = arith.mulf %109, %107 : vector<8x128xf32>
    %111 = arith.mulf %100, %75 : vector<8x128xf32>
    %112 = arith.addf %110, %111 : vector<8x128xf32>
    %113 = arith.index_cast %c2_i32 : i32 to index
    %c0_28 = arith.constant 0 : index
    %c0_29 = arith.constant 0 : index
    %114 = vector.load %arg4[%113, %c0_28, %c0_29] : memref<8x8x128xf32, #tpu.memory_space<vmem>>, vector<1x8x128xf32>
    %115 = vector.shape_cast %114 : vector<1x8x128xf32> to vector<8x128xf32>
    %116 = vector.shape_cast %112 : vector<8x128xf32> to vector<1x8x128xf32>
    tpu.vector_store %arg4[%113, %c0_28, %c0_29], %116 {strides = array<i32>} : memref<8x8x128xf32, #tpu.memory_space<vmem>>, vector<1x8x128xf32>,
    %c3_i32 = arith.constant 3 : i32
    %117 = arith.index_cast %c3_i32 : i32 to index
    %c0_30 = arith.constant 0 : index
    %c0_31 = arith.constant 0 : index
    %118 = vector.load %arg1[%117, %c0_30, %c0_31] : memref<8x8x384xf32, #tpu.memory_space<vmem>>, vector<1x8x384xf32>
    %119 = vector.shape_cast %118 : vector<1x8x384xf32> to vector<8x384xf32>
    %120 = arith.truncf %112 : vector<8x128xf32> to vector<8x128xbf16>
    %cst_32 = arith.constant dense<0.000000e+00> : vector<8x384xf32>
    %121 = tpu.matmul %120, %3, %cst_32 {dimension_numbers = #tpu.dot_dimension_numbers<[1], [0], [0], [1], [0, 0, 1, 1], [], []>} : vector<8x128xbf16>, vector<128x384xbf16>, vector<8x384xf32> -> vector<8x384xf32>
    %122 = vector.extract_strided_slice %119 {offsets = [0, 0], sizes = [8, 128], strides = [1, 1]} : vector<8x384xf32> to vector<8x128xf32>
    %123 = vector.extract_strided_slice %121 {offsets = [0, 0], sizes = [8, 128], strides = [1, 1]} : vector<8x384xf32> to vector<8x128xf32>
    %124 = arith.addf %122, %123 : vector<8x128xf32>
    %125 = arith.negf %124 : vector<8x128xf32>
    %126 = math.exp %125 : vector<8x128xf32>
    %cst_33 = arith.constant 1.000000e+00 : f32
    %127 = vector.broadcast %cst_33 : f32 to vector<8x128xf32>
    %128 = arith.addf %127, %126 : vector<8x128xf32>
    %129 = arith.divf %127, %128 : vector<8x128xf32>
    %130 = vector.extract_strided_slice %119 {offsets = [0, 128], sizes = [8, 128], strides = [1, 1]} : vector<8x384xf32> to vector<8x128xf32>
    %131 = vector.extract_strided_slice %121 {offsets = [0, 128], sizes = [8, 128], strides = [1, 1]} : vector<8x384xf32> to vector<8x128xf32>
    %132 = arith.addf %130, %131 : vector<8x128xf32>
    %133 = arith.negf %132 : vector<8x128xf32>
    %134 = math.exp %133 : vector<8x128xf32>
    %cst_34 = arith.constant 1.000000e+00 : f32
    %135 = vector.broadcast %cst_34 : f32 to vector<8x128xf32>
    %136 = arith.addf %135, %134 : vector<8x128xf32>
    %137 = arith.divf %135, %136 : vector<8x128xf32>
    %138 = vector.extract_strided_slice %119 {offsets = [0, 256], sizes = [8, 128], strides = [1, 1]} : vector<8x384xf32> to vector<8x128xf32>
    %139 = vector.extract_strided_slice %121 {offsets = [0, 256], sizes = [8, 128], strides = [1, 1]} : vector<8x384xf32> to vector<8x128xf32>
    %140 = vector.broadcast %4 : vector<1x128xf32> to vector<8x128xf32>
    %141 = arith.addf %139, %140 : vector<8x128xf32>
    %142 = arith.mulf %129, %141 : vector<8x128xf32>
    %143 = arith.addf %138, %142 : vector<8x128xf32>
    %144 = math.tanh %143 : vector<8x128xf32>
    %cst_35 = arith.constant 1.000000e+00 : f32
    %145 = vector.broadcast %cst_35 : f32 to vector<8x128xf32>
    %146 = arith.subf %145, %137 : vector<8x128xf32>
    %147 = arith.mulf %146, %144 : vector<8x128xf32>
    %148 = arith.mulf %137, %112 : vector<8x128xf32>
    %149 = arith.addf %147, %148 : vector<8x128xf32>
    %150 = arith.index_cast %c3_i32 : i32 to index
    %c0_36 = arith.constant 0 : index
    %c0_37 = arith.constant 0 : index
    %151 = vector.load %arg4[%150, %c0_36, %c0_37] : memref<8x8x128xf32, #tpu.memory_space<vmem>>, vector<1x8x128xf32>
    %152 = vector.shape_cast %151 : vector<1x8x128xf32> to vector<8x128xf32>
    %153 = vector.shape_cast %149 : vector<8x128xf32> to vector<1x8x128xf32>
    tpu.vector_store %arg4[%150, %c0_36, %c0_37], %153 {strides = array<i32>} : memref<8x8x128xf32, #tpu.memory_space<vmem>>, vector<1x8x128xf32>,
    %c4_i32 = arith.constant 4 : i32
    %154 = arith.index_cast %c4_i32 : i32 to index
    %c0_38 = arith.constant 0 : index
    %c0_39 = arith.constant 0 : index
    %155 = vector.load %arg1[%154, %c0_38, %c0_39] : memref<8x8x384xf32, #tpu.memory_space<vmem>>, vector<1x8x384xf32>
    %156 = vector.shape_cast %155 : vector<1x8x384xf32> to vector<8x384xf32>
    %157 = arith.truncf %149 : vector<8x128xf32> to vector<8x128xbf16>
    %cst_40 = arith.constant dense<0.000000e+00> : vector<8x384xf32>
    %158 = tpu.matmul %157, %3, %cst_40 {dimension_numbers = #tpu.dot_dimension_numbers<[1], [0], [0], [1], [0, 0, 1, 1], [], []>} : vector<8x128xbf16>, vector<128x384xbf16>, vector<8x384xf32> -> vector<8x384xf32>
    %159 = vector.extract_strided_slice %156 {offsets = [0, 0], sizes = [8, 128], strides = [1, 1]} : vector<8x384xf32> to vector<8x128xf32>
    %160 = vector.extract_strided_slice %158 {offsets = [0, 0], sizes = [8, 128], strides = [1, 1]} : vector<8x384xf32> to vector<8x128xf32>
    %161 = arith.addf %159, %160 : vector<8x128xf32>
    %162 = arith.negf %161 : vector<8x128xf32>
    %163 = math.exp %162 : vector<8x128xf32>
    %cst_41 = arith.constant 1.000000e+00 : f32
    %164 = vector.broadcast %cst_41 : f32 to vector<8x128xf32>
    %165 = arith.addf %164, %163 : vector<8x128xf32>
    %166 = arith.divf %164, %165 : vector<8x128xf32>
    %167 = vector.extract_strided_slice %156 {offsets = [0, 128], sizes = [8, 128], strides = [1, 1]} : vector<8x384xf32> to vector<8x128xf32>
    %168 = vector.extract_strided_slice %158 {offsets = [0, 128], sizes = [8, 128], strides = [1, 1]} : vector<8x384xf32> to vector<8x128xf32>
    %169 = arith.addf %167, %168 : vector<8x128xf32>
    %170 = arith.negf %169 : vector<8x128xf32>
    %171 = math.exp %170 : vector<8x128xf32>
    %cst_42 = arith.constant 1.000000e+00 : f32
    %172 = vector.broadcast %cst_42 : f32 to vector<8x128xf32>
    %173 = arith.addf %172, %171 : vector<8x128xf32>
    %174 = arith.divf %172, %173 : vector<8x128xf32>
    %175 = vector.extract_strided_slice %156 {offsets = [0, 256], sizes = [8, 128], strides = [1, 1]} : vector<8x384xf32> to vector<8x128xf32>
    %176 = vector.extract_strided_slice %158 {offsets = [0, 256], sizes = [8, 128], strides = [1, 1]} : vector<8x384xf32> to vector<8x128xf32>
    %177 = vector.broadcast %4 : vector<1x128xf32> to vector<8x128xf32>
    %178 = arith.addf %176, %177 : vector<8x128xf32>
    %179 = arith.mulf %166, %178 : vector<8x128xf32>
    %180 = arith.addf %175, %179 : vector<8x128xf32>
    %181 = math.tanh %180 : vector<8x128xf32>
    %cst_43 = arith.constant 1.000000e+00 : f32
    %182 = vector.broadcast %cst_43 : f32 to vector<8x128xf32>
    %183 = arith.subf %182, %174 : vector<8x128xf32>
    %184 = arith.mulf %183, %181 : vector<8x128xf32>
    %185 = arith.mulf %174, %149 : vector<8x128xf32>
    %186 = arith.addf %184, %185 : vector<8x128xf32>
    %187 = arith.index_cast %c4_i32 : i32 to index
    %c0_44 = arith.constant 0 : index
    %c0_45 = arith.constant 0 : index
    %188 = vector.load %arg4[%187, %c0_44, %c0_45] : memref<8x8x128xf32, #tpu.memory_space<vmem>>, vector<1x8x128xf32>
    %189 = vector.shape_cast %188 : vector<1x8x128xf32> to vector<8x128xf32>
    %190 = vector.shape_cast %186 : vector<8x128xf32> to vector<1x8x128xf32>
    tpu.vector_store %arg4[%187, %c0_44, %c0_45], %190 {strides = array<i32>} : memref<8x8x128xf32, #tpu.memory_space<vmem>>, vector<1x8x128xf32>,
    %c5_i32 = arith.constant 5 : i32
    %191 = arith.index_cast %c5_i32 : i32 to index
    %c0_46 = arith.constant 0 : index
    %c0_47 = arith.constant 0 : index
    %192 = vector.load %arg1[%191, %c0_46, %c0_47] : memref<8x8x384xf32, #tpu.memory_space<vmem>>, vector<1x8x384xf32>
    %193 = vector.shape_cast %192 : vector<1x8x384xf32> to vector<8x384xf32>
    %194 = arith.truncf %186 : vector<8x128xf32> to vector<8x128xbf16>
    %cst_48 = arith.constant dense<0.000000e+00> : vector<8x384xf32>
    %195 = tpu.matmul %194, %3, %cst_48 {dimension_numbers = #tpu.dot_dimension_numbers<[1], [0], [0], [1], [0, 0, 1, 1], [], []>} : vector<8x128xbf16>, vector<128x384xbf16>, vector<8x384xf32> -> vector<8x384xf32>
    %196 = vector.extract_strided_slice %193 {offsets = [0, 0], sizes = [8, 128], strides = [1, 1]} : vector<8x384xf32> to vector<8x128xf32>
    %197 = vector.extract_strided_slice %195 {offsets = [0, 0], sizes = [8, 128], strides = [1, 1]} : vector<8x384xf32> to vector<8x128xf32>
    %198 = arith.addf %196, %197 : vector<8x128xf32>
    %199 = arith.negf %198 : vector<8x128xf32>
    %200 = math.exp %199 : vector<8x128xf32>
    %cst_49 = arith.constant 1.000000e+00 : f32
    %201 = vector.broadcast %cst_49 : f32 to vector<8x128xf32>
    %202 = arith.addf %201, %200 : vector<8x128xf32>
    %203 = arith.divf %201, %202 : vector<8x128xf32>
    %204 = vector.extract_strided_slice %193 {offsets = [0, 128], sizes = [8, 128], strides = [1, 1]} : vector<8x384xf32> to vector<8x128xf32>
    %205 = vector.extract_strided_slice %195 {offsets = [0, 128], sizes = [8, 128], strides = [1, 1]} : vector<8x384xf32> to vector<8x128xf32>
    %206 = arith.addf %204, %205 : vector<8x128xf32>
    %207 = arith.negf %206 : vector<8x128xf32>
    %208 = math.exp %207 : vector<8x128xf32>
    %cst_50 = arith.constant 1.000000e+00 : f32
    %209 = vector.broadcast %cst_50 : f32 to vector<8x128xf32>
    %210 = arith.addf %209, %208 : vector<8x128xf32>
    %211 = arith.divf %209, %210 : vector<8x128xf32>
    %212 = vector.extract_strided_slice %193 {offsets = [0, 256], sizes = [8, 128], strides = [1, 1]} : vector<8x384xf32> to vector<8x128xf32>
    %213 = vector.extract_strided_slice %195 {offsets = [0, 256], sizes = [8, 128], strides = [1, 1]} : vector<8x384xf32> to vector<8x128xf32>
    %214 = vector.broadcast %4 : vector<1x128xf32> to vector<8x128xf32>
    %215 = arith.addf %213, %214 : vector<8x128xf32>
    %216 = arith.mulf %203, %215 : vector<8x128xf32>
    %217 = arith.addf %212, %216 : vector<8x128xf32>
    %218 = math.tanh %217 : vector<8x128xf32>
    %cst_51 = arith.constant 1.000000e+00 : f32
    %219 = vector.broadcast %cst_51 : f32 to vector<8x128xf32>
    %220 = arith.subf %219, %211 : vector<8x128xf32>
    %221 = arith.mulf %220, %218 : vector<8x128xf32>
    %222 = arith.mulf %211, %186 : vector<8x128xf32>
    %223 = arith.addf %221, %222 : vector<8x128xf32>
    %224 = arith.index_cast %c5_i32 : i32 to index
    %c0_52 = arith.constant 0 : index
    %c0_53 = arith.constant 0 : index
    %225 = vector.load %arg4[%224, %c0_52, %c0_53] : memref<8x8x128xf32, #tpu.memory_space<vmem>>, vector<1x8x128xf32>
    %226 = vector.shape_cast %225 : vector<1x8x128xf32> to vector<8x128xf32>
    %227 = vector.shape_cast %223 : vector<8x128xf32> to vector<1x8x128xf32>
    tpu.vector_store %arg4[%224, %c0_52, %c0_53], %227 {strides = array<i32>} : memref<8x8x128xf32, #tpu.memory_space<vmem>>, vector<1x8x128xf32>,
    %c6_i32 = arith.constant 6 : i32
    %228 = arith.index_cast %c6_i32 : i32 to index
    %c0_54 = arith.constant 0 : index
    %c0_55 = arith.constant 0 : index
    %229 = vector.load %arg1[%228, %c0_54, %c0_55] : memref<8x8x384xf32, #tpu.memory_space<vmem>>, vector<1x8x384xf32>
    %230 = vector.shape_cast %229 : vector<1x8x384xf32> to vector<8x384xf32>
    %231 = arith.truncf %223 : vector<8x128xf32> to vector<8x128xbf16>
    %cst_56 = arith.constant dense<0.000000e+00> : vector<8x384xf32>
    %232 = tpu.matmul %231, %3, %cst_56 {dimension_numbers = #tpu.dot_dimension_numbers<[1], [0], [0], [1], [0, 0, 1, 1], [], []>} : vector<8x128xbf16>, vector<128x384xbf16>, vector<8x384xf32> -> vector<8x384xf32>
    %233 = vector.extract_strided_slice %230 {offsets = [0, 0], sizes = [8, 128], strides = [1, 1]} : vector<8x384xf32> to vector<8x128xf32>
    %234 = vector.extract_strided_slice %232 {offsets = [0, 0], sizes = [8, 128], strides = [1, 1]} : vector<8x384xf32> to vector<8x128xf32>
    %235 = arith.addf %233, %234 : vector<8x128xf32>
    %236 = arith.negf %235 : vector<8x128xf32>
    %237 = math.exp %236 : vector<8x128xf32>
    %cst_57 = arith.constant 1.000000e+00 : f32
    %238 = vector.broadcast %cst_57 : f32 to vector<8x128xf32>
    %239 = arith.addf %238, %237 : vector<8x128xf32>
    %240 = arith.divf %238, %239 : vector<8x128xf32>
    %241 = vector.extract_strided_slice %230 {offsets = [0, 128], sizes = [8, 128], strides = [1, 1]} : vector<8x384xf32> to vector<8x128xf32>
    %242 = vector.extract_strided_slice %232 {offsets = [0, 128], sizes = [8, 128], strides = [1, 1]} : vector<8x384xf32> to vector<8x128xf32>
    %243 = arith.addf %241, %242 : vector<8x128xf32>
    %244 = arith.negf %243 : vector<8x128xf32>
    %245 = math.exp %244 : vector<8x128xf32>
    %cst_58 = arith.constant 1.000000e+00 : f32
    %246 = vector.broadcast %cst_58 : f32 to vector<8x128xf32>
    %247 = arith.addf %246, %245 : vector<8x128xf32>
    %248 = arith.divf %246, %247 : vector<8x128xf32>
    %249 = vector.extract_strided_slice %230 {offsets = [0, 256], sizes = [8, 128], strides = [1, 1]} : vector<8x384xf32> to vector<8x128xf32>
    %250 = vector.extract_strided_slice %232 {offsets = [0, 256], sizes = [8, 128], strides = [1, 1]} : vector<8x384xf32> to vector<8x128xf32>
    %251 = vector.broadcast %4 : vector<1x128xf32> to vector<8x128xf32>
    %252 = arith.addf %250, %251 : vector<8x128xf32>
    %253 = arith.mulf %240, %252 : vector<8x128xf32>
    %254 = arith.addf %249, %253 : vector<8x128xf32>
    %255 = math.tanh %254 : vector<8x128xf32>
    %cst_59 = arith.constant 1.000000e+00 : f32
    %256 = vector.broadcast %cst_59 : f32 to vector<8x128xf32>
    %257 = arith.subf %256, %248 : vector<8x128xf32>
    %258 = arith.mulf %257, %255 : vector<8x128xf32>
    %259 = arith.mulf %248, %223 : vector<8x128xf32>
    %260 = arith.addf %258, %259 : vector<8x128xf32>
    %261 = arith.index_cast %c6_i32 : i32 to index
    %c0_60 = arith.constant 0 : index
    %c0_61 = arith.constant 0 : index
    %262 = vector.load %arg4[%261, %c0_60, %c0_61] : memref<8x8x128xf32, #tpu.memory_space<vmem>>, vector<1x8x128xf32>
    %263 = vector.shape_cast %262 : vector<1x8x128xf32> to vector<8x128xf32>
    %264 = vector.shape_cast %260 : vector<8x128xf32> to vector<1x8x128xf32>
    tpu.vector_store %arg4[%261, %c0_60, %c0_61], %264 {strides = array<i32>} : memref<8x8x128xf32, #tpu.memory_space<vmem>>, vector<1x8x128xf32>,
    %c7_i32 = arith.constant 7 : i32
    %265 = arith.index_cast %c7_i32 : i32 to index
    %c0_62 = arith.constant 0 : index
    %c0_63 = arith.constant 0 : index
    %266 = vector.load %arg1[%265, %c0_62, %c0_63] : memref<8x8x384xf32, #tpu.memory_space<vmem>>, vector<1x8x384xf32>
    %267 = vector.shape_cast %266 : vector<1x8x384xf32> to vector<8x384xf32>
    %268 = arith.truncf %260 : vector<8x128xf32> to vector<8x128xbf16>
    %cst_64 = arith.constant dense<0.000000e+00> : vector<8x384xf32>
    %269 = tpu.matmul %268, %3, %cst_64 {dimension_numbers = #tpu.dot_dimension_numbers<[1], [0], [0], [1], [0, 0, 1, 1], [], []>} : vector<8x128xbf16>, vector<128x384xbf16>, vector<8x384xf32> -> vector<8x384xf32>
    %270 = vector.extract_strided_slice %267 {offsets = [0, 0], sizes = [8, 128], strides = [1, 1]} : vector<8x384xf32> to vector<8x128xf32>
    %271 = vector.extract_strided_slice %269 {offsets = [0, 0], sizes = [8, 128], strides = [1, 1]} : vector<8x384xf32> to vector<8x128xf32>
    %272 = arith.addf %270, %271 : vector<8x128xf32>
    %273 = arith.negf %272 : vector<8x128xf32>
    %274 = math.exp %273 : vector<8x128xf32>
    %cst_65 = arith.constant 1.000000e+00 : f32
    %275 = vector.broadcast %cst_65 : f32 to vector<8x128xf32>
    %276 = arith.addf %275, %274 : vector<8x128xf32>
    %277 = arith.divf %275, %276 : vector<8x128xf32>
    %278 = vector.extract_strided_slice %267 {offsets = [0, 128], sizes = [8, 128], strides = [1, 1]} : vector<8x384xf32> to vector<8x128xf32>
    %279 = vector.extract_strided_slice %269 {offsets = [0, 128], sizes = [8, 128], strides = [1, 1]} : vector<8x384xf32> to vector<8x128xf32>
    %280 = arith.addf %278, %279 : vector<8x128xf32>
    %281 = arith.negf %280 : vector<8x128xf32>
    %282 = math.exp %281 : vector<8x128xf32>
    %cst_66 = arith.constant 1.000000e+00 : f32
    %283 = vector.broadcast %cst_66 : f32 to vector<8x128xf32>
    %284 = arith.addf %283, %282 : vector<8x128xf32>
    %285 = arith.divf %283, %284 : vector<8x128xf32>
    %286 = vector.extract_strided_slice %267 {offsets = [0, 256], sizes = [8, 128], strides = [1, 1]} : vector<8x384xf32> to vector<8x128xf32>
    %287 = vector.extract_strided_slice %269 {offsets = [0, 256], sizes = [8, 128], strides = [1, 1]} : vector<8x384xf32> to vector<8x128xf32>
    %288 = vector.broadcast %4 : vector<1x128xf32> to vector<8x128xf32>
    %289 = arith.addf %287, %288 : vector<8x128xf32>
    %290 = arith.mulf %277, %289 : vector<8x128xf32>
    %291 = arith.addf %286, %290 : vector<8x128xf32>
    %292 = math.tanh %291 : vector<8x128xf32>
    %cst_67 = arith.constant 1.000000e+00 : f32
    %293 = vector.broadcast %cst_67 : f32 to vector<8x128xf32>
    %294 = arith.subf %293, %285 : vector<8x128xf32>
    %295 = arith.mulf %294, %292 : vector<8x128xf32>
    %296 = arith.mulf %285, %260 : vector<8x128xf32>
    %297 = arith.addf %295, %296 : vector<8x128xf32>
    %298 = arith.index_cast %c7_i32 : i32 to index
    %c0_68 = arith.constant 0 : index
    %c0_69 = arith.constant 0 : index
    %299 = vector.load %arg4[%298, %c0_68, %c0_69] : memref<8x8x128xf32, #tpu.memory_space<vmem>>, vector<1x8x128xf32>
    %300 = vector.shape_cast %299 : vector<1x8x128xf32> to vector<8x128xf32>
    %301 = vector.shape_cast %297 : vector<8x128xf32> to vector<1x8x128xf32>
    tpu.vector_store %arg4[%298, %c0_68, %c0_69], %301 {strides = array<i32>} : memref<8x8x128xf32, #tpu.memory_space<vmem>>, vector<1x8x128xf32>,
    %c8_i32 = arith.constant 8 : i32
    %c0_70 = arith.constant 0 : index
    %c0_71 = arith.constant 0 : index
    %302 = vector.load %arg5[%c0_70, %c0_71] : memref<8x128xf32, #tpu.memory_space<vmem>>, vector<8x128xf32>
    tpu.vector_store %arg5[%c0_70, %c0_71], %297 {strides = array<i32>} : memref<8x128xf32, #tpu.memory_space<vmem>>, vector<8x128xf32>,
    return
  }
  func.func @transform_0(%arg0: i32) -> (i32, i32, i32) {
    %c0_i32 = arith.constant 0 : i32
    %c0_i32_0 = arith.constant 0 : i32
    %c0_i32_1 = arith.constant 0 : i32
    return %arg0, %c0_i32, %c0_i32_0 : i32, i32, i32
  }
  func.func @transform_2(%arg0: i32) -> (i32, i32) {
    %c0_i32 = arith.constant 0 : i32
    %c0_i32_0 = arith.constant 0 : i32
    %c0_i32_1 = arith.constant 0 : i32
    return %c0_i32, %c0_i32_0 : i32, i32
  }
  func.func @transform_3(%arg0: i32) -> (i32, i32, i32) {
    %c0_i32 = arith.constant 0 : i32
    %c0_i32_0 = arith.constant 0 : i32
    %c0_i32_1 = arith.constant 0 : i32
    return %arg0, %c0_i32, %c0_i32_0 : i32, i32, i32
  }
}

module attributes {stable_mosaic.version = 11 : i64} {
  func.func @_gru_recurrent_kernel(%arg0: i32, %arg1: memref<8x8x384xf32, #tpu.memory_space<vmem>>, %arg2: memref<128x384xbf16, #tpu.memory_space<any>>, %arg3: memref<1x128xf32, #tpu.memory_space<vmem>>, %arg4: memref<1x8x128xf32, #tpu.memory_space<vmem>>, %arg5: memref<8x128xf32, #tpu.memory_space<vmem>>, %arg6: memref<128x384xbf16, #tpu.memory_space<vmem>>, %arg7: memref<!tpu.dma_semaphore, #tpu.memory_space<semaphore_mem>>) attributes {dimension_semantics = [#tpu.dimension_semantics<arbitrary>], iteration_bounds = array<i64: 1>, scalar_prefetch = 0 : i64, scratch_operands = 3 : i64, tpu.core_type = #tpu.core_type<tc>, window_params = [{transform_indices = @transform_0, window_bounds = array<i64: 8, 8, 384>}, {}, {pipeline_mode = #tpu.pipeline_mode<synchronous>, transform_indices = @transform_2, window_bounds = array<i64: 1, 128>}, {pipeline_mode = #tpu.pipeline_mode<synchronous>, transform_indices = @transform_3, window_bounds = array<i64: 1, 8, 128>}]} {
    %c0_i32 = arith.constant 0 : i32
    %0 = arith.cmpi eq, %arg0, %c0_i32 : i32
    %1 = arith.extui %0 : i1 to i32
    %c0_i32_0 = arith.constant 0 : i32
    %2 = arith.cmpi ne, %1, %c0_i32_0 : i32
    scf.if %2 {
      %cst_58 = arith.constant 0.000000e+00 : f32
      %274 = vector.broadcast %cst_58 : f32 to vector<8x128xf32>
      %c0_59 = arith.constant 0 : index
      %c0_60 = arith.constant 0 : index
      %275 = vector.load %arg5[%c0_59, %c0_60] : memref<8x128xf32, #tpu.memory_space<vmem>>, vector<8x128xf32>
      tpu.vector_store %arg5[%c0_59, %c0_60], %274 {strides = array<i32>} : memref<8x128xf32, #tpu.memory_space<vmem>>, vector<8x128xf32>,
      tpu.enqueue_dma source(%arg2 : memref<128x384xbf16, #tpu.memory_space<any>>) target(%arg6 : memref<128x384xbf16, #tpu.memory_space<vmem>>) target_semaphore(%arg7 : memref<!tpu.dma_semaphore, #tpu.memory_space<semaphore_mem>>)
      tpu.wait_dma2 semaphore(%arg7 : memref<!tpu.dma_semaphore, #tpu.memory_space<semaphore_mem>>) src(%arg2 : memref<128x384xbf16, #tpu.memory_space<any>>) dst(%arg6 : memref<128x384xbf16, #tpu.memory_space<vmem>>)
    } else {
    }
    %c0 = arith.constant 0 : index
    %c0_1 = arith.constant 0 : index
    %3 = vector.load %arg6[%c0, %c0_1] : memref<128x384xbf16, #tpu.memory_space<vmem>>, vector<128x384xbf16>
    %c0_2 = arith.constant 0 : index
    %c0_3 = arith.constant 0 : index
    %4 = vector.load %arg3[%c0_2, %c0_3] : memref<1x128xf32, #tpu.memory_space<vmem>>, vector<1x128xf32>
    %c0_4 = arith.constant 0 : index
    %c0_5 = arith.constant 0 : index
    %5 = vector.load %arg5[%c0_4, %c0_5] : memref<8x128xf32, #tpu.memory_space<vmem>>, vector<8x128xf32>
    %c0_i32_6 = arith.constant 0 : i32
    %6 = arith.index_cast %c0_i32_6 : i32 to index
    %c0_7 = arith.constant 0 : index
    %c0_8 = arith.constant 0 : index
    %7 = vector.load %arg1[%6, %c0_7, %c0_8] : memref<8x8x384xf32, #tpu.memory_space<vmem>>, vector<1x8x384xf32>
    %8 = vector.shape_cast %7 : vector<1x8x384xf32> to vector<8x384xf32>
    %9 = arith.truncf %5 : vector<8x128xf32> to vector<8x128xbf16>
    %cst = arith.constant dense<0.000000e+00> : vector<8x384xf32>
    %10 = tpu.matmul %9, %3, %cst {dimension_numbers = #tpu.dot_dimension_numbers<[1], [0], [0], [1], [0, 0, 1, 1], [], []>} : vector<8x128xbf16>, vector<128x384xbf16>, vector<8x384xf32> -> vector<8x384xf32>
    %11 = vector.extract_strided_slice %8 {offsets = [0, 0], sizes = [8, 128], strides = [1, 1]} : vector<8x384xf32> to vector<8x128xf32>
    %12 = vector.extract_strided_slice %10 {offsets = [0, 0], sizes = [8, 128], strides = [1, 1]} : vector<8x384xf32> to vector<8x128xf32>
    %13 = arith.addf %11, %12 : vector<8x128xf32>
    %14 = arith.negf %13 : vector<8x128xf32>
    %15 = math.exp %14 : vector<8x128xf32>
    %cst_9 = arith.constant 1.000000e+00 : f32
    %16 = vector.broadcast %cst_9 : f32 to vector<8x128xf32>
    %17 = arith.addf %16, %15 : vector<8x128xf32>
    %18 = arith.divf %16, %17 : vector<8x128xf32>
    %19 = vector.extract_strided_slice %8 {offsets = [0, 128], sizes = [8, 128], strides = [1, 1]} : vector<8x384xf32> to vector<8x128xf32>
    %20 = vector.extract_strided_slice %10 {offsets = [0, 128], sizes = [8, 128], strides = [1, 1]} : vector<8x384xf32> to vector<8x128xf32>
    %21 = arith.addf %19, %20 : vector<8x128xf32>
    %22 = arith.negf %21 : vector<8x128xf32>
    %23 = math.exp %22 : vector<8x128xf32>
    %cst_10 = arith.constant 1.000000e+00 : f32
    %24 = vector.broadcast %cst_10 : f32 to vector<8x128xf32>
    %25 = arith.addf %24, %23 : vector<8x128xf32>
    %26 = arith.divf %24, %25 : vector<8x128xf32>
    %27 = vector.extract_strided_slice %8 {offsets = [0, 256], sizes = [8, 128], strides = [1, 1]} : vector<8x384xf32> to vector<8x128xf32>
    %28 = vector.extract_strided_slice %10 {offsets = [0, 256], sizes = [8, 128], strides = [1, 1]} : vector<8x384xf32> to vector<8x128xf32>
    %29 = vector.broadcast %4 : vector<1x128xf32> to vector<8x128xf32>
    %30 = arith.addf %28, %29 : vector<8x128xf32>
    %31 = arith.mulf %18, %30 : vector<8x128xf32>
    %32 = arith.addf %27, %31 : vector<8x128xf32>
    %33 = math.tanh %32 : vector<8x128xf32>
    %cst_11 = arith.constant 1.000000e+00 : f32
    %34 = vector.broadcast %cst_11 : f32 to vector<8x128xf32>
    %35 = arith.subf %34, %26 : vector<8x128xf32>
    %36 = arith.mulf %35, %33 : vector<8x128xf32>
    %37 = arith.mulf %26, %5 : vector<8x128xf32>
    %38 = arith.addf %36, %37 : vector<8x128xf32>
    %c1_i32 = arith.constant 1 : i32
    %39 = arith.index_cast %c1_i32 : i32 to index
    %c0_12 = arith.constant 0 : index
    %c0_13 = arith.constant 0 : index
    %40 = vector.load %arg1[%39, %c0_12, %c0_13] : memref<8x8x384xf32, #tpu.memory_space<vmem>>, vector<1x8x384xf32>
    %41 = vector.shape_cast %40 : vector<1x8x384xf32> to vector<8x384xf32>
    %42 = arith.truncf %38 : vector<8x128xf32> to vector<8x128xbf16>
    %cst_14 = arith.constant dense<0.000000e+00> : vector<8x384xf32>
    %43 = tpu.matmul %42, %3, %cst_14 {dimension_numbers = #tpu.dot_dimension_numbers<[1], [0], [0], [1], [0, 0, 1, 1], [], []>} : vector<8x128xbf16>, vector<128x384xbf16>, vector<8x384xf32> -> vector<8x384xf32>
    %44 = vector.extract_strided_slice %41 {offsets = [0, 0], sizes = [8, 128], strides = [1, 1]} : vector<8x384xf32> to vector<8x128xf32>
    %45 = vector.extract_strided_slice %43 {offsets = [0, 0], sizes = [8, 128], strides = [1, 1]} : vector<8x384xf32> to vector<8x128xf32>
    %46 = arith.addf %44, %45 : vector<8x128xf32>
    %47 = arith.negf %46 : vector<8x128xf32>
    %48 = math.exp %47 : vector<8x128xf32>
    %cst_15 = arith.constant 1.000000e+00 : f32
    %49 = vector.broadcast %cst_15 : f32 to vector<8x128xf32>
    %50 = arith.addf %49, %48 : vector<8x128xf32>
    %51 = arith.divf %49, %50 : vector<8x128xf32>
    %52 = vector.extract_strided_slice %41 {offsets = [0, 128], sizes = [8, 128], strides = [1, 1]} : vector<8x384xf32> to vector<8x128xf32>
    %53 = vector.extract_strided_slice %43 {offsets = [0, 128], sizes = [8, 128], strides = [1, 1]} : vector<8x384xf32> to vector<8x128xf32>
    %54 = arith.addf %52, %53 : vector<8x128xf32>
    %55 = arith.negf %54 : vector<8x128xf32>
    %56 = math.exp %55 : vector<8x128xf32>
    %cst_16 = arith.constant 1.000000e+00 : f32
    %57 = vector.broadcast %cst_16 : f32 to vector<8x128xf32>
    %58 = arith.addf %57, %56 : vector<8x128xf32>
    %59 = arith.divf %57, %58 : vector<8x128xf32>
    %60 = vector.extract_strided_slice %41 {offsets = [0, 256], sizes = [8, 128], strides = [1, 1]} : vector<8x384xf32> to vector<8x128xf32>
    %61 = vector.extract_strided_slice %43 {offsets = [0, 256], sizes = [8, 128], strides = [1, 1]} : vector<8x384xf32> to vector<8x128xf32>
    %62 = vector.broadcast %4 : vector<1x128xf32> to vector<8x128xf32>
    %63 = arith.addf %61, %62 : vector<8x128xf32>
    %64 = arith.mulf %51, %63 : vector<8x128xf32>
    %65 = arith.addf %60, %64 : vector<8x128xf32>
    %66 = math.tanh %65 : vector<8x128xf32>
    %cst_17 = arith.constant 1.000000e+00 : f32
    %67 = vector.broadcast %cst_17 : f32 to vector<8x128xf32>
    %68 = arith.subf %67, %59 : vector<8x128xf32>
    %69 = arith.mulf %68, %66 : vector<8x128xf32>
    %70 = arith.mulf %59, %38 : vector<8x128xf32>
    %71 = arith.addf %69, %70 : vector<8x128xf32>
    %c2_i32 = arith.constant 2 : i32
    %72 = arith.index_cast %c2_i32 : i32 to index
    %c0_18 = arith.constant 0 : index
    %c0_19 = arith.constant 0 : index
    %73 = vector.load %arg1[%72, %c0_18, %c0_19] : memref<8x8x384xf32, #tpu.memory_space<vmem>>, vector<1x8x384xf32>
    %74 = vector.shape_cast %73 : vector<1x8x384xf32> to vector<8x384xf32>
    %75 = arith.truncf %71 : vector<8x128xf32> to vector<8x128xbf16>
    %cst_20 = arith.constant dense<0.000000e+00> : vector<8x384xf32>
    %76 = tpu.matmul %75, %3, %cst_20 {dimension_numbers = #tpu.dot_dimension_numbers<[1], [0], [0], [1], [0, 0, 1, 1], [], []>} : vector<8x128xbf16>, vector<128x384xbf16>, vector<8x384xf32> -> vector<8x384xf32>
    %77 = vector.extract_strided_slice %74 {offsets = [0, 0], sizes = [8, 128], strides = [1, 1]} : vector<8x384xf32> to vector<8x128xf32>
    %78 = vector.extract_strided_slice %76 {offsets = [0, 0], sizes = [8, 128], strides = [1, 1]} : vector<8x384xf32> to vector<8x128xf32>
    %79 = arith.addf %77, %78 : vector<8x128xf32>
    %80 = arith.negf %79 : vector<8x128xf32>
    %81 = math.exp %80 : vector<8x128xf32>
    %cst_21 = arith.constant 1.000000e+00 : f32
    %82 = vector.broadcast %cst_21 : f32 to vector<8x128xf32>
    %83 = arith.addf %82, %81 : vector<8x128xf32>
    %84 = arith.divf %82, %83 : vector<8x128xf32>
    %85 = vector.extract_strided_slice %74 {offsets = [0, 128], sizes = [8, 128], strides = [1, 1]} : vector<8x384xf32> to vector<8x128xf32>
    %86 = vector.extract_strided_slice %76 {offsets = [0, 128], sizes = [8, 128], strides = [1, 1]} : vector<8x384xf32> to vector<8x128xf32>
    %87 = arith.addf %85, %86 : vector<8x128xf32>
    %88 = arith.negf %87 : vector<8x128xf32>
    %89 = math.exp %88 : vector<8x128xf32>
    %cst_22 = arith.constant 1.000000e+00 : f32
    %90 = vector.broadcast %cst_22 : f32 to vector<8x128xf32>
    %91 = arith.addf %90, %89 : vector<8x128xf32>
    %92 = arith.divf %90, %91 : vector<8x128xf32>
    %93 = vector.extract_strided_slice %74 {offsets = [0, 256], sizes = [8, 128], strides = [1, 1]} : vector<8x384xf32> to vector<8x128xf32>
    %94 = vector.extract_strided_slice %76 {offsets = [0, 256], sizes = [8, 128], strides = [1, 1]} : vector<8x384xf32> to vector<8x128xf32>
    %95 = vector.broadcast %4 : vector<1x128xf32> to vector<8x128xf32>
    %96 = arith.addf %94, %95 : vector<8x128xf32>
    %97 = arith.mulf %84, %96 : vector<8x128xf32>
    %98 = arith.addf %93, %97 : vector<8x128xf32>
    %99 = math.tanh %98 : vector<8x128xf32>
    %cst_23 = arith.constant 1.000000e+00 : f32
    %100 = vector.broadcast %cst_23 : f32 to vector<8x128xf32>
    %101 = arith.subf %100, %92 : vector<8x128xf32>
    %102 = arith.mulf %101, %99 : vector<8x128xf32>
    %103 = arith.mulf %92, %71 : vector<8x128xf32>
    %104 = arith.addf %102, %103 : vector<8x128xf32>
    %c3_i32 = arith.constant 3 : i32
    %105 = arith.index_cast %c3_i32 : i32 to index
    %c0_24 = arith.constant 0 : index
    %c0_25 = arith.constant 0 : index
    %106 = vector.load %arg1[%105, %c0_24, %c0_25] : memref<8x8x384xf32, #tpu.memory_space<vmem>>, vector<1x8x384xf32>
    %107 = vector.shape_cast %106 : vector<1x8x384xf32> to vector<8x384xf32>
    %108 = arith.truncf %104 : vector<8x128xf32> to vector<8x128xbf16>
    %cst_26 = arith.constant dense<0.000000e+00> : vector<8x384xf32>
    %109 = tpu.matmul %108, %3, %cst_26 {dimension_numbers = #tpu.dot_dimension_numbers<[1], [0], [0], [1], [0, 0, 1, 1], [], []>} : vector<8x128xbf16>, vector<128x384xbf16>, vector<8x384xf32> -> vector<8x384xf32>
    %110 = vector.extract_strided_slice %107 {offsets = [0, 0], sizes = [8, 128], strides = [1, 1]} : vector<8x384xf32> to vector<8x128xf32>
    %111 = vector.extract_strided_slice %109 {offsets = [0, 0], sizes = [8, 128], strides = [1, 1]} : vector<8x384xf32> to vector<8x128xf32>
    %112 = arith.addf %110, %111 : vector<8x128xf32>
    %113 = arith.negf %112 : vector<8x128xf32>
    %114 = math.exp %113 : vector<8x128xf32>
    %cst_27 = arith.constant 1.000000e+00 : f32
    %115 = vector.broadcast %cst_27 : f32 to vector<8x128xf32>
    %116 = arith.addf %115, %114 : vector<8x128xf32>
    %117 = arith.divf %115, %116 : vector<8x128xf32>
    %118 = vector.extract_strided_slice %107 {offsets = [0, 128], sizes = [8, 128], strides = [1, 1]} : vector<8x384xf32> to vector<8x128xf32>
    %119 = vector.extract_strided_slice %109 {offsets = [0, 128], sizes = [8, 128], strides = [1, 1]} : vector<8x384xf32> to vector<8x128xf32>
    %120 = arith.addf %118, %119 : vector<8x128xf32>
    %121 = arith.negf %120 : vector<8x128xf32>
    %122 = math.exp %121 : vector<8x128xf32>
    %cst_28 = arith.constant 1.000000e+00 : f32
    %123 = vector.broadcast %cst_28 : f32 to vector<8x128xf32>
    %124 = arith.addf %123, %122 : vector<8x128xf32>
    %125 = arith.divf %123, %124 : vector<8x128xf32>
    %126 = vector.extract_strided_slice %107 {offsets = [0, 256], sizes = [8, 128], strides = [1, 1]} : vector<8x384xf32> to vector<8x128xf32>
    %127 = vector.extract_strided_slice %109 {offsets = [0, 256], sizes = [8, 128], strides = [1, 1]} : vector<8x384xf32> to vector<8x128xf32>
    %128 = vector.broadcast %4 : vector<1x128xf32> to vector<8x128xf32>
    %129 = arith.addf %127, %128 : vector<8x128xf32>
    %130 = arith.mulf %117, %129 : vector<8x128xf32>
    %131 = arith.addf %126, %130 : vector<8x128xf32>
    %132 = math.tanh %131 : vector<8x128xf32>
    %cst_29 = arith.constant 1.000000e+00 : f32
    %133 = vector.broadcast %cst_29 : f32 to vector<8x128xf32>
    %134 = arith.subf %133, %125 : vector<8x128xf32>
    %135 = arith.mulf %134, %132 : vector<8x128xf32>
    %136 = arith.mulf %125, %104 : vector<8x128xf32>
    %137 = arith.addf %135, %136 : vector<8x128xf32>
    %c4_i32 = arith.constant 4 : i32
    %138 = arith.index_cast %c4_i32 : i32 to index
    %c0_30 = arith.constant 0 : index
    %c0_31 = arith.constant 0 : index
    %139 = vector.load %arg1[%138, %c0_30, %c0_31] : memref<8x8x384xf32, #tpu.memory_space<vmem>>, vector<1x8x384xf32>
    %140 = vector.shape_cast %139 : vector<1x8x384xf32> to vector<8x384xf32>
    %141 = arith.truncf %137 : vector<8x128xf32> to vector<8x128xbf16>
    %cst_32 = arith.constant dense<0.000000e+00> : vector<8x384xf32>
    %142 = tpu.matmul %141, %3, %cst_32 {dimension_numbers = #tpu.dot_dimension_numbers<[1], [0], [0], [1], [0, 0, 1, 1], [], []>} : vector<8x128xbf16>, vector<128x384xbf16>, vector<8x384xf32> -> vector<8x384xf32>
    %143 = vector.extract_strided_slice %140 {offsets = [0, 0], sizes = [8, 128], strides = [1, 1]} : vector<8x384xf32> to vector<8x128xf32>
    %144 = vector.extract_strided_slice %142 {offsets = [0, 0], sizes = [8, 128], strides = [1, 1]} : vector<8x384xf32> to vector<8x128xf32>
    %145 = arith.addf %143, %144 : vector<8x128xf32>
    %146 = arith.negf %145 : vector<8x128xf32>
    %147 = math.exp %146 : vector<8x128xf32>
    %cst_33 = arith.constant 1.000000e+00 : f32
    %148 = vector.broadcast %cst_33 : f32 to vector<8x128xf32>
    %149 = arith.addf %148, %147 : vector<8x128xf32>
    %150 = arith.divf %148, %149 : vector<8x128xf32>
    %151 = vector.extract_strided_slice %140 {offsets = [0, 128], sizes = [8, 128], strides = [1, 1]} : vector<8x384xf32> to vector<8x128xf32>
    %152 = vector.extract_strided_slice %142 {offsets = [0, 128], sizes = [8, 128], strides = [1, 1]} : vector<8x384xf32> to vector<8x128xf32>
    %153 = arith.addf %151, %152 : vector<8x128xf32>
    %154 = arith.negf %153 : vector<8x128xf32>
    %155 = math.exp %154 : vector<8x128xf32>
    %cst_34 = arith.constant 1.000000e+00 : f32
    %156 = vector.broadcast %cst_34 : f32 to vector<8x128xf32>
    %157 = arith.addf %156, %155 : vector<8x128xf32>
    %158 = arith.divf %156, %157 : vector<8x128xf32>
    %159 = vector.extract_strided_slice %140 {offsets = [0, 256], sizes = [8, 128], strides = [1, 1]} : vector<8x384xf32> to vector<8x128xf32>
    %160 = vector.extract_strided_slice %142 {offsets = [0, 256], sizes = [8, 128], strides = [1, 1]} : vector<8x384xf32> to vector<8x128xf32>
    %161 = vector.broadcast %4 : vector<1x128xf32> to vector<8x128xf32>
    %162 = arith.addf %160, %161 : vector<8x128xf32>
    %163 = arith.mulf %150, %162 : vector<8x128xf32>
    %164 = arith.addf %159, %163 : vector<8x128xf32>
    %165 = math.tanh %164 : vector<8x128xf32>
    %cst_35 = arith.constant 1.000000e+00 : f32
    %166 = vector.broadcast %cst_35 : f32 to vector<8x128xf32>
    %167 = arith.subf %166, %158 : vector<8x128xf32>
    %168 = arith.mulf %167, %165 : vector<8x128xf32>
    %169 = arith.mulf %158, %137 : vector<8x128xf32>
    %170 = arith.addf %168, %169 : vector<8x128xf32>
    %c5_i32 = arith.constant 5 : i32
    %171 = arith.index_cast %c5_i32 : i32 to index
    %c0_36 = arith.constant 0 : index
    %c0_37 = arith.constant 0 : index
    %172 = vector.load %arg1[%171, %c0_36, %c0_37] : memref<8x8x384xf32, #tpu.memory_space<vmem>>, vector<1x8x384xf32>
    %173 = vector.shape_cast %172 : vector<1x8x384xf32> to vector<8x384xf32>
    %174 = arith.truncf %170 : vector<8x128xf32> to vector<8x128xbf16>
    %cst_38 = arith.constant dense<0.000000e+00> : vector<8x384xf32>
    %175 = tpu.matmul %174, %3, %cst_38 {dimension_numbers = #tpu.dot_dimension_numbers<[1], [0], [0], [1], [0, 0, 1, 1], [], []>} : vector<8x128xbf16>, vector<128x384xbf16>, vector<8x384xf32> -> vector<8x384xf32>
    %176 = vector.extract_strided_slice %173 {offsets = [0, 0], sizes = [8, 128], strides = [1, 1]} : vector<8x384xf32> to vector<8x128xf32>
    %177 = vector.extract_strided_slice %175 {offsets = [0, 0], sizes = [8, 128], strides = [1, 1]} : vector<8x384xf32> to vector<8x128xf32>
    %178 = arith.addf %176, %177 : vector<8x128xf32>
    %179 = arith.negf %178 : vector<8x128xf32>
    %180 = math.exp %179 : vector<8x128xf32>
    %cst_39 = arith.constant 1.000000e+00 : f32
    %181 = vector.broadcast %cst_39 : f32 to vector<8x128xf32>
    %182 = arith.addf %181, %180 : vector<8x128xf32>
    %183 = arith.divf %181, %182 : vector<8x128xf32>
    %184 = vector.extract_strided_slice %173 {offsets = [0, 128], sizes = [8, 128], strides = [1, 1]} : vector<8x384xf32> to vector<8x128xf32>
    %185 = vector.extract_strided_slice %175 {offsets = [0, 128], sizes = [8, 128], strides = [1, 1]} : vector<8x384xf32> to vector<8x128xf32>
    %186 = arith.addf %184, %185 : vector<8x128xf32>
    %187 = arith.negf %186 : vector<8x128xf32>
    %188 = math.exp %187 : vector<8x128xf32>
    %cst_40 = arith.constant 1.000000e+00 : f32
    %189 = vector.broadcast %cst_40 : f32 to vector<8x128xf32>
    %190 = arith.addf %189, %188 : vector<8x128xf32>
    %191 = arith.divf %189, %190 : vector<8x128xf32>
    %192 = vector.extract_strided_slice %173 {offsets = [0, 256], sizes = [8, 128], strides = [1, 1]} : vector<8x384xf32> to vector<8x128xf32>
    %193 = vector.extract_strided_slice %175 {offsets = [0, 256], sizes = [8, 128], strides = [1, 1]} : vector<8x384xf32> to vector<8x128xf32>
    %194 = vector.broadcast %4 : vector<1x128xf32> to vector<8x128xf32>
    %195 = arith.addf %193, %194 : vector<8x128xf32>
    %196 = arith.mulf %183, %195 : vector<8x128xf32>
    %197 = arith.addf %192, %196 : vector<8x128xf32>
    %198 = math.tanh %197 : vector<8x128xf32>
    %cst_41 = arith.constant 1.000000e+00 : f32
    %199 = vector.broadcast %cst_41 : f32 to vector<8x128xf32>
    %200 = arith.subf %199, %191 : vector<8x128xf32>
    %201 = arith.mulf %200, %198 : vector<8x128xf32>
    %202 = arith.mulf %191, %170 : vector<8x128xf32>
    %203 = arith.addf %201, %202 : vector<8x128xf32>
    %c6_i32 = arith.constant 6 : i32
    %204 = arith.index_cast %c6_i32 : i32 to index
    %c0_42 = arith.constant 0 : index
    %c0_43 = arith.constant 0 : index
    %205 = vector.load %arg1[%204, %c0_42, %c0_43] : memref<8x8x384xf32, #tpu.memory_space<vmem>>, vector<1x8x384xf32>
    %206 = vector.shape_cast %205 : vector<1x8x384xf32> to vector<8x384xf32>
    %207 = arith.truncf %203 : vector<8x128xf32> to vector<8x128xbf16>
    %cst_44 = arith.constant dense<0.000000e+00> : vector<8x384xf32>
    %208 = tpu.matmul %207, %3, %cst_44 {dimension_numbers = #tpu.dot_dimension_numbers<[1], [0], [0], [1], [0, 0, 1, 1], [], []>} : vector<8x128xbf16>, vector<128x384xbf16>, vector<8x384xf32> -> vector<8x384xf32>
    %209 = vector.extract_strided_slice %206 {offsets = [0, 0], sizes = [8, 128], strides = [1, 1]} : vector<8x384xf32> to vector<8x128xf32>
    %210 = vector.extract_strided_slice %208 {offsets = [0, 0], sizes = [8, 128], strides = [1, 1]} : vector<8x384xf32> to vector<8x128xf32>
    %211 = arith.addf %209, %210 : vector<8x128xf32>
    %212 = arith.negf %211 : vector<8x128xf32>
    %213 = math.exp %212 : vector<8x128xf32>
    %cst_45 = arith.constant 1.000000e+00 : f32
    %214 = vector.broadcast %cst_45 : f32 to vector<8x128xf32>
    %215 = arith.addf %214, %213 : vector<8x128xf32>
    %216 = arith.divf %214, %215 : vector<8x128xf32>
    %217 = vector.extract_strided_slice %206 {offsets = [0, 128], sizes = [8, 128], strides = [1, 1]} : vector<8x384xf32> to vector<8x128xf32>
    %218 = vector.extract_strided_slice %208 {offsets = [0, 128], sizes = [8, 128], strides = [1, 1]} : vector<8x384xf32> to vector<8x128xf32>
    %219 = arith.addf %217, %218 : vector<8x128xf32>
    %220 = arith.negf %219 : vector<8x128xf32>
    %221 = math.exp %220 : vector<8x128xf32>
    %cst_46 = arith.constant 1.000000e+00 : f32
    %222 = vector.broadcast %cst_46 : f32 to vector<8x128xf32>
    %223 = arith.addf %222, %221 : vector<8x128xf32>
    %224 = arith.divf %222, %223 : vector<8x128xf32>
    %225 = vector.extract_strided_slice %206 {offsets = [0, 256], sizes = [8, 128], strides = [1, 1]} : vector<8x384xf32> to vector<8x128xf32>
    %226 = vector.extract_strided_slice %208 {offsets = [0, 256], sizes = [8, 128], strides = [1, 1]} : vector<8x384xf32> to vector<8x128xf32>
    %227 = vector.broadcast %4 : vector<1x128xf32> to vector<8x128xf32>
    %228 = arith.addf %226, %227 : vector<8x128xf32>
    %229 = arith.mulf %216, %228 : vector<8x128xf32>
    %230 = arith.addf %225, %229 : vector<8x128xf32>
    %231 = math.tanh %230 : vector<8x128xf32>
    %cst_47 = arith.constant 1.000000e+00 : f32
    %232 = vector.broadcast %cst_47 : f32 to vector<8x128xf32>
    %233 = arith.subf %232, %224 : vector<8x128xf32>
    %234 = arith.mulf %233, %231 : vector<8x128xf32>
    %235 = arith.mulf %224, %203 : vector<8x128xf32>
    %236 = arith.addf %234, %235 : vector<8x128xf32>
    %c7_i32 = arith.constant 7 : i32
    %237 = arith.index_cast %c7_i32 : i32 to index
    %c0_48 = arith.constant 0 : index
    %c0_49 = arith.constant 0 : index
    %238 = vector.load %arg1[%237, %c0_48, %c0_49] : memref<8x8x384xf32, #tpu.memory_space<vmem>>, vector<1x8x384xf32>
    %239 = vector.shape_cast %238 : vector<1x8x384xf32> to vector<8x384xf32>
    %240 = arith.truncf %236 : vector<8x128xf32> to vector<8x128xbf16>
    %cst_50 = arith.constant dense<0.000000e+00> : vector<8x384xf32>
    %241 = tpu.matmul %240, %3, %cst_50 {dimension_numbers = #tpu.dot_dimension_numbers<[1], [0], [0], [1], [0, 0, 1, 1], [], []>} : vector<8x128xbf16>, vector<128x384xbf16>, vector<8x384xf32> -> vector<8x384xf32>
    %242 = vector.extract_strided_slice %239 {offsets = [0, 0], sizes = [8, 128], strides = [1, 1]} : vector<8x384xf32> to vector<8x128xf32>
    %243 = vector.extract_strided_slice %241 {offsets = [0, 0], sizes = [8, 128], strides = [1, 1]} : vector<8x384xf32> to vector<8x128xf32>
    %244 = arith.addf %242, %243 : vector<8x128xf32>
    %245 = arith.negf %244 : vector<8x128xf32>
    %246 = math.exp %245 : vector<8x128xf32>
    %cst_51 = arith.constant 1.000000e+00 : f32
    %247 = vector.broadcast %cst_51 : f32 to vector<8x128xf32>
    %248 = arith.addf %247, %246 : vector<8x128xf32>
    %249 = arith.divf %247, %248 : vector<8x128xf32>
    %250 = vector.extract_strided_slice %239 {offsets = [0, 128], sizes = [8, 128], strides = [1, 1]} : vector<8x384xf32> to vector<8x128xf32>
    %251 = vector.extract_strided_slice %241 {offsets = [0, 128], sizes = [8, 128], strides = [1, 1]} : vector<8x384xf32> to vector<8x128xf32>
    %252 = arith.addf %250, %251 : vector<8x128xf32>
    %253 = arith.negf %252 : vector<8x128xf32>
    %254 = math.exp %253 : vector<8x128xf32>
    %cst_52 = arith.constant 1.000000e+00 : f32
    %255 = vector.broadcast %cst_52 : f32 to vector<8x128xf32>
    %256 = arith.addf %255, %254 : vector<8x128xf32>
    %257 = arith.divf %255, %256 : vector<8x128xf32>
    %258 = vector.extract_strided_slice %239 {offsets = [0, 256], sizes = [8, 128], strides = [1, 1]} : vector<8x384xf32> to vector<8x128xf32>
    %259 = vector.extract_strided_slice %241 {offsets = [0, 256], sizes = [8, 128], strides = [1, 1]} : vector<8x384xf32> to vector<8x128xf32>
    %260 = vector.broadcast %4 : vector<1x128xf32> to vector<8x128xf32>
    %261 = arith.addf %259, %260 : vector<8x128xf32>
    %262 = arith.mulf %249, %261 : vector<8x128xf32>
    %263 = arith.addf %258, %262 : vector<8x128xf32>
    %264 = math.tanh %263 : vector<8x128xf32>
    %cst_53 = arith.constant 1.000000e+00 : f32
    %265 = vector.broadcast %cst_53 : f32 to vector<8x128xf32>
    %266 = arith.subf %265, %257 : vector<8x128xf32>
    %267 = arith.mulf %266, %264 : vector<8x128xf32>
    %268 = arith.mulf %257, %236 : vector<8x128xf32>
    %269 = arith.addf %267, %268 : vector<8x128xf32>
    %c8_i32 = arith.constant 8 : i32
    %c0_54 = arith.constant 0 : index
    %c0_55 = arith.constant 0 : index
    %270 = vector.load %arg5[%c0_54, %c0_55] : memref<8x128xf32, #tpu.memory_space<vmem>>, vector<8x128xf32>
    tpu.vector_store %arg5[%c0_54, %c0_55], %269 {strides = array<i32>} : memref<8x128xf32, #tpu.memory_space<vmem>>, vector<8x128xf32>,
    %c0_i32_56 = arith.constant 0 : i32
    %271 = arith.cmpi eq, %arg0, %c0_i32_56 : i32
    %272 = arith.extui %271 : i1 to i32
    %c0_i32_57 = arith.constant 0 : i32
    %273 = arith.cmpi ne, %272, %c0_i32_57 : i32
    scf.if %273 {
      %c0_58 = arith.constant 0 : index
      %c0_59 = arith.constant 0 : index
      %c0_60 = arith.constant 0 : index
      %274 = vector.load %arg4[%c0_58, %c0_59, %c0_60] : memref<1x8x128xf32, #tpu.memory_space<vmem>>, vector<1x8x128xf32>
      %275 = vector.shape_cast %274 : vector<1x8x128xf32> to vector<8x128xf32>
      %276 = vector.shape_cast %269 : vector<8x128xf32> to vector<1x8x128xf32>
      tpu.vector_store %arg4[%c0_58, %c0_59, %c0_60], %276 {strides = array<i32>} : memref<1x8x128xf32, #tpu.memory_space<vmem>>, vector<1x8x128xf32>,
    } else {
    }
    return
  }
  func.func @transform_0(%arg0: i32) -> (i32, i32, i32) {
    %c0_i32 = arith.constant 0 : i32
    %c0_i32_0 = arith.constant 0 : i32
    %c0_i32_1 = arith.constant 0 : i32
    return %arg0, %c0_i32, %c0_i32_0 : i32, i32, i32
  }
  func.func @transform_2(%arg0: i32) -> (i32, i32) {
    %c0_i32 = arith.constant 0 : i32
    %c0_i32_0 = arith.constant 0 : i32
    %c0_i32_1 = arith.constant 0 : i32
    return %c0_i32, %c0_i32_0 : i32, i32
  }
  func.func @transform_3(%arg0: i32) -> (i32, i32, i32) {
    %c0_i32 = arith.constant 0 : i32
    %c0_i32_0 = arith.constant 0 : i32
    %c0_i32_1 = arith.constant 0 : i32
    %c0_i32_2 = arith.constant 0 : i32
    return %c0_i32, %c0_i32_0, %c0_i32_1 : i32, i32, i32
  }
}

</mosaic_0001>

<llo_original>
// kernel: gru_uni_to_linear.2
$region0: #{gru_uni_to_linear.2}
  #allocation0 [shape = 'u32[]', space=smem, size = 0x4, offset = 0x4, fixed_abs, tag = 'smem constant byte address 0x4 - core index']
  #allocation1 [shape = 'u32[144,128]{1,0:T(1,128)}', space=vmem, size = 0x12000, scoped, tag = 'internal scratch']
  #allocation2 [shape = 'f32[8,128]{1,0:T(8,128)}', space=vmem, size = 0x1000, scoped, tag = 'scratch operand']
  #allocation3 [shape = 'bf16[128,384]{1,0:T(16,128)(2,1)}', space=vmem, size = 0x18000, scoped, tag = 'scratch operand']
  #allocation4 [shape = 's32[1]{0}', space=sflag, size = 0x4, scoped, tag = 'scratch operand']
  #allocation5 [shape = 's32[]', space=sflag, size = 0x4, offset = 0, fixed_abs, tag = 'sflag constant byte address 0x0 - dummy sync flag']
  %s0 = inlined_call_operand.vmem [shape: f32[8,8,384], index: 0, kind: input, shape index: {}]
  %s1 = inlined_call_operand.vmem [shape: bf16[128,384], index: 1, kind: input, shape index: {}]
  %s2 = inlined_call_operand.vmem [shape: f32[1,128], index: 2, kind: input, shape index: {}]
  %s3 = inlined_call_operand.vmem [shape: f32[8,8,128], index: 3, kind: output, shape index: {}]
  %s4 = sld [smem:[#allocation0]]
  $region59: #{gru_uni_to_linear.2} parent=0
    _
  %s6 = ssub.s32 1, %s4
  %s7 = scalar_select 0, %s6, %s4
  // Predicated region
  $region2: #{gru_uni_to_linear.2} parent=0 // pred_check
    _
  $region3: #{gru_uni_to_linear.2} parent=0 // pred_check_branch
    %9 = sbr.rel (0) target = $region5
  $region4: #{gru_uni_to_linear.2} parent=0 // pred_region
    _
  $region5: #{gru_uni_to_linear.2} parent=0 // pred_fallthru
    _
  // Predicated region
  $region6: #{gru_uni_to_linear.2} parent=0 // pred_check
    _
  $region7: #{gru_uni_to_linear.2} parent=0 // pred_check_branch
    %11 = sbr.rel (0) target = $region9
  $region8: #{gru_uni_to_linear.2} parent=0 // pred_region
    _
  $region9: #{gru_uni_to_linear.2} parent=0 // pred_fallthru
    _
  %p13 = scmp.eq.s32.totalorder 0, 0
  // Predicated region
  $region10: #{gru_uni_to_linear.2} parent=0 // pred_check
    %p14 = pneg %p13
  $region11: #{gru_uni_to_linear.2} parent=0 // pred_check_branch
    %16 = sbr.rel (%p14) target = $region13
  $region12: #{gru_uni_to_linear.2} parent=0 // pred_region
    %17 = vst [vmem:[#allocation2] sm:$0xff] 0.0
    %p19 = scmp.lt.u32.totalorder 4, 8
    %p20 = pneg %p19
    // Predicated region
    $region14: #{gru_uni_to_linear.2} parent=12 // pred_check
      _
    $region15: #{gru_uni_to_linear.2} parent=12 // pred_check_branch
      %22 = sbr.rel (%p19) target = $region17
    $region16: #{gru_uni_to_linear.2} parent=12 // pred_region
      %s131 = sand.u32 4, 7
      %p132 = scmp.eq.s32.totalorder %s131, 0
      %p133 = pneg %p132
      // Predicated region
      $region29: #{gru_uni_to_linear.2} parent=16 // pred_check
        _
      $region30: #{gru_uni_to_linear.2} parent=16 // pred_check_branch
        %135 = sbr.rel (%p132) target = $region32
      $region31: #{gru_uni_to_linear.2} parent=16 // pred_region
        %s136 = sand.u32 4, 7
        %s137 = ssub.s32 4, %s136
        %s138 = scalar_lea.vmem %s1, %s137
        %s139 = ssub.s32 4, %s136
        %s140 = scalar_lea.vmem [#allocation3], %s139
        loop: start=0, step=1, limit=1
        $region33: #{gru_uni_to_linear.2} parent=31 // loop_pre_header
          _
        $region34: #{gru_uni_to_linear.2} parent=31 // loop_header
          %s142 = sphi 0, %s146
          %p143 = scmp.ge.s32.totalorder %s142, 1
          %s147 = sphi %s1, %s1
          %s148 = sphi [#allocation3], [#allocation3]
        $region35: #{gru_uni_to_linear.2} parent=31 // loop_header_branch
          %145 = sbr.rel (%p143) target = $region39
        $region36: #{gru_uni_to_linear.2} parent=31 // loop_body
          _
        $region37: #{gru_uni_to_linear.2} parent=31 // loop_footer
          %s146 = sadd.s32 1, %s142
        $region38: #{gru_uni_to_linear.2} parent=31 // loop_footer_branch
          %141 = sbr.rel target = $region34
        $region39: #{gru_uni_to_linear.2} parent=31 // loop_exit
          _
        %s149 = sshllo.u32 0, %s136
        loop: start=0, step=1, limit=1
        $region40: #{gru_uni_to_linear.2} parent=31 // loop_pre_header
          _
        $region41: #{gru_uni_to_linear.2} parent=31 // loop_header
          %s151 = sphi 0, %s155
          %p152 = scmp.ge.s32.totalorder %s151, 1
          %s156 = sphi %s138, %s138
          %s157 = sphi %s140, %s140
        $region42: #{gru_uni_to_linear.2} parent=31 // loop_header_branch
          %154 = sbr.rel (%p152) target = $region46
        $region43: #{gru_uni_to_linear.2} parent=31 // loop_body
          %v158 = vld [vmem:[%s156] sm:%s149]
          %159 = vst [vmem:[%s157] sm:%s149] %v158
          %v160 = vld [vmem:[%s156 + $0xc] sm:%s149]
          %161 = vst [vmem:[%s157 + $0x4] sm:%s149] %v160
          %v162 = vld [vmem:[%s156 + $0x4] sm:%s149]
          %163 = vst [vmem:[%s157 + $0x8] sm:%s149] %v162
          %v164 = vld [vmem:[%s156 + $0x10] sm:%s149]
          %165 = vst [vmem:[%s157 + $0xc] sm:%s149] %v164
          %v166 = vld [vmem:[%s156 + $0x8] sm:%s149]
          %167 = vst [vmem:[%s157 + $0x10] sm:%s149] %v166
          %v168 = vld [vmem:[%s156 + $0x14] sm:%s149]
          %169 = vst [vmem:[%s157 + $0x14] sm:%s149] %v168
          %v170 = vld [vmem:[%s156 + $0x18] sm:%s149]
          %171 = vst [vmem:[%s157 + $0x18] sm:%s149] %v170
          %v172 = vld [vmem:[%s156 + $0x24] sm:%s149]
          %173 = vst [vmem:[%s157 + $0x1c] sm:%s149] %v172
          %v174 = vld [vmem:[%s156 + $0x1c] sm:%s149]
          %175 = vst [vmem:[%s157 + $0x20] sm:%s149] %v174
          %v176 = vld [vmem:[%s156 + $0x28] sm:%s149]
          %177 = vst [vmem:[%s157 + $0x24] sm:%s149] %v176
          %v178 = vld [vmem:[%s156 + $0x20] sm:%s149]
          %179 = vst [vmem:[%s157 + $0x28] sm:%s149] %v178
          %v180 = vld [vmem:[%s156 + $0x2c] sm:%s149]
          %181 = vst [vmem:[%s157 + $0x2c] sm:%s149] %v180
          %v182 = vld [vmem:[%s156 + $0x30] sm:%s149]
          %183 = vst [vmem:[%s157 + $0x30] sm:%s149] %v182
          %v184 = vld [vmem:[%s156 + $0x3c] sm:%s149]
          %185 = vst [vmem:[%s157 + $0x34] sm:%s149] %v184
          %v186 = vld [vmem:[%s156 + $0x34] sm:%s149]
          %187 = vst [vmem:[%s157 + $0x38] sm:%s149] %v186
          %v188 = vld [vmem:[%s156 + $0x40] sm:%s149]
          %189 = vst [vmem:[%s157 + $0x3c] sm:%s149] %v188
          %v190 = vld [vmem:[%s156 + $0x38] sm:%s149]
          %191 = vst [vmem:[%s157 + $0x40] sm:%s149] %v190
          %v192 = vld [vmem:[%s156 + $0x44] sm:%s149]
          %193 = vst [vmem:[%s157 + $0x44] sm:%s149] %v192
          %v194 = vld [vmem:[%s156 + $0x48] sm:%s149]
          %195 = vst [vmem:[%s157 + $0x48] sm:%s149] %v194
          %v196 = vld [vmem:[%s156 + $0x54] sm:%s149]
          %197 = vst [vmem:[%s157 + $0x4c] sm:%s149] %v196
          %v198 = vld [vmem:[%s156 + $0x4c] sm:%s149]
          %199 = vst [vmem:[%s157 + $0x50] sm:%s149] %v198
          %v200 = vld [vmem:[%s156 + $0x58] sm:%s149]
          %201 = vst [vmem:[%s157 + $0x54] sm:%s149] %v200
          %v202 = vld [vmem:[%s156 + $0x50] sm:%s149]
          %203 = vst [vmem:[%s157 + $0x58] sm:%s149] %v202
          %v204 = vld [vmem:[%s156 + $0x5c] sm:%s149]
          %205 = vst [vmem:[%s157 + $0x5c] sm:%s149] %v204
          %v206 = vld [vmem:[%s156 + $0x60] sm:%s149]
          %207 = vst [vmem:[%s157 + $0x60] sm:%s149] %v206
          %v208 = vld [vmem:[%s156 + $0x6c] sm:%s149]
          %209 = vst [vmem:[%s157 + $0x64] sm:%s149] %v208
          %v210 = vld [vmem:[%s156 + $0x64] sm:%s149]
          %211 = vst [vmem:[%s157 + $0x68] sm:%s149] %v210
          %v212 = vld [vmem:[%s156 + $0x70] sm:%s149]
          %213 = vst [vmem:[%s157 + $0x6c] sm:%s149] %v212
          %v214 = vld [vmem:[%s156 + $0x68] sm:%s149]
          %215 = vst [vmem:[%s157 + $0x70] sm:%s149] %v214
          %v216 = vld [vmem:[%s156 + $0x74] sm:%s149]
          %217 = vst [vmem:[%s157 + $0x74] sm:%s149] %v216
          %v218 = vld [vmem:[%s156 + $0x78] sm:%s149]
          %219 = vst [vmem:[%s157 + $0x78] sm:%s149] %v218
          %v220 = vld [vmem:[%s156 + $0x84] sm:%s149]
          %221 = vst [vmem:[%s157 + $0x7c] sm:%s149] %v220
          %v222 = vld [vmem:[%s156 + $0x7c] sm:%s149]
          %223 = vst [vmem:[%s157 + $0x80] sm:%s149] %v222
          %v224 = vld [vmem:[%s156 + $0x88] sm:%s149]
          %225 = vst [vmem:[%s157 + $0x84] sm:%s149] %v224
          %v226 = vld [vmem:[%s156 + $0x80] sm:%s149]
          %227 = vst [vmem:[%s157 + $0x88] sm:%s149] %v226
          %v228 = vld [vmem:[%s156 + $0x8c] sm:%s149]
          %229 = vst [vmem:[%s157 + $0x8c] sm:%s149] %v228
          %v230 = vld [vmem:[%s156 + $0x90] sm:%s149]
          %231 = vst [vmem:[%s157 + $0x90] sm:%s149] %v230
          %v232 = vld [vmem:[%s156 + $0x9c] sm:%s149]
          %233 = vst [vmem:[%s157 + $0x94] sm:%s149] %v232
          %v234 = vld [vmem:[%s156 + $0x94] sm:%s149]
          %235 = vst [vmem:[%s157 + $0x98] sm:%s149] %v234
          %v236 = vld [vmem:[%s156 + $0xa0] sm:%s149]
          %237 = vst [vmem:[%s157 + $0x9c] sm:%s149] %v236
          %v238 = vld [vmem:[%s156 + $0x98] sm:%s149]
          %239 = vst [vmem:[%s157 + $0xa0] sm:%s149] %v238
          %v240 = vld [vmem:[%s156 + $0xa4] sm:%s149]
          %241 = vst [vmem:[%s157 + $0xa4] sm:%s149] %v240
          %v242 = vld [vmem:[%s156 + $0xa8] sm:%s149]
          %243 = vst [vmem:[%s157 + $0xa8] sm:%s149] %v242
          %v244 = vld [vmem:[%s156 + $0xb4] sm:%s149]
          %245 = vst [vmem:[%s157 + $0xac] sm:%s149] %v244
          %v246 = vld [vmem:[%s156 + $0xac] sm:%s149]
          %247 = vst [vmem:[%s157 + $0xb0] sm:%s149] %v246
          %v248 = vld [vmem:[%s156 + $0xb8] sm:%s149]
          %249 = vst [vmem:[%s157 + $0xb4] sm:%s149] %v248
          %v250 = vld [vmem:[%s156 + $0xb0] sm:%s149]
          %251 = vst [vmem:[%s157 + $0xb8] sm:%s149] %v250
          %v252 = vld [vmem:[%s156 + $0xbc] sm:%s149]
          %253 = vst [vmem:[%s157 + $0xbc] sm:%s149] %v252
        $region44: #{gru_uni_to_linear.2} parent=31 // loop_footer
          %s155 = sadd.s32 1, %s151
        $region45: #{gru_uni_to_linear.2} parent=31 // loop_footer_branch
          %150 = sbr.rel target = $region41
        $region46: #{gru_uni_to_linear.2} parent=31 // loop_exit
          _
      $region32: #{gru_uni_to_linear.2} parent=16 // pred_fallthru
        _
    $region17: #{gru_uni_to_linear.2} parent=12 // pred_fallthru
      _
    // Predicated region
    $region18: #{gru_uni_to_linear.2} parent=12 // pred_check
      %p23 = pneg %p19
    $region19: #{gru_uni_to_linear.2} parent=12 // pred_check_branch
      %25 = sbr.rel (%p23) target = $region21
    $region20: #{gru_uni_to_linear.2} parent=12 // pred_region
      %s26 = sshllo.u32 0, 4
      loop: start=0, step=1, limit=1
      $region22: #{gru_uni_to_linear.2} parent=20 // loop_pre_header
        _
      $region23: #{gru_uni_to_linear.2} parent=20 // loop_header
        %s28 = sphi 0, %s32
        %p29 = scmp.ge.s32.totalorder %s28, 1
        %s33 = sphi %s1, %s1
        %s34 = sphi [#allocation3], [#allocation3]
      $region24: #{gru_uni_to_linear.2} parent=20 // loop_header_branch
        %31 = sbr.rel (%p29) target = $region28
      $region25: #{gru_uni_to_linear.2} parent=20 // loop_body
        %v35 = vld [vmem:[%s33] sm:%s26]
        %36 = vst [vmem:[%s34] sm:%s26] %v35
        %v37 = vld [vmem:[%s33 + $0xc] sm:%s26]
        %38 = vst [vmem:[%s34 + $0x4] sm:%s26] %v37
        %v39 = vld [vmem:[%s33 + $0x4] sm:%s26]
        %40 = vst [vmem:[%s34 + $0x8] sm:%s26] %v39
        %v41 = vld [vmem:[%s33 + $0x10] sm:%s26]
        %42 = vst [vmem:[%s34 + $0xc] sm:%s26] %v41
        %v43 = vld [vmem:[%s33 + $0x8] sm:%s26]
        %44 = vst [vmem:[%s34 + $0x10] sm:%s26] %v43
        %v45 = vld [vmem:[%s33 + $0x14] sm:%s26]
        %46 = vst [vmem:[%s34 + $0x14] sm:%s26] %v45
        %v47 = vld [vmem:[%s33 + $0x18] sm:%s26]
        %48 = vst [vmem:[%s34 + $0x18] sm:%s26] %v47
        %v49 = vld [vmem:[%s33 + $0x24] sm:%s26]
        %50 = vst [vmem:[%s34 + $0x1c] sm:%s26] %v49
        %v51 = vld [vmem:[%s33 + $0x1c] sm:%s26]
        %52 = vst [vmem:[%s34 + $0x20] sm:%s26] %v51
        %v53 = vld [vmem:[%s33 + $0x28] sm:%s26]
        %54 = vst [vmem:[%s34 + $0x24] sm:%s26] %v53
        %v55 = vld [vmem:[%s33 + $0x20] sm:%s26]
        %56 = vst [vmem:[%s34 + $0x28] sm:%s26] %v55
        %v57 = vld [vmem:[%s33 + $0x2c] sm:%s26]
        %58 = vst [vmem:[%s34 + $0x2c] sm:%s26] %v57
        %v59 = vld [vmem:[%s33 + $0x30] sm:%s26]
        %60 = vst [vmem:[%s34 + $0x30] sm:%s26] %v59
        %v61 = vld [vmem:[%s33 + $0x3c] sm:%s26]
        %62 = vst [vmem:[%s34 + $0x34] sm:%s26] %v61
        %v63 = vld [vmem:[%s33 + $0x34] sm:%s26]
        %64 = vst [vmem:[%s34 + $0x38] sm:%s26] %v63
        %v65 = vld [vmem:[%s33 + $0x40] sm:%s26]
        %66 = vst [vmem:[%s34 + $0x3c] sm:%s26] %v65
        %v67 = vld [vmem:[%s33 + $0x38] sm:%s26]
        %68 = vst [vmem:[%s34 + $0x40] sm:%s26] %v67
        %v69 = vld [vmem:[%s33 + $0x44] sm:%s26]
        %70 = vst [vmem:[%s34 + $0x44] sm:%s26] %v69
        %v71 = vld [vmem:[%s33 + $0x48] sm:%s26]
        %72 = vst [vmem:[%s34 + $0x48] sm:%s26] %v71
        %v73 = vld [vmem:[%s33 + $0x54] sm:%s26]
        %74 = vst [vmem:[%s34 + $0x4c] sm:%s26] %v73
        %v75 = vld [vmem:[%s33 + $0x4c] sm:%s26]
        %76 = vst [vmem:[%s34 + $0x50] sm:%s26] %v75
        %v77 = vld [vmem:[%s33 + $0x58] sm:%s26]
        %78 = vst [vmem:[%s34 + $0x54] sm:%s26] %v77
        %v79 = vld [vmem:[%s33 + $0x50] sm:%s26]
        %80 = vst [vmem:[%s34 + $0x58] sm:%s26] %v79
        %v81 = vld [vmem:[%s33 + $0x5c] sm:%s26]
        %82 = vst [vmem:[%s34 + $0x5c] sm:%s26] %v81
        %v83 = vld [vmem:[%s33 + $0x60] sm:%s26]
        %84 = vst [vmem:[%s34 + $0x60] sm:%s26] %v83
        %v85 = vld [vmem:[%s33 + $0x6c] sm:%s26]
        %86 = vst [vmem:[%s34 + $0x64] sm:%s26] %v85
        %v87 = vld [vmem:[%s33 + $0x64] sm:%s26]
        %88 = vst [vmem:[%s34 + $0x68] sm:%s26] %v87
        %v89 = vld [vmem:[%s33 + $0x70] sm:%s26]
        %90 = vst [vmem:[%s34 + $0x6c] sm:%s26] %v89
        %v91 = vld [vmem:[%s33 + $0x68] sm:%s26]
        %92 = vst [vmem:[%s34 + $0x70] sm:%s26] %v91
        %v93 = vld [vmem:[%s33 + $0x74] sm:%s26]
        %94 = vst [vmem:[%s34 + $0x74] sm:%s26] %v93
        %v95 = vld [vmem:[%s33 + $0x78] sm:%s26]
        %96 = vst [vmem:[%s34 + $0x78] sm:%s26] %v95
        %v97 = vld [vmem:[%s33 + $0x84] sm:%s26]
        %98 = vst [vmem:[%s34 + $0x7c] sm:%s26] %v97
        %v99 = vld [vmem:[%s33 + $0x7c] sm:%s26]
        %100 = vst [vmem:[%s34 + $0x80] sm:%s26] %v99
        %v101 = vld [vmem:[%s33 + $0x88] sm:%s26]
        %102 = vst [vmem:[%s34 + $0x84] sm:%s26] %v101
        %v103 = vld [vmem:[%s33 + $0x80] sm:%s26]
        %104 = vst [vmem:[%s34 + $0x88] sm:%s26] %v103
        %v105 = vld [vmem:[%s33 + $0x8c] sm:%s26]
        %106 = vst [vmem:[%s34 + $0x8c] sm:%s26] %v105
        %v107 = vld [vmem:[%s33 + $0x90] sm:%s26]
        %108 = vst [vmem:[%s34 + $0x90] sm:%s26] %v107
        %v109 = vld [vmem:[%s33 + $0x9c] sm:%s26]
        %110 = vst [vmem:[%s34 + $0x94] sm:%s26] %v109
        %v111 = vld [vmem:[%s33 + $0x94] sm:%s26]
        %112 = vst [vmem:[%s34 + $0x98] sm:%s26] %v111
        %v113 = vld [vmem:[%s33 + $0xa0] sm:%s26]
        %114 = vst [vmem:[%s34 + $0x9c] sm:%s26] %v113
        %v115 = vld [vmem:[%s33 + $0x98] sm:%s26]
        %116 = vst [vmem:[%s34 + $0xa0] sm:%s26] %v115
        %v117 = vld [vmem:[%s33 + $0xa4] sm:%s26]
        %118 = vst [vmem:[%s34 + $0xa4] sm:%s26] %v117
        %v119 = vld [vmem:[%s33 + $0xa8] sm:%s26]
        %120 = vst [vmem:[%s34 + $0xa8] sm:%s26] %v119
        %v121 = vld [vmem:[%s33 + $0xb4] sm:%s26]
        %122 = vst [vmem:[%s34 + $0xac] sm:%s26] %v121
        %v123 = vld [vmem:[%s33 + $0xac] sm:%s26]
        %124 = vst [vmem:[%s34 + $0xb0] sm:%s26] %v123
        %v125 = vld [vmem:[%s33 + $0xb8] sm:%s26]
        %126 = vst [vmem:[%s34 + $0xb4] sm:%s26] %v125
        %v127 = vld [vmem:[%s33 + $0xb0] sm:%s26]
        %128 = vst [vmem:[%s34 + $0xb8] sm:%s26] %v127
        %v129 = vld [vmem:[%s33 + $0xbc] sm:%s26]
        %130 = vst [vmem:[%s34 + $0xbc] sm:%s26] %v129
      $region26: #{gru_uni_to_linear.2} parent=20 // loop_footer
        %s32 = sadd.s32 1, %s28
      $region27: #{gru_uni_to_linear.2} parent=20 // loop_footer_branch
        %27 = sbr.rel target = $region23
      $region28: #{gru_uni_to_linear.2} parent=20 // loop_exit
        _
    $region21: #{gru_uni_to_linear.2} parent=12 // pred_fallthru
      _
    // Predicated region
    $region47: #{gru_uni_to_linear.2} parent=12 // pred_check
      _
    $region48: #{gru_uni_to_linear.2} parent=12 // pred_check_branch
      %256 = sbr.rel (0) target = $region50
    $region49: #{gru_uni_to_linear.2} parent=12 // pred_region
      %257 = vsyncadd [#allocation4], 3072
    $region50: #{gru_uni_to_linear.2} parent=12 // pred_fallthru
      _
    %s258 = smul.u32 4, 16
    %s259 = smul.u32 %s258, 3
    %s260 = sshll.u32 %s259, 4
    %261 = dma.done [#allocation4], %s260
  $region13: #{gru_uni_to_linear.2} parent=0 // pred_fallthru
    _
  %v262 = vld [vmem:[#allocation3] sm:$0xff]
  %v263 = vld [vmem:[#allocation3 + $0x8] sm:$0xff]
  %v264 = vld [vmem:[#allocation3 + $0x10] sm:$0xff]
  %v265 = vld [vmem:[#allocation3 + $0x18] sm:$0xff]
  %v266 = vld [vmem:[#allocation3 + $0x20] sm:$0xff]
  %v267 = vld [vmem:[#allocation3 + $0x28] sm:$0xff]
  %v268 = vld [vmem:[#allocation3 + $0x30] sm:$0xff]
  %v269 = vld [vmem:[#allocation3 + $0x38] sm:$0xff]
  %v270 = vld [vmem:[#allocation3 + $0x40] sm:$0xff]
  %v271 = vld [vmem:[#allocation3 + $0x48] sm:$0xff]
  %v272 = vld [vmem:[#allocation3 + $0x50] sm:$0xff]
  %v273 = vld [vmem:[#allocation3 + $0x58] sm:$0xff]
  %v274 = vld [vmem:[#allocation3 + $0x60] sm:$0xff]
  %v275 = vld [vmem:[#allocation3 + $0x68] sm:$0xff]
  %v276 = vld [vmem:[#allocation3 + $0x70] sm:$0xff]
  %v277 = vld [vmem:[#allocation3 + $0x78] sm:$0xff]
  %v278 = vld [vmem:[#allocation3 + $0x80] sm:$0xff]
  %v279 = vld [vmem:[#allocation3 + $0x88] sm:$0xff]
  %v280 = vld [vmem:[#allocation3 + $0x90] sm:$0xff]
  %v281 = vld [vmem:[#allocation3 + $0x98] sm:$0xff]
  %v282 = vld [vmem:[#allocation3 + $0xa0] sm:$0xff]
  %v283 = vld [vmem:[#allocation3 + $0xa8] sm:$0xff]
  %v284 = vld [vmem:[#allocation3 + $0xb0] sm:$0xff]
  %v285 = vld [vmem:[#allocation3 + $0xb8] sm:$0xff]
  %v286 = vld [vmem:[%s2] sm:$0x1]
  %v287 = vld [vmem:[#allocation2] sm:$0xff]
  %v288 = vld [vmem:[%s0] sm:$0xff]
  %v289 = vld [vmem:[%s0 + $0x8] sm:$0xff]
  %v290 = vld [vmem:[%s0 + $0x10] sm:$0xff]
  %v291 = vpack.c.bf16 %v287, %v287
  %292 = vmatprep.subr.bf16.mxu0 %v263
  %293 = vmatpush1.bf16.msra.mxu0 %v262
  %294 = vmatprep.subr.bf16.mxu0 %v266
  %295 = vmatpush1.bf16.msra.mxu0 %v265
  %296 = vmatprep.subr.bf16.mxu0 %v269
  %297 = vmatpush1.bf16.msra.mxu0 %v268
  %298 = vmatprep.subr.bf16.mxu0 %v272
  %299 = vmatpush1.bf16.msra.mxu0 %v271
  %300 = vmatprep.subr.bf16.mxu0 %v275
  %301 = vmatpush1.bf16.msra.mxu0 %v274
  %302 = vmatprep.subr.bf16.mxu0 %v278
  %303 = vmatpush1.bf16.msra.mxu0 %v277
  %304 = vmatprep.subr.bf16.mxu0 %v281
  %305 = vmatpush1.bf16.msra.mxu0 %v280
  %306 = vmatprep.subr.bf16.mxu0 %v284
  %307 = vmatpush1.bf16.msra.mxu0 %v283
  %308 = vmatprep.subr.bf16.mxu0 0
  %309 = vmatpush1.bf16.msra.mxu0 0
  %310 = vmatprep.subr.bf16.mxu0 0
  %311 = vmatpush1.bf16.msra.mxu0 0
  %312 = vmatprep.subr.bf16.mxu0 0
  %313 = vmatpush1.bf16.msra.mxu0 0
  %314 = vmatprep.subr.bf16.mxu0 0
  %315 = vmatpush1.bf16.msra.mxu0 0
  %316 = vmatprep.subr.bf16.mxu0 0
  %317 = vmatpush1.bf16.msra.mxu0 0
  %318 = vmatprep.subr.bf16.mxu0 0
  %319 = vmatpush1.bf16.msra.mxu0 0
  %320 = vmatprep.subr.bf16.mxu0 0
  %321 = vmatpush1.bf16.msra.mxu0 0
  %322 = vmatprep.subr.bf16.mxu0 0
  %323 = vmatpush1.bf16.msra.mxu0 0
  %324 = vmatprep.mubr.bf16.mxu0 0
  %325 = vmatmul.mubr.bf16.gmra.mrb[0].mxu0 %v291
  %v326 = vpop.f32.mrb[0].mxu0
  %v327 = vadd.f32 0.0, %v326
  %v328 = vpop.f32.mrb[0].mxu0
  %v329 = vadd.f32 0.0, %v328
  %v330 = vpop.f32.mrb[0].mxu0
  %v331 = vpop.f32.mrb[0].mxu0
  %332 = vdwg.mxu0
  %333 = vmatprep.subr.bf16.mxu0 0
  %334 = vmatpush1.bf16.msra.mxu0 %v264
  %335 = vmatprep.subr.bf16.mxu0 0
  %336 = vmatpush1.bf16.msra.mxu0 %v267
  %337 = vmatprep.subr.bf16.mxu0 0
  %338 = vmatpush1.bf16.msra.mxu0 %v270
  %339 = vmatprep.subr.bf16.mxu0 0
  %340 = vmatpush1.bf16.msra.mxu0 %v273
  %341 = vmatprep.subr.bf16.mxu0 0
  %342 = vmatpush1.bf16.msra.mxu0 %v276
  %343 = vmatprep.subr.bf16.mxu0 0
  %344 = vmatpush1.bf16.msra.mxu0 %v279
  %345 = vmatprep.subr.bf16.mxu0 0
  %346 = vmatpush1.bf16.msra.mxu0 %v282
  %347 = vmatprep.subr.bf16.mxu0 0
  %348 = vmatpush1.bf16.msra.mxu0 %v285
  %349 = vmatprep.subr.bf16.mxu0 0
  %350 = vmatpush1.bf16.msra.mxu0 0
  %351 = vmatprep.subr.bf16.mxu0 0
  %352 = vmatpush1.bf16.msra.mxu0 0
  %353 = vmatprep.subr.bf16.mxu0 0
  %354 = vmatpush1.bf16.msra.mxu0 0
  %355 = vmatprep.subr.bf16.mxu0 0
  %356 = vmatpush1.bf16.msra.mxu0 0
  %357 = vmatprep.subr.bf16.mxu0 0
  %358 = vmatpush1.bf16.msra.mxu0 0
  %359 = vmatprep.subr.bf16.mxu0 0
  %360 = vmatpush1.bf16.msra.mxu0 0
  %361 = vmatprep.subr.bf16.mxu0 0
  %362 = vmatpush1.bf16.msra.mxu0 0
  %363 = vmatprep.subr.bf16.mxu0 0
  %364 = vmatpush1.bf16.msra.mxu0 0
  %365 = vmatprep.mubr.bf16.mxu0 0
  %366 = vmatmul.mubr.bf16.gmra.mrb[0].mxu0 %v291
  %v367 = vpop.f32.mrb[0].mxu0
  %v368 = vadd.f32 0.0, %v367
  %v369 = vpop.f32.mrb[0].mxu0
  %v370 = vpop.f32.mrb[0].mxu0
  %v371 = vpop.f32.mrb[0].mxu0
  %372 = vdwg.mxu0
  %v373 = vadd.f32 %v288, %v327
  %v374 = vxor.u32 %v373, 2147483648
  %v375 = vmul.f32 %v374, 1.442695
  %v376 = vpow.pop %v375
  %v377 = vadd.f32 %v376, 1.0
  %v378 = vrcp.pop %v377
  %v379 = vmul.f32 1.0, %v378
  %v380 = vadd.f32 %v289, %v329
  %v381 = vxor.u32 %v380, 2147483648
  %v382 = vmul.f32 %v381, 1.442695
  %v383 = vpow.pop %v382
  %v384 = vadd.f32 %v383, 1.0
  %v385 = vrcp.pop %v384
  %v386 = vmul.f32 1.0, %v385
  %v388 = vlaneseq
  %v389 = vshrl.u32 %v388, 7
  %v390 = vsub.s32 0, %v389
  %v391 = vrot.slane %v286, %v390
  %v393 = vadd.f32 %v368, %v391
  %v394 = vmul.f32 %v379, %v393
  %v395 = vadd.f32 %v290, %v394
  %v396 = vtanh.pop %v395
  %v397 = vsub.f32 1.0, %v386
  %v398 = vmul.f32 %v397, %v396
  %v399 = vmul.f32 %v386, %v287
  %v400 = vadd.f32 %v398, %v399
  %401 = vst [vmem:[%s3] sm:$0xff] %v400
  %s402 = scalar_lea.vmem %s0, 24
  %v403 = vld [vmem:[%s402] sm:$0xff]
  %v404 = vld [vmem:[%s402 + $0x8] sm:$0xff]
  %v405 = vld [vmem:[%s402 + $0x10] sm:$0xff]
  %v406 = vpack.c.bf16 %v400, %v400
  %407 = vmatprep.subr.bf16.mxu0 %v263
  %408 = vmatpush1.bf16.msra.mxu0 %v262
  %409 = vmatprep.subr.bf16.mxu0 %v266
  %410 = vmatpush1.bf16.msra.mxu0 %v265
  %411 = vmatprep.subr.bf16.mxu0 %v269
  %412 = vmatpush1.bf16.msra.mxu0 %v268
  %413 = vmatprep.subr.bf16.mxu0 %v272
  %414 = vmatpush1.bf16.msra.mxu0 %v271
  %415 = vmatprep.subr.bf16.mxu0 %v275
  %416 = vmatpush1.bf16.msra.mxu0 %v274
  %417 = vmatprep.subr.bf16.mxu0 %v278
  %418 = vmatpush1.bf16.msra.mxu0 %v277
  %419 = vmatprep.subr.bf16.mxu0 %v281
  %420 = vmatpush1.bf16.msra.mxu0 %v280
  %421 = vmatprep.subr.bf16.mxu0 %v284
  %422 = vmatpush1.bf16.msra.mxu0 %v283
  %423 = vmatprep.subr.bf16.mxu0 0
  %424 = vmatpush1.bf16.msra.mxu0 0
  %425 = vmatprep.subr.bf16.mxu0 0
  %426 = vmatpush1.bf16.msra.mxu0 0
  %427 = vmatprep.subr.bf16.mxu0 0
  %428 = vmatpush1.bf16.msra.mxu0 0
  %429 = vmatprep.subr.bf16.mxu0 0
  %430 = vmatpush1.bf16.msra.mxu0 0
  %431 = vmatprep.subr.bf16.mxu0 0
  %432 = vmatpush1.bf16.msra.mxu0 0
  %433 = vmatprep.subr.bf16.mxu0 0
  %434 = vmatpush1.bf16.msra.mxu0 0
  %435 = vmatprep.subr.bf16.mxu0 0
  %436 = vmatpush1.bf16.msra.mxu0 0
  %437 = vmatprep.subr.bf16.mxu0 0
  %438 = vmatpush1.bf16.msra.mxu0 0
  %439 = vmatprep.mubr.bf16.mxu0 0
  %440 = vmatmul.mubr.bf16.gmra.mrb[0].mxu0 %v406
  %v441 = vpop.f32.mrb[0].mxu0
  %v442 = vadd.f32 0.0, %v441
  %v443 = vpop.f32.mrb[0].mxu0
  %v444 = vadd.f32 0.0, %v443
  %v445 = vpop.f32.mrb[0].mxu0
  %v446 = vpop.f32.mrb[0].mxu0
  %447 = vdwg.mxu0
  %448 = vmatprep.subr.bf16.mxu0 0
  %449 = vmatpush1.bf16.msra.mxu0 %v264
  %450 = vmatprep.subr.bf16.mxu0 0
  %451 = vmatpush1.bf16.msra.mxu0 %v267
  %452 = vmatprep.subr.bf16.mxu0 0
  %453 = vmatpush1.bf16.msra.mxu0 %v270
  %454 = vmatprep.subr.bf16.mxu0 0
  %455 = vmatpush1.bf16.msra.mxu0 %v273
  %456 = vmatprep.subr.bf16.mxu0 0
  %457 = vmatpush1.bf16.msra.mxu0 %v276
  %458 = vmatprep.subr.bf16.mxu0 0
  %459 = vmatpush1.bf16.msra.mxu0 %v279
  %460 = vmatprep.subr.bf16.mxu0 0
  %461 = vmatpush1.bf16.msra.mxu0 %v282
  %462 = vmatprep.subr.bf16.mxu0 0
  %463 = vmatpush1.bf16.msra.mxu0 %v285
  %464 = vmatprep.subr.bf16.mxu0 0
  %465 = vmatpush1.bf16.msra.mxu0 0
  %466 = vmatprep.subr.bf16.mxu0 0
  %467 = vmatpush1.bf16.msra.mxu0 0
  %468 = vmatprep.subr.bf16.mxu0 0
  %469 = vmatpush1.bf16.msra.mxu0 0
  %470 = vmatprep.subr.bf16.mxu0 0
  %471 = vmatpush1.bf16.msra.mxu0 0
  %472 = vmatprep.subr.bf16.mxu0 0
  %473 = vmatpush1.bf16.msra.mxu0 0
  %474 = vmatprep.subr.bf16.mxu0 0
  %475 = vmatpush1.bf16.msra.mxu0 0
  %476 = vmatprep.subr.bf16.mxu0 0
  %477 = vmatpush1.bf16.msra.mxu0 0
  %478 = vmatprep.subr.bf16.mxu0 0
  %479 = vmatpush1.bf16.msra.mxu0 0
  %480 = vmatprep.mubr.bf16.mxu0 0
  %481 = vmatmul.mubr.bf16.gmra.mrb[0].mxu0 %v406
  %v482 = vpop.f32.mrb[0].mxu0
  %v483 = vadd.f32 0.0, %v482
  %v484 = vpop.f32.mrb[0].mxu0
  %v485 = vpop.f32.mrb[0].mxu0
  %v486 = vpop.f32.mrb[0].mxu0
  %487 = vdwg.mxu0
  %v488 = vadd.f32 %v403, %v442
  %v489 = vxor.u32 %v488, 2147483648
  %v490 = vmul.f32 %v489, 1.442695
  %v491 = vpow.pop %v490
  %v492 = vadd.f32 %v491, 1.0
  %v493 = vrcp.pop %v492
  %v494 = vmul.f32 1.0, %v493
  %v495 = vadd.f32 %v404, %v444
  %v496 = vxor.u32 %v495, 2147483648
  %v497 = vmul.f32 %v496, 1.442695
  %v498 = vpow.pop %v497
  %v499 = vadd.f32 %v498, 1.0
  %v500 = vrcp.pop %v499
  %v501 = vmul.f32 1.0, %v500
  %v502 = vadd.f32 %v483, %v391
  %v503 = vmul.f32 %v494, %v502
  %v504 = vadd.f32 %v405, %v503
  %v505 = vtanh.pop %v504
  %v506 = vsub.f32 1.0, %v501
  %v507 = vmul.f32 %v506, %v505
  %v508 = vmul.f32 %v501, %v400
  %v509 = vadd.f32 %v507, %v508
  %s510 = scalar_lea.vmem %s3, 8
  %511 = vst [vmem:[%s510] sm:$0xff] %v509
  %s512 = scalar_lea.vmem %s0, 48
  %v513 = vld [vmem:[%s512] sm:$0xff]
  %v514 = vld [vmem:[%s512 + $0x8] sm:$0xff]
  %v515 = vld [vmem:[%s512 + $0x10] sm:$0xff]
  %v516 = vpack.c.bf16 %v509, %v509
  %517 = vmatprep.subr.bf16.mxu0 %v263
  %518 = vmatpush1.bf16.msra.mxu0 %v262
  %519 = vmatprep.subr.bf16.mxu0 %v266
  %520 = vmatpush1.bf16.msra.mxu0 %v265
  %521 = vmatprep.subr.bf16.mxu0 %v269
  %522 = vmatpush1.bf16.msra.mxu0 %v268
  %523 = vmatprep.subr.bf16.mxu0 %v272
  %524 = vmatpush1.bf16.msra.mxu0 %v271
  %525 = vmatprep.subr.bf16.mxu0 %v275
  %526 = vmatpush1.bf16.msra.mxu0 %v274
  %527 = vmatprep.subr.bf16.mxu0 %v278
  %528 = vmatpush1.bf16.msra.mxu0 %v277
  %529 = vmatprep.subr.bf16.mxu0 %v281
  %530 = vmatpush1.bf16.msra.mxu0 %v280
  %531 = vmatprep.subr.bf16.mxu0 %v284
  %532 = vmatpush1.bf16.msra.mxu0 %v283
  %533 = vmatprep.subr.bf16.mxu0 0
  %534 = vmatpush1.bf16.msra.mxu0 0
  %535 = vmatprep.subr.bf16.mxu0 0
  %536 = vmatpush1.bf16.msra.mxu0 0
  %537 = vmatprep.subr.bf16.mxu0 0
  %538 = vmatpush1.bf16.msra.mxu0 0
  %539 = vmatprep.subr.bf16.mxu0 0
  %540 = vmatpush1.bf16.msra.mxu0 0
  %541 = vmatprep.subr.bf16.mxu0 0
  %542 = vmatpush1.bf16.msra.mxu0 0
  %543 = vmatprep.subr.bf16.mxu0 0
  %544 = vmatpush1.bf16.msra.mxu0 0
  %545 = vmatprep.subr.bf16.mxu0 0
  %546 = vmatpush1.bf16.msra.mxu0 0
  %547 = vmatprep.subr.bf16.mxu0 0
  %548 = vmatpush1.bf16.msra.mxu0 0
  %549 = vmatprep.mubr.bf16.mxu0 0
  %550 = vmatmul.mubr.bf16.gmra.mrb[0].mxu0 %v516
  %v551 = vpop.f32.mrb[0].mxu0
  %v552 = vadd.f32 0.0, %v551
  %v553 = vpop.f32.mrb[0].mxu0
  %v554 = vadd.f32 0.0, %v553
  %v555 = vpop.f32.mrb[0].mxu0
  %v556 = vpop.f32.mrb[0].mxu0
  %557 = vdwg.mxu0
  %558 = vmatprep.subr.bf16.mxu0 0
  %559 = vmatpush1.bf16.msra.mxu0 %v264
  %560 = vmatprep.subr.bf16.mxu0 0
  %561 = vmatpush1.bf16.msra.mxu0 %v267
  %562 = vmatprep.subr.bf16.mxu0 0
  %563 = vmatpush1.bf16.msra.mxu0 %v270
  %564 = vmatprep.subr.bf16.mxu0 0
  %565 = vmatpush1.bf16.msra.mxu0 %v273
  %566 = vmatprep.subr.bf16.mxu0 0
  %567 = vmatpush1.bf16.msra.mxu0 %v276
  %568 = vmatprep.subr.bf16.mxu0 0
  %569 = vmatpush1.bf16.msra.mxu0 %v279
  %570 = vmatprep.subr.bf16.mxu0 0
  %571 = vmatpush1.bf16.msra.mxu0 %v282
  %572 = vmatprep.subr.bf16.mxu0 0
  %573 = vmatpush1.bf16.msra.mxu0 %v285
  %574 = vmatprep.subr.bf16.mxu0 0
  %575 = vmatpush1.bf16.msra.mxu0 0
  %576 = vmatprep.subr.bf16.mxu0 0
  %577 = vmatpush1.bf16.msra.mxu0 0
  %578 = vmatprep.subr.bf16.mxu0 0
  %579 = vmatpush1.bf16.msra.mxu0 0
  %580 = vmatprep.subr.bf16.mxu0 0
  %581 = vmatpush1.bf16.msra.mxu0 0
  %582 = vmatprep.subr.bf16.mxu0 0
  %583 = vmatpush1.bf16.msra.mxu0 0
  %584 = vmatprep.subr.bf16.mxu0 0
  %585 = vmatpush1.bf16.msra.mxu0 0
  %586 = vmatprep.subr.bf16.mxu0 0
  %587 = vmatpush1.bf16.msra.mxu0 0
  %588 = vmatprep.subr.bf16.mxu0 0
  %589 = vmatpush1.bf16.msra.mxu0 0
  %590 = vmatprep.mubr.bf16.mxu0 0
  %591 = vmatmul.mubr.bf16.gmra.mrb[0].mxu0 %v516
  %v592 = vpop.f32.mrb[0].mxu0
  %v593 = vadd.f32 0.0, %v592
  %v594 = vpop.f32.mrb[0].mxu0
  %v595 = vpop.f32.mrb[0].mxu0
  %v596 = vpop.f32.mrb[0].mxu0
  %597 = vdwg.mxu0
  %v598 = vadd.f32 %v513, %v552
  %v599 = vxor.u32 %v598, 2147483648
  %v600 = vmul.f32 %v599, 1.442695
  %v601 = vpow.pop %v600
  %v602 = vadd.f32 %v601, 1.0
  %v603 = vrcp.pop %v602
  %v604 = vmul.f32 1.0, %v603
  %v605 = vadd.f32 %v514, %v554
  %v606 = vxor.u32 %v605, 2147483648
  %v607 = vmul.f32 %v606, 1.442695
  %v608 = vpow.pop %v607
  %v609 = vadd.f32 %v608, 1.0
  %v610 = vrcp.pop %v609
  %v611 = vmul.f32 1.0, %v610
  %v612 = vadd.f32 %v593, %v391
  %v613 = vmul.f32 %v604, %v612
  %v614 = vadd.f32 %v515, %v613
  %v615 = vtanh.pop %v614
  %v616 = vsub.f32 1.0, %v611
  %v617 = vmul.f32 %v616, %v615
  %v618 = vmul.f32 %v611, %v509
  %v619 = vadd.f32 %v617, %v618
  %s620 = scalar_lea.vmem %s3, 16
  %621 = vst [vmem:[%s620] sm:$0xff] %v619
  %s622 = scalar_lea.vmem %s0, 72
  %v623 = vld [vmem:[%s622] sm:$0xff]
  %v624 = vld [vmem:[%s622 + $0x8] sm:$0xff]
  %v625 = vld [vmem:[%s622 + $0x10] sm:$0xff]
  %v626 = vpack.c.bf16 %v619, %v619
  %627 = vmatprep.subr.bf16.mxu0 %v263
  %628 = vmatpush1.bf16.msra.mxu0 %v262
  %629 = vmatprep.subr.bf16.mxu0 %v266
  %630 = vmatpush1.bf16.msra.mxu0 %v265
  %631 = vmatprep.subr.bf16.mxu0 %v269
  %632 = vmatpush1.bf16.msra.mxu0 %v268
  %633 = vmatprep.subr.bf16.mxu0 %v272
  %634 = vmatpush1.bf16.msra.mxu0 %v271
  %635 = vmatprep.subr.bf16.mxu0 %v275
  %636 = vmatpush1.bf16.msra.mxu0 %v274
  %637 = vmatprep.subr.bf16.mxu0 %v278
  %638 = vmatpush1.bf16.msra.mxu0 %v277
  %639 = vmatprep.subr.bf16.mxu0 %v281
  %640 = vmatpush1.bf16.msra.mxu0 %v280
  %641 = vmatprep.subr.bf16.mxu0 %v284
  %642 = vmatpush1.bf16.msra.mxu0 %v283
  %643 = vmatprep.subr.bf16.mxu0 0
  %644 = vmatpush1.bf16.msra.mxu0 0
  %645 = vmatprep.subr.bf16.mxu0 0
  %646 = vmatpush1.bf16.msra.mxu0 0
  %647 = vmatprep.subr.bf16.mxu0 0
  %648 = vmatpush1.bf16.msra.mxu0 0
  %649 = vmatprep.subr.bf16.mxu0 0
  %650 = vmatpush1.bf16.msra.mxu0 0
  %651 = vmatprep.subr.bf16.mxu0 0
  %652 = vmatpush1.bf16.msra.mxu0 0
  %653 = vmatprep.subr.bf16.mxu0 0
  %654 = vmatpush1.bf16.msra.mxu0 0
  %655 = vmatprep.subr.bf16.mxu0 0
  %656 = vmatpush1.bf16.msra.mxu0 0
  %657 = vmatprep.subr.bf16.mxu0 0
  %658 = vmatpush1.bf16.msra.mxu0 0
  %659 = vmatprep.mubr.bf16.mxu0 0
  %660 = vmatmul.mubr.bf16.gmra.mrb[0].mxu0 %v626
  %v661 = vpop.f32.mrb[0].mxu0
  %v662 = vadd.f32 0.0, %v661
  %v663 = vpop.f32.mrb[0].mxu0
  %v664 = vadd.f32 0.0, %v663
  %v665 = vpop.f32.mrb[0].mxu0
  %v666 = vpop.f32.mrb[0].mxu0
  %667 = vdwg.mxu0
  %668 = vmatprep.subr.bf16.mxu0 0
  %669 = vmatpush1.bf16.msra.mxu0 %v264
  %670 = vmatprep.subr.bf16.mxu0 0
  %671 = vmatpush1.bf16.msra.mxu0 %v267
  %672 = vmatprep.subr.bf16.mxu0 0
  %673 = vmatpush1.bf16.msra.mxu0 %v270
  %674 = vmatprep.subr.bf16.mxu0 0
  %675 = vmatpush1.bf16.msra.mxu0 %v273
  %676 = vmatprep.subr.bf16.mxu0 0
  %677 = vmatpush1.bf16.msra.mxu0 %v276
  %678 = vmatprep.subr.bf16.mxu0 0
  %679 = vmatpush1.bf16.msra.mxu0 %v279
  %680 = vmatprep.subr.bf16.mxu0 0
  %681 = vmatpush1.bf16.msra.mxu0 %v282
  %682 = vmatprep.subr.bf16.mxu0 0
  %683 = vmatpush1.bf16.msra.mxu0 %v285
  %684 = vmatprep.subr.bf16.mxu0 0
  %685 = vmatpush1.bf16.msra.mxu0 0
  %686 = vmatprep.subr.bf16.mxu0 0
  %687 = vmatpush1.bf16.msra.mxu0 0
  %688 = vmatprep.subr.bf16.mxu0 0
  %689 = vmatpush1.bf16.msra.mxu0 0
  %690 = vmatprep.subr.bf16.mxu0 0
  %691 = vmatpush1.bf16.msra.mxu0 0
  %692 = vmatprep.subr.bf16.mxu0 0
  %693 = vmatpush1.bf16.msra.mxu0 0
  %694 = vmatprep.subr.bf16.mxu0 0
  %695 = vmatpush1.bf16.msra.mxu0 0
  %696 = vmatprep.subr.bf16.mxu0 0
  %697 = vmatpush1.bf16.msra.mxu0 0
  %698 = vmatprep.subr.bf16.mxu0 0
  %699 = vmatpush1.bf16.msra.mxu0 0
  %700 = vmatprep.mubr.bf16.mxu0 0
  %701 = vmatmul.mubr.bf16.gmra.mrb[0].mxu0 %v626
  %v702 = vpop.f32.mrb[0].mxu0
  %v703 = vadd.f32 0.0, %v702
  %v704 = vpop.f32.mrb[0].mxu0
  %v705 = vpop.f32.mrb[0].mxu0
  %v706 = vpop.f32.mrb[0].mxu0
  %707 = vdwg.mxu0
  %v708 = vadd.f32 %v623, %v662
  %v709 = vxor.u32 %v708, 2147483648
  %v710 = vmul.f32 %v709, 1.442695
  %v711 = vpow.pop %v710
  %v712 = vadd.f32 %v711, 1.0
  %v713 = vrcp.pop %v712
  %v714 = vmul.f32 1.0, %v713
  %v715 = vadd.f32 %v624, %v664
  %v716 = vxor.u32 %v715, 2147483648
  %v717 = vmul.f32 %v716, 1.442695
  %v718 = vpow.pop %v717
  %v719 = vadd.f32 %v718, 1.0
  %v720 = vrcp.pop %v719
  %v721 = vmul.f32 1.0, %v720
  %v722 = vadd.f32 %v703, %v391
  %v723 = vmul.f32 %v714, %v722
  %v724 = vadd.f32 %v625, %v723
  %v725 = vtanh.pop %v724
  %v726 = vsub.f32 1.0, %v721
  %v727 = vmul.f32 %v726, %v725
  %v728 = vmul.f32 %v721, %v619
  %v729 = vadd.f32 %v727, %v728
  %s730 = scalar_lea.vmem %s3, 24
  %731 = vst [vmem:[%s730] sm:$0xff] %v729
  %s732 = scalar_lea.vmem %s0, 96
  %v733 = vld [vmem:[%s732] sm:$0xff]
  %v734 = vld [vmem:[%s732 + $0x8] sm:$0xff]
  %v735 = vld [vmem:[%s732 + $0x10] sm:$0xff]
  %v736 = vpack.c.bf16 %v729, %v729
  %737 = vmatprep.subr.bf16.mxu0 %v263
  %738 = vmatpush1.bf16.msra.mxu0 %v262
  %739 = vmatprep.subr.bf16.mxu0 %v266
  %740 = vmatpush1.bf16.msra.mxu0 %v265
  %741 = vmatprep.subr.bf16.mxu0 %v269
  %742 = vmatpush1.bf16.msra.mxu0 %v268
  %743 = vmatprep.subr.bf16.mxu0 %v272
  %744 = vmatpush1.bf16.msra.mxu0 %v271
  %745 = vmatprep.subr.bf16.mxu0 %v275
  %746 = vmatpush1.bf16.msra.mxu0 %v274
  %747 = vmatprep.subr.bf16.mxu0 %v278
  %748 = vmatpush1.bf16.msra.mxu0 %v277
  %749 = vmatprep.subr.bf16.mxu0 %v281
  %750 = vmatpush1.bf16.msra.mxu0 %v280
  %751 = vmatprep.subr.bf16.mxu0 %v284
  %752 = vmatpush1.bf16.msra.mxu0 %v283
  %753 = vmatprep.subr.bf16.mxu0 0
  %754 = vmatpush1.bf16.msra.mxu0 0
  %755 = vmatprep.subr.bf16.mxu0 0
  %756 = vmatpush1.bf16.msra.mxu0 0
  %757 = vmatprep.subr.bf16.mxu0 0
  %758 = vmatpush1.bf16.msra.mxu0 0
  %759 = vmatprep.subr.bf16.mxu0 0
  %760 = vmatpush1.bf16.msra.mxu0 0
  %761 = vmatprep.subr.bf16.mxu0 0
  %762 = vmatpush1.bf16.msra.mxu0 0
  %763 = vmatprep.subr.bf16.mxu0 0
  %764 = vmatpush1.bf16.msra.mxu0 0
  %765 = vmatprep.subr.bf16.mxu0 0
  %766 = vmatpush1.bf16.msra.mxu0 0
  %767 = vmatprep.subr.bf16.mxu0 0
  %768 = vmatpush1.bf16.msra.mxu0 0
  %769 = vmatprep.mubr.bf16.mxu0 0
  %770 = vmatmul.mubr.bf16.gmra.mrb[0].mxu0 %v736
  %v771 = vpop.f32.mrb[0].mxu0
  %v772 = vadd.f32 0.0, %v771
  %v773 = vpop.f32.mrb[0].mxu0
  %v774 = vadd.f32 0.0, %v773
  %v775 = vpop.f32.mrb[0].mxu0
  %v776 = vpop.f32.mrb[0].mxu0
  %777 = vdwg.mxu0
  %778 = vmatprep.subr.bf16.mxu0 0
  %779 = vmatpush1.bf16.msra.mxu0 %v264
  %780 = vmatprep.subr.bf16.mxu0 0
  %781 = vmatpush1.bf16.msra.mxu0 %v267
  %782 = vmatprep.subr.bf16.mxu0 0
  %783 = vmatpush1.bf16.msra.mxu0 %v270
  %784 = vmatprep.subr.bf16.mxu0 0
  %785 = vmatpush1.bf16.msra.mxu0 %v273
  %786 = vmatprep.subr.bf16.mxu0 0
  %787 = vmatpush1.bf16.msra.mxu0 %v276
  %788 = vmatprep.subr.bf16.mxu0 0
  %789 = vmatpush1.bf16.msra.mxu0 %v279
  %790 = vmatprep.subr.bf16.mxu0 0
  %791 = vmatpush1.bf16.msra.mxu0 %v282
  %792 = vmatprep.subr.bf16.mxu0 0
  %793 = vmatpush1.bf16.msra.mxu0 %v285
  %794 = vmatprep.subr.bf16.mxu0 0
  %795 = vmatpush1.bf16.msra.mxu0 0
  %796 = vmatprep.subr.bf16.mxu0 0
  %797 = vmatpush1.bf16.msra.mxu0 0
  %798 = vmatprep.subr.bf16.mxu0 0
  %799 = vmatpush1.bf16.msra.mxu0 0
  %800 = vmatprep.subr.bf16.mxu0 0
  %801 = vmatpush1.bf16.msra.mxu0 0
  %802 = vmatprep.subr.bf16.mxu0 0
  %803 = vmatpush1.bf16.msra.mxu0 0
  %804 = vmatprep.subr.bf16.mxu0 0
  %805 = vmatpush1.bf16.msra.mxu0 0
  %806 = vmatprep.subr.bf16.mxu0 0
  %807 = vmatpush1.bf16.msra.mxu0 0
  %808 = vmatprep.subr.bf16.mxu0 0
  %809 = vmatpush1.bf16.msra.mxu0 0
  %810 = vmatprep.mubr.bf16.mxu0 0
  %811 = vmatmul.mubr.bf16.gmra.mrb[0].mxu0 %v736
  %v812 = vpop.f32.mrb[0].mxu0
  %v813 = vadd.f32 0.0, %v812
  %v814 = vpop.f32.mrb[0].mxu0
  %v815 = vpop.f32.mrb[0].mxu0
  %v816 = vpop.f32.mrb[0].mxu0
  %817 = vdwg.mxu0
  %v818 = vadd.f32 %v733, %v772
  %v819 = vxor.u32 %v818, 2147483648
  %v820 = vmul.f32 %v819, 1.442695
  %v821 = vpow.pop %v820
  %v822 = vadd.f32 %v821, 1.0
  %v823 = vrcp.pop %v822
  %v824 = vmul.f32 1.0, %v823
  %v825 = vadd.f32 %v734, %v774
  %v826 = vxor.u32 %v825, 2147483648
  %v827 = vmul.f32 %v826, 1.442695
  %v828 = vpow.pop %v827
  %v829 = vadd.f32 %v828, 1.0
  %v830 = vrcp.pop %v829
  %v831 = vmul.f32 1.0, %v830
  %v832 = vadd.f32 %v813, %v391
  %v833 = vmul.f32 %v824, %v832
  %v834 = vadd.f32 %v735, %v833
  %v835 = vtanh.pop %v834
  %v836 = vsub.f32 1.0, %v831
  %v837 = vmul.f32 %v836, %v835
  %v838 = vmul.f32 %v831, %v729
  %v839 = vadd.f32 %v837, %v838
  %s840 = scalar_lea.vmem %s3, 32
  %841 = vst [vmem:[%s840] sm:$0xff] %v839
  %s842 = scalar_lea.vmem %s0, 120
  %v843 = vld [vmem:[%s842] sm:$0xff]
  %v844 = vld [vmem:[%s842 + $0x8] sm:$0xff]
  %v845 = vld [vmem:[%s842 + $0x10] sm:$0xff]
  %v846 = vpack.c.bf16 %v839, %v839
  %847 = vmatprep.subr.bf16.mxu0 %v263
  %848 = vmatpush1.bf16.msra.mxu0 %v262
  %849 = vmatprep.subr.bf16.mxu0 %v266
  %850 = vmatpush1.bf16.msra.mxu0 %v265
  %851 = vmatprep.subr.bf16.mxu0 %v269
  %852 = vmatpush1.bf16.msra.mxu0 %v268
  %853 = vmatprep.subr.bf16.mxu0 %v272
  %854 = vmatpush1.bf16.msra.mxu0 %v271
  %855 = vmatprep.subr.bf16.mxu0 %v275
  %856 = vmatpush1.bf16.msra.mxu0 %v274
  %857 = vmatprep.subr.bf16.mxu0 %v278
  %858 = vmatpush1.bf16.msra.mxu0 %v277
  %859 = vmatprep.subr.bf16.mxu0 %v281
  %860 = vmatpush1.bf16.msra.mxu0 %v280
  %861 = vmatprep.subr.bf16.mxu0 %v284
  %862 = vmatpush1.bf16.msra.mxu0 %v283
  %863 = vmatprep.subr.bf16.mxu0 0
  %864 = vmatpush1.bf16.msra.mxu0 0
  %865 = vmatprep.subr.bf16.mxu0 0
  %866 = vmatpush1.bf16.msra.mxu0 0
  %867 = vmatprep.subr.bf16.mxu0 0
  %868 = vmatpush1.bf16.msra.mxu0 0
  %869 = vmatprep.subr.bf16.mxu0 0
  %870 = vmatpush1.bf16.msra.mxu0 0
  %871 = vmatprep.subr.bf16.mxu0 0
  %872 = vmatpush1.bf16.msra.mxu0 0
  %873 = vmatprep.subr.bf16.mxu0 0
  %874 = vmatpush1.bf16.msra.mxu0 0
  %875 = vmatprep.subr.bf16.mxu0 0
  %876 = vmatpush1.bf16.msra.mxu0 0
  %877 = vmatprep.subr.bf16.mxu0 0
  %878 = vmatpush1.bf16.msra.mxu0 0
  %879 = vmatprep.mubr.bf16.mxu0 0
  %880 = vmatmul.mubr.bf16.gmra.mrb[0].mxu0 %v846
  %v881 = vpop.f32.mrb[0].mxu0
  %v882 = vadd.f32 0.0, %v881
  %v883 = vpop.f32.mrb[0].mxu0
  %v884 = vadd.f32 0.0, %v883
  %v885 = vpop.f32.mrb[0].mxu0
  %v886 = vpop.f32.mrb[0].mxu0
  %887 = vdwg.mxu0
  %888 = vmatprep.subr.bf16.mxu0 0
  %889 = vmatpush1.bf16.msra.mxu0 %v264
  %890 = vmatprep.subr.bf16.mxu0 0
  %891 = vmatpush1.bf16.msra.mxu0 %v267
  %892 = vmatprep.subr.bf16.mxu0 0
  %893 = vmatpush1.bf16.msra.mxu0 %v270
  %894 = vmatprep.subr.bf16.mxu0 0
  %895 = vmatpush1.bf16.msra.mxu0 %v273
  %896 = vmatprep.subr.bf16.mxu0 0
  %897 = vmatpush1.bf16.msra.mxu0 %v276
  %898 = vmatprep.subr.bf16.mxu0 0
  %899 = vmatpush1.bf16.msra.mxu0 %v279
  %900 = vmatprep.subr.bf16.mxu0 0
  %901 = vmatpush1.bf16.msra.mxu0 %v282
  %902 = vmatprep.subr.bf16.mxu0 0
  %903 = vmatpush1.bf16.msra.mxu0 %v285
  %904 = vmatprep.subr.bf16.mxu0 0
  %905 = vmatpush1.bf16.msra.mxu0 0
  %906 = vmatprep.subr.bf16.mxu0 0
  %907 = vmatpush1.bf16.msra.mxu0 0
  %908 = vmatprep.subr.bf16.mxu0 0
  %909 = vmatpush1.bf16.msra.mxu0 0
  %910 = vmatprep.subr.bf16.mxu0 0
  %911 = vmatpush1.bf16.msra.mxu0 0
  %912 = vmatprep.subr.bf16.mxu0 0
  %913 = vmatpush1.bf16.msra.mxu0 0
  %914 = vmatprep.subr.bf16.mxu0 0
  %915 = vmatpush1.bf16.msra.mxu0 0
  %916 = vmatprep.subr.bf16.mxu0 0
  %917 = vmatpush1.bf16.msra.mxu0 0
  %918 = vmatprep.subr.bf16.mxu0 0
  %919 = vmatpush1.bf16.msra.mxu0 0
  %920 = vmatprep.mubr.bf16.mxu0 0
  %921 = vmatmul.mubr.bf16.gmra.mrb[0].mxu0 %v846
  %v922 = vpop.f32.mrb[0].mxu0
  %v923 = vadd.f32 0.0, %v922
  %v924 = vpop.f32.mrb[0].mxu0
  %v925 = vpop.f32.mrb[0].mxu0
  %v926 = vpop.f32.mrb[0].mxu0
  %927 = vdwg.mxu0
  %v928 = vadd.f32 %v843, %v882
  %v929 = vxor.u32 %v928, 2147483648
  %v930 = vmul.f32 %v929, 1.442695
  %v931 = vpow.pop %v930
  %v932 = vadd.f32 %v931, 1.0
  %v933 = vrcp.pop %v932
  %v934 = vmul.f32 1.0, %v933
  %v935 = vadd.f32 %v844, %v884
  %v936 = vxor.u32 %v935, 2147483648
  %v937 = vmul.f32 %v936, 1.442695
  %v938 = vpow.pop %v937
  %v939 = vadd.f32 %v938, 1.0
  %v940 = vrcp.pop %v939
  %v941 = vmul.f32 1.0, %v940
  %v942 = vadd.f32 %v923, %v391
  %v943 = vmul.f32 %v934, %v942
  %v944 = vadd.f32 %v845, %v943
  %v945 = vtanh.pop %v944
  %v946 = vsub.f32 1.0, %v941
  %v947 = vmul.f32 %v946, %v945
  %v948 = vmul.f32 %v941, %v839
  %v949 = vadd.f32 %v947, %v948
  %s950 = scalar_lea.vmem %s3, 40
  %951 = vst [vmem:[%s950] sm:$0xff] %v949
  %s952 = scalar_lea.vmem %s0, 144
  %v953 = vld [vmem:[%s952] sm:$0xff]
  %v954 = vld [vmem:[%s952 + $0x8] sm:$0xff]
  %v955 = vld [vmem:[%s952 + $0x10] sm:$0xff]
  %v956 = vpack.c.bf16 %v949, %v949
  %957 = vmatprep.subr.bf16.mxu0 %v263
  %958 = vmatpush1.bf16.msra.mxu0 %v262
  %959 = vmatprep.subr.bf16.mxu0 %v266
  %960 = vmatpush1.bf16.msra.mxu0 %v265
  %961 = vmatprep.subr.bf16.mxu0 %v269
  %962 = vmatpush1.bf16.msra.mxu0 %v268
  %963 = vmatprep.subr.bf16.mxu0 %v272
  %964 = vmatpush1.bf16.msra.mxu0 %v271
  %965 = vmatprep.subr.bf16.mxu0 %v275
  %966 = vmatpush1.bf16.msra.mxu0 %v274
  %967 = vmatprep.subr.bf16.mxu0 %v278
  %968 = vmatpush1.bf16.msra.mxu0 %v277
  %969 = vmatprep.subr.bf16.mxu0 %v281
  %970 = vmatpush1.bf16.msra.mxu0 %v280
  %971 = vmatprep.subr.bf16.mxu0 %v284
  %972 = vmatpush1.bf16.msra.mxu0 %v283
  %973 = vmatprep.subr.bf16.mxu0 0
  %974 = vmatpush1.bf16.msra.mxu0 0
  %975 = vmatprep.subr.bf16.mxu0 0
  %976 = vmatpush1.bf16.msra.mxu0 0
  %977 = vmatprep.subr.bf16.mxu0 0
  %978 = vmatpush1.bf16.msra.mxu0 0
  %979 = vmatprep.subr.bf16.mxu0 0
  %980 = vmatpush1.bf16.msra.mxu0 0
  %981 = vmatprep.subr.bf16.mxu0 0
  %982 = vmatpush1.bf16.msra.mxu0 0
  %983 = vmatprep.subr.bf16.mxu0 0
  %984 = vmatpush1.bf16.msra.mxu0 0
  %985 = vmatprep.subr.bf16.mxu0 0
  %986 = vmatpush1.bf16.msra.mxu0 0
  %987 = vmatprep.subr.bf16.mxu0 0
  %988 = vmatpush1.bf16.msra.mxu0 0
  %989 = vmatprep.mubr.bf16.mxu0 0
  %990 = vmatmul.mubr.bf16.gmra.mrb[0].mxu0 %v956
  %v991 = vpop.f32.mrb[0].mxu0
  %v992 = vadd.f32 0.0, %v991
  %v993 = vpop.f32.mrb[0].mxu0
  %v994 = vadd.f32 0.0, %v993
  %v995 = vpop.f32.mrb[0].mxu0
  %v996 = vpop.f32.mrb[0].mxu0
  %997 = vdwg.mxu0
  %998 = vmatprep.subr.bf16.mxu0 0
  %999 = vmatpush1.bf16.msra.mxu0 %v264
  %1000 = vmatprep.subr.bf16.mxu0 0
  %1001 = vmatpush1.bf16.msra.mxu0 %v267
  %1002 = vmatprep.subr.bf16.mxu0 0
  %1003 = vmatpush1.bf16.msra.mxu0 %v270
  %1004 = vmatprep.subr.bf16.mxu0 0
  %1005 = vmatpush1.bf16.msra.mxu0 %v273
  %1006 = vmatprep.subr.bf16.mxu0 0
  %1007 = vmatpush1.bf16.msra.mxu0 %v276
  %1008 = vmatprep.subr.bf16.mxu0 0
  %1009 = vmatpush1.bf16.msra.mxu0 %v279
  %1010 = vmatprep.subr.bf16.mxu0 0
  %1011 = vmatpush1.bf16.msra.mxu0 %v282
  %1012 = vmatprep.subr.bf16.mxu0 0
  %1013 = vmatpush1.bf16.msra.mxu0 %v285
  %1014 = vmatprep.subr.bf16.mxu0 0
  %1015 = vmatpush1.bf16.msra.mxu0 0
  %1016 = vmatprep.subr.bf16.mxu0 0
  %1017 = vmatpush1.bf16.msra.mxu0 0
  %1018 = vmatprep.subr.bf16.mxu0 0
  %1019 = vmatpush1.bf16.msra.mxu0 0
  %1020 = vmatprep.subr.bf16.mxu0 0
  %1021 = vmatpush1.bf16.msra.mxu0 0
  %1022 = vmatprep.subr.bf16.mxu0 0
  %1023 = vmatpush1.bf16.msra.mxu0 0
  %1024 = vmatprep.subr.bf16.mxu0 0
  %1025 = vmatpush1.bf16.msra.mxu0 0
  %1026 = vmatprep.subr.bf16.mxu0 0
  %1027 = vmatpush1.bf16.msra.mxu0 0
  %1028 = vmatprep.subr.bf16.mxu0 0
  %1029 = vmatpush1.bf16.msra.mxu0 0
  %1030 = vmatprep.mubr.bf16.mxu0 0
  %1031 = vmatmul.mubr.bf16.gmra.mrb[0].mxu0 %v956
  %v1032 = vpop.f32.mrb[0].mxu0
  %v1033 = vadd.f32 0.0, %v1032
  %v1034 = vpop.f32.mrb[0].mxu0
  %v1035 = vpop.f32.mrb[0].mxu0
  %v1036 = vpop.f32.mrb[0].mxu0
  %1037 = vdwg.mxu0
  %v1038 = vadd.f32 %v953, %v992
  %v1039 = vxor.u32 %v1038, 2147483648
  %v1040 = vmul.f32 %v1039, 1.442695
  %v1041 = vpow.pop %v1040
  %v1042 = vadd.f32 %v1041, 1.0
  %v1043 = vrcp.pop %v1042
  %v1044 = vmul.f32 1.0, %v1043
  %v1045 = vadd.f32 %v954, %v994
  %v1046 = vxor.u32 %v1045, 2147483648
  %v1047 = vmul.f32 %v1046, 1.442695
  %v1048 = vpow.pop %v1047
  %v1049 = vadd.f32 %v1048, 1.0
  %v1050 = vrcp.pop %v1049
  %v1051 = vmul.f32 1.0, %v1050
  %v1052 = vadd.f32 %v1033, %v391
  %v1053 = vmul.f32 %v1044, %v1052
  %v1054 = vadd.f32 %v955, %v1053
  %v1055 = vtanh.pop %v1054
  %v1056 = vsub.f32 1.0, %v1051
  %v1057 = vmul.f32 %v1056, %v1055
  %v1058 = vmul.f32 %v1051, %v949
  %v1059 = vadd.f32 %v1057, %v1058
  %s1060 = scalar_lea.vmem %s3, 48
  %1061 = vst [vmem:[%s1060] sm:$0xff] %v1059
  %s1062 = scalar_lea.vmem %s0, 168
  %v1063 = vld [vmem:[%s1062] sm:$0xff]
  %v1064 = vld [vmem:[%s1062 + $0x8] sm:$0xff]
  %v1065 = vld [vmem:[%s1062 + $0x10] sm:$0xff]
  %v1066 = vpack.c.bf16 %v1059, %v1059
  %1067 = vmatprep.subr.bf16.mxu0 %v263
  %1068 = vmatpush1.bf16.msra.mxu0 %v262
  %1069 = vmatprep.subr.bf16.mxu0 %v266
  %1070 = vmatpush1.bf16.msra.mxu0 %v265
  %1071 = vmatprep.subr.bf16.mxu0 %v269
  %1072 = vmatpush1.bf16.msra.mxu0 %v268
  %1073 = vmatprep.subr.bf16.mxu0 %v272
  %1074 = vmatpush1.bf16.msra.mxu0 %v271
  %1075 = vmatprep.subr.bf16.mxu0 %v275
  %1076 = vmatpush1.bf16.msra.mxu0 %v274
  %1077 = vmatprep.subr.bf16.mxu0 %v278
  %1078 = vmatpush1.bf16.msra.mxu0 %v277
  %1079 = vmatprep.subr.bf16.mxu0 %v281
  %1080 = vmatpush1.bf16.msra.mxu0 %v280
  %1081 = vmatprep.subr.bf16.mxu0 %v284
  %1082 = vmatpush1.bf16.msra.mxu0 %v283
  %1083 = vmatprep.subr.bf16.mxu0 0
  %1084 = vmatpush1.bf16.msra.mxu0 0
  %1085 = vmatprep.subr.bf16.mxu0 0
  %1086 = vmatpush1.bf16.msra.mxu0 0
  %1087 = vmatprep.subr.bf16.mxu0 0
  %1088 = vmatpush1.bf16.msra.mxu0 0
  %1089 = vmatprep.subr.bf16.mxu0 0
  %1090 = vmatpush1.bf16.msra.mxu0 0
  %1091 = vmatprep.subr.bf16.mxu0 0
  %1092 = vmatpush1.bf16.msra.mxu0 0
  %1093 = vmatprep.subr.bf16.mxu0 0
  %1094 = vmatpush1.bf16.msra.mxu0 0
  %1095 = vmatprep.subr.bf16.mxu0 0
  %1096 = vmatpush1.bf16.msra.mxu0 0
  %1097 = vmatprep.subr.bf16.mxu0 0
  %1098 = vmatpush1.bf16.msra.mxu0 0
  %1099 = vmatprep.mubr.bf16.mxu0 0
  %1100 = vmatmul.mubr.bf16.gmra.mrb[0].mxu0 %v1066
  %v1101 = vpop.f32.mrb[0].mxu0
  %v1102 = vadd.f32 0.0, %v1101
  %v1103 = vpop.f32.mrb[0].mxu0
  %v1104 = vadd.f32 0.0, %v1103
  %v1105 = vpop.f32.mrb[0].mxu0
  %v1106 = vpop.f32.mrb[0].mxu0
  %1107 = vdwg.mxu0
  %1108 = vmatprep.subr.bf16.mxu0 0
  %1109 = vmatpush1.bf16.msra.mxu0 %v264
  %1110 = vmatprep.subr.bf16.mxu0 0
  %1111 = vmatpush1.bf16.msra.mxu0 %v267
  %1112 = vmatprep.subr.bf16.mxu0 0
  %1113 = vmatpush1.bf16.msra.mxu0 %v270
  %1114 = vmatprep.subr.bf16.mxu0 0
  %1115 = vmatpush1.bf16.msra.mxu0 %v273
  %1116 = vmatprep.subr.bf16.mxu0 0
  %1117 = vmatpush1.bf16.msra.mxu0 %v276
  %1118 = vmatprep.subr.bf16.mxu0 0
  %1119 = vmatpush1.bf16.msra.mxu0 %v279
  %1120 = vmatprep.subr.bf16.mxu0 0
  %1121 = vmatpush1.bf16.msra.mxu0 %v282
  %1122 = vmatprep.subr.bf16.mxu0 0
  %1123 = vmatpush1.bf16.msra.mxu0 %v285
  %1124 = vmatprep.subr.bf16.mxu0 0
  %1125 = vmatpush1.bf16.msra.mxu0 0
  %1126 = vmatprep.subr.bf16.mxu0 0
  %1127 = vmatpush1.bf16.msra.mxu0 0
  %1128 = vmatprep.subr.bf16.mxu0 0
  %1129 = vmatpush1.bf16.msra.mxu0 0
  %1130 = vmatprep.subr.bf16.mxu0 0
  %1131 = vmatpush1.bf16.msra.mxu0 0
  %1132 = vmatprep.subr.bf16.mxu0 0
  %1133 = vmatpush1.bf16.msra.mxu0 0
  %1134 = vmatprep.subr.bf16.mxu0 0
  %1135 = vmatpush1.bf16.msra.mxu0 0
  %1136 = vmatprep.subr.bf16.mxu0 0
  %1137 = vmatpush1.bf16.msra.mxu0 0
  %1138 = vmatprep.subr.bf16.mxu0 0
  %1139 = vmatpush1.bf16.msra.mxu0 0
  %1140 = vmatprep.mubr.bf16.mxu0 0
  %1141 = vmatmul.mubr.bf16.gmra.mrb[0].mxu0 %v1066
  %v1142 = vpop.f32.mrb[0].mxu0
  %v1143 = vadd.f32 0.0, %v1142
  %v1144 = vpop.f32.mrb[0].mxu0
  %v1145 = vpop.f32.mrb[0].mxu0
  %v1146 = vpop.f32.mrb[0].mxu0
  %1147 = vdwg.mxu0
  %v1148 = vadd.f32 %v1063, %v1102
  %v1149 = vxor.u32 %v1148, 2147483648
  %v1150 = vmul.f32 %v1149, 1.442695
  %v1151 = vpow.pop %v1150
  %v1152 = vadd.f32 %v1151, 1.0
  %v1153 = vrcp.pop %v1152
  %v1154 = vmul.f32 1.0, %v1153
  %v1155 = vadd.f32 %v1064, %v1104
  %v1156 = vxor.u32 %v1155, 2147483648
  %v1157 = vmul.f32 %v1156, 1.442695
  %v1158 = vpow.pop %v1157
  %v1159 = vadd.f32 %v1158, 1.0
  %v1160 = vrcp.pop %v1159
  %v1161 = vmul.f32 1.0, %v1160
  %v1162 = vadd.f32 %v1143, %v391
  %v1163 = vmul.f32 %v1154, %v1162
  %v1164 = vadd.f32 %v1065, %v1163
  %v1165 = vtanh.pop %v1164
  %v1166 = vsub.f32 1.0, %v1161
  %v1167 = vmul.f32 %v1166, %v1165
  %v1168 = vmul.f32 %v1161, %v1059
  %v1169 = vadd.f32 %v1167, %v1168
  %s1170 = scalar_lea.vmem %s3, 56
  %1171 = vst [vmem:[%s1170] sm:$0xff] %v1169
  %1172 = vst [vmem:[#allocation2] sm:$0xff] %v1169
  // Predicated region
  $region51: #{gru_uni_to_linear.2} parent=0 // pred_check
    _
  $region52: #{gru_uni_to_linear.2} parent=0 // pred_check_branch
    %1174 = sbr.rel (0) target = $region54
  $region53: #{gru_uni_to_linear.2} parent=0 // pred_region
    _
  $region54: #{gru_uni_to_linear.2} parent=0 // pred_fallthru
    _
  // Predicated region
  $region55: #{gru_uni_to_linear.2} parent=0 // pred_check
    _
  $region56: #{gru_uni_to_linear.2} parent=0 // pred_check_branch
    %1176 = sbr.rel (0) target = $region58
  $region57: #{gru_uni_to_linear.2} parent=0 // pred_region
    _
  $region58: #{gru_uni_to_linear.2} parent=0 // pred_fallthru
    _
  %1177 = vsyncmov [#allocation4]
  %s1178 = vpop.sfrf %1177
  %p1179 = scmp.eq.s32.totalorder %s1178, 0
  %p1180 = pneg %p1179
  %1182 = shalt.err (%p1180)

// kernel: gru_uni_to_linear.3
$region0: #{gru_uni_to_linear.3}
  #allocation0 [shape = 'u32[]', space=smem, size = 0x4, offset = 0x4, fixed_abs, tag = 'smem constant byte address 0x4 - core index']
  #allocation1 [shape = 'u32[144,128]{1,0:T(1,128)}', space=vmem, size = 0x12000, scoped, tag = 'internal scratch']
  #allocation2 [shape = 'f32[8,128]{1,0:T(8,128)}', space=vmem, size = 0x1000, scoped, tag = 'scratch operand']
  #allocation3 [shape = 'bf16[128,384]{1,0:T(16,128)(2,1)}', space=vmem, size = 0x18000, scoped, tag = 'scratch operand']
  #allocation4 [shape = 's32[1]{0}', space=sflag, size = 0x4, scoped, tag = 'scratch operand']
  #allocation5 [shape = 's32[]', space=sflag, size = 0x4, offset = 0, fixed_abs, tag = 'sflag constant byte address 0x0 - dummy sync flag']
  %s0 = inlined_call_operand.vmem [shape: f32[8,8,384], index: 0, kind: input, shape index: {}]
  %s1 = inlined_call_operand.vmem [shape: bf16[128,384], index: 1, kind: input, shape index: {}]
  %s2 = inlined_call_operand.vmem [shape: f32[1,128], index: 2, kind: input, shape index: {}]
  %s3 = inlined_call_operand.vmem [shape: f32[1,8,128], index: 3, kind: output, shape index: {}]
  %s4 = sld [smem:[#allocation0]]
  $region63: #{gru_uni_to_linear.3} parent=0
    _
  %s6 = ssub.s32 1, %s4
  %s7 = scalar_select 0, %s6, %s4
  // Predicated region
  $region2: #{gru_uni_to_linear.3} parent=0 // pred_check
    _
  $region3: #{gru_uni_to_linear.3} parent=0 // pred_check_branch
    %9 = sbr.rel (0) target = $region5
  $region4: #{gru_uni_to_linear.3} parent=0 // pred_region
    _
  $region5: #{gru_uni_to_linear.3} parent=0 // pred_fallthru
    _
  // Predicated region
  $region6: #{gru_uni_to_linear.3} parent=0 // pred_check
    _
  $region7: #{gru_uni_to_linear.3} parent=0 // pred_check_branch
    %11 = sbr.rel (0) target = $region9
  $region8: #{gru_uni_to_linear.3} parent=0 // pred_region
    _
  $region9: #{gru_uni_to_linear.3} parent=0 // pred_fallthru
    _
  %p13 = scmp.eq.s32.totalorder 0, 0
  // Predicated region
  $region10: #{gru_uni_to_linear.3} parent=0 // pred_check
    %p14 = pneg %p13
  $region11: #{gru_uni_to_linear.3} parent=0 // pred_check_branch
    %16 = sbr.rel (%p14) target = $region13
  $region12: #{gru_uni_to_linear.3} parent=0 // pred_region
    %17 = vst [vmem:[#allocation2] sm:$0xff] 0.0
    %p19 = scmp.lt.u32.totalorder 4, 8
    %p20 = pneg %p19
    // Predicated region
    $region14: #{gru_uni_to_linear.3} parent=12 // pred_check
      _
    $region15: #{gru_uni_to_linear.3} parent=12 // pred_check_branch
      %22 = sbr.rel (%p19) target = $region17
    $region16: #{gru_uni_to_linear.3} parent=12 // pred_region
      %s131 = sand.u32 4, 7
      %p132 = scmp.eq.s32.totalorder %s131, 0
      %p133 = pneg %p132
      // Predicated region
      $region29: #{gru_uni_to_linear.3} parent=16 // pred_check
        _
      $region30: #{gru_uni_to_linear.3} parent=16 // pred_check_branch
        %135 = sbr.rel (%p132) target = $region32
      $region31: #{gru_uni_to_linear.3} parent=16 // pred_region
        %s136 = sand.u32 4, 7
        %s137 = ssub.s32 4, %s136
        %s138 = scalar_lea.vmem %s1, %s137
        %s139 = ssub.s32 4, %s136
        %s140 = scalar_lea.vmem [#allocation3], %s139
        loop: start=0, step=1, limit=1
        $region33: #{gru_uni_to_linear.3} parent=31 // loop_pre_header
          _
        $region34: #{gru_uni_to_linear.3} parent=31 // loop_header
          %s142 = sphi 0, %s146
          %p143 = scmp.ge.s32.totalorder %s142, 1
          %s147 = sphi %s1, %s1
          %s148 = sphi [#allocation3], [#allocation3]
        $region35: #{gru_uni_to_linear.3} parent=31 // loop_header_branch
          %145 = sbr.rel (%p143) target = $region39
        $region36: #{gru_uni_to_linear.3} parent=31 // loop_body
          _
        $region37: #{gru_uni_to_linear.3} parent=31 // loop_footer
          %s146 = sadd.s32 1, %s142
        $region38: #{gru_uni_to_linear.3} parent=31 // loop_footer_branch
          %141 = sbr.rel target = $region34
        $region39: #{gru_uni_to_linear.3} parent=31 // loop_exit
          _
        %s149 = sshllo.u32 0, %s136
        loop: start=0, step=1, limit=1
        $region40: #{gru_uni_to_linear.3} parent=31 // loop_pre_header
          _
        $region41: #{gru_uni_to_linear.3} parent=31 // loop_header
          %s151 = sphi 0, %s155
          %p152 = scmp.ge.s32.totalorder %s151, 1
          %s156 = sphi %s138, %s138
          %s157 = sphi %s140, %s140
        $region42: #{gru_uni_to_linear.3} parent=31 // loop_header_branch
          %154 = sbr.rel (%p152) target = $region46
        $region43: #{gru_uni_to_linear.3} parent=31 // loop_body
          %v158 = vld [vmem:[%s156] sm:%s149]
          %159 = vst [vmem:[%s157] sm:%s149] %v158
          %v160 = vld [vmem:[%s156 + $0xc] sm:%s149]
          %161 = vst [vmem:[%s157 + $0x4] sm:%s149] %v160
          %v162 = vld [vmem:[%s156 + $0x4] sm:%s149]
          %163 = vst [vmem:[%s157 + $0x8] sm:%s149] %v162
          %v164 = vld [vmem:[%s156 + $0x10] sm:%s149]
          %165 = vst [vmem:[%s157 + $0xc] sm:%s149] %v164
          %v166 = vld [vmem:[%s156 + $0x8] sm:%s149]
          %167 = vst [vmem:[%s157 + $0x10] sm:%s149] %v166
          %v168 = vld [vmem:[%s156 + $0x14] sm:%s149]
          %169 = vst [vmem:[%s157 + $0x14] sm:%s149] %v168
          %v170 = vld [vmem:[%s156 + $0x18] sm:%s149]
          %171 = vst [vmem:[%s157 + $0x18] sm:%s149] %v170
          %v172 = vld [vmem:[%s156 + $0x24] sm:%s149]
          %173 = vst [vmem:[%s157 + $0x1c] sm:%s149] %v172
          %v174 = vld [vmem:[%s156 + $0x1c] sm:%s149]
          %175 = vst [vmem:[%s157 + $0x20] sm:%s149] %v174
          %v176 = vld [vmem:[%s156 + $0x28] sm:%s149]
          %177 = vst [vmem:[%s157 + $0x24] sm:%s149] %v176
          %v178 = vld [vmem:[%s156 + $0x20] sm:%s149]
          %179 = vst [vmem:[%s157 + $0x28] sm:%s149] %v178
          %v180 = vld [vmem:[%s156 + $0x2c] sm:%s149]
          %181 = vst [vmem:[%s157 + $0x2c] sm:%s149] %v180
          %v182 = vld [vmem:[%s156 + $0x30] sm:%s149]
          %183 = vst [vmem:[%s157 + $0x30] sm:%s149] %v182
          %v184 = vld [vmem:[%s156 + $0x3c] sm:%s149]
          %185 = vst [vmem:[%s157 + $0x34] sm:%s149] %v184
          %v186 = vld [vmem:[%s156 + $0x34] sm:%s149]
          %187 = vst [vmem:[%s157 + $0x38] sm:%s149] %v186
          %v188 = vld [vmem:[%s156 + $0x40] sm:%s149]
          %189 = vst [vmem:[%s157 + $0x3c] sm:%s149] %v188
          %v190 = vld [vmem:[%s156 + $0x38] sm:%s149]
          %191 = vst [vmem:[%s157 + $0x40] sm:%s149] %v190
          %v192 = vld [vmem:[%s156 + $0x44] sm:%s149]
          %193 = vst [vmem:[%s157 + $0x44] sm:%s149] %v192
          %v194 = vld [vmem:[%s156 + $0x48] sm:%s149]
          %195 = vst [vmem:[%s157 + $0x48] sm:%s149] %v194
          %v196 = vld [vmem:[%s156 + $0x54] sm:%s149]
          %197 = vst [vmem:[%s157 + $0x4c] sm:%s149] %v196
          %v198 = vld [vmem:[%s156 + $0x4c] sm:%s149]
          %199 = vst [vmem:[%s157 + $0x50] sm:%s149] %v198
          %v200 = vld [vmem:[%s156 + $0x58] sm:%s149]
          %201 = vst [vmem:[%s157 + $0x54] sm:%s149] %v200
          %v202 = vld [vmem:[%s156 + $0x50] sm:%s149]
          %203 = vst [vmem:[%s157 + $0x58] sm:%s149] %v202
          %v204 = vld [vmem:[%s156 + $0x5c] sm:%s149]
          %205 = vst [vmem:[%s157 + $0x5c] sm:%s149] %v204
          %v206 = vld [vmem:[%s156 + $0x60] sm:%s149]
          %207 = vst [vmem:[%s157 + $0x60] sm:%s149] %v206
          %v208 = vld [vmem:[%s156 + $0x6c] sm:%s149]
          %209 = vst [vmem:[%s157 + $0x64] sm:%s149] %v208
          %v210 = vld [vmem:[%s156 + $0x64] sm:%s149]
          %211 = vst [vmem:[%s157 + $0x68] sm:%s149] %v210
          %v212 = vld [vmem:[%s156 + $0x70] sm:%s149]
          %213 = vst [vmem:[%s157 + $0x6c] sm:%s149] %v212
          %v214 = vld [vmem:[%s156 + $0x68] sm:%s149]
          %215 = vst [vmem:[%s157 + $0x70] sm:%s149] %v214
          %v216 = vld [vmem:[%s156 + $0x74] sm:%s149]
          %217 = vst [vmem:[%s157 + $0x74] sm:%s149] %v216
          %v218 = vld [vmem:[%s156 + $0x78] sm:%s149]
          %219 = vst [vmem:[%s157 + $0x78] sm:%s149] %v218
          %v220 = vld [vmem:[%s156 + $0x84] sm:%s149]
          %221 = vst [vmem:[%s157 + $0x7c] sm:%s149] %v220
          %v222 = vld [vmem:[%s156 + $0x7c] sm:%s149]
          %223 = vst [vmem:[%s157 + $0x80] sm:%s149] %v222
          %v224 = vld [vmem:[%s156 + $0x88] sm:%s149]
          %225 = vst [vmem:[%s157 + $0x84] sm:%s149] %v224
          %v226 = vld [vmem:[%s156 + $0x80] sm:%s149]
          %227 = vst [vmem:[%s157 + $0x88] sm:%s149] %v226
          %v228 = vld [vmem:[%s156 + $0x8c] sm:%s149]
          %229 = vst [vmem:[%s157 + $0x8c] sm:%s149] %v228
          %v230 = vld [vmem:[%s156 + $0x90] sm:%s149]
          %231 = vst [vmem:[%s157 + $0x90] sm:%s149] %v230
          %v232 = vld [vmem:[%s156 + $0x9c] sm:%s149]
          %233 = vst [vmem:[%s157 + $0x94] sm:%s149] %v232
          %v234 = vld [vmem:[%s156 + $0x94] sm:%s149]
          %235 = vst [vmem:[%s157 + $0x98] sm:%s149] %v234
          %v236 = vld [vmem:[%s156 + $0xa0] sm:%s149]
          %237 = vst [vmem:[%s157 + $0x9c] sm:%s149] %v236
          %v238 = vld [vmem:[%s156 + $0x98] sm:%s149]
          %239 = vst [vmem:[%s157 + $0xa0] sm:%s149] %v238
          %v240 = vld [vmem:[%s156 + $0xa4] sm:%s149]
          %241 = vst [vmem:[%s157 + $0xa4] sm:%s149] %v240
          %v242 = vld [vmem:[%s156 + $0xa8] sm:%s149]
          %243 = vst [vmem:[%s157 + $0xa8] sm:%s149] %v242
          %v244 = vld [vmem:[%s156 + $0xb4] sm:%s149]
          %245 = vst [vmem:[%s157 + $0xac] sm:%s149] %v244
          %v246 = vld [vmem:[%s156 + $0xac] sm:%s149]
          %247 = vst [vmem:[%s157 + $0xb0] sm:%s149] %v246
          %v248 = vld [vmem:[%s156 + $0xb8] sm:%s149]
          %249 = vst [vmem:[%s157 + $0xb4] sm:%s149] %v248
          %v250 = vld [vmem:[%s156 + $0xb0] sm:%s149]
          %251 = vst [vmem:[%s157 + $0xb8] sm:%s149] %v250
          %v252 = vld [vmem:[%s156 + $0xbc] sm:%s149]
          %253 = vst [vmem:[%s157 + $0xbc] sm:%s149] %v252
        $region44: #{gru_uni_to_linear.3} parent=31 // loop_footer
          %s155 = sadd.s32 1, %s151
        $region45: #{gru_uni_to_linear.3} parent=31 // loop_footer_branch
          %150 = sbr.rel target = $region41
        $region46: #{gru_uni_to_linear.3} parent=31 // loop_exit
          _
      $region32: #{gru_uni_to_linear.3} parent=16 // pred_fallthru
        _
    $region17: #{gru_uni_to_linear.3} parent=12 // pred_fallthru
      _
    // Predicated region
    $region18: #{gru_uni_to_linear.3} parent=12 // pred_check
      %p23 = pneg %p19
    $region19: #{gru_uni_to_linear.3} parent=12 // pred_check_branch
      %25 = sbr.rel (%p23) target = $region21
    $region20: #{gru_uni_to_linear.3} parent=12 // pred_region
      %s26 = sshllo.u32 0, 4
      loop: start=0, step=1, limit=1
      $region22: #{gru_uni_to_linear.3} parent=20 // loop_pre_header
        _
      $region23: #{gru_uni_to_linear.3} parent=20 // loop_header
        %s28 = sphi 0, %s32
        %p29 = scmp.ge.s32.totalorder %s28, 1
        %s33 = sphi %s1, %s1
        %s34 = sphi [#allocation3], [#allocation3]
      $region24: #{gru_uni_to_linear.3} parent=20 // loop_header_branch
        %31 = sbr.rel (%p29) target = $region28
      $region25: #{gru_uni_to_linear.3} parent=20 // loop_body
        %v35 = vld [vmem:[%s33] sm:%s26]
        %36 = vst [vmem:[%s34] sm:%s26] %v35
        %v37 = vld [vmem:[%s33 + $0xc] sm:%s26]
        %38 = vst [vmem:[%s34 + $0x4] sm:%s26] %v37
        %v39 = vld [vmem:[%s33 + $0x4] sm:%s26]
        %40 = vst [vmem:[%s34 + $0x8] sm:%s26] %v39
        %v41 = vld [vmem:[%s33 + $0x10] sm:%s26]
        %42 = vst [vmem:[%s34 + $0xc] sm:%s26] %v41
        %v43 = vld [vmem:[%s33 + $0x8] sm:%s26]
        %44 = vst [vmem:[%s34 + $0x10] sm:%s26] %v43
        %v45 = vld [vmem:[%s33 + $0x14] sm:%s26]
        %46 = vst [vmem:[%s34 + $0x14] sm:%s26] %v45
        %v47 = vld [vmem:[%s33 + $0x18] sm:%s26]
        %48 = vst [vmem:[%s34 + $0x18] sm:%s26] %v47
        %v49 = vld [vmem:[%s33 + $0x24] sm:%s26]
        %50 = vst [vmem:[%s34 + $0x1c] sm:%s26] %v49
        %v51 = vld [vmem:[%s33 + $0x1c] sm:%s26]
        %52 = vst [vmem:[%s34 + $0x20] sm:%s26] %v51
        %v53 = vld [vmem:[%s33 + $0x28] sm:%s26]
        %54 = vst [vmem:[%s34 + $0x24] sm:%s26] %v53
        %v55 = vld [vmem:[%s33 + $0x20] sm:%s26]
        %56 = vst [vmem:[%s34 + $0x28] sm:%s26] %v55
        %v57 = vld [vmem:[%s33 + $0x2c] sm:%s26]
        %58 = vst [vmem:[%s34 + $0x2c] sm:%s26] %v57
        %v59 = vld [vmem:[%s33 + $0x30] sm:%s26]
        %60 = vst [vmem:[%s34 + $0x30] sm:%s26] %v59
        %v61 = vld [vmem:[%s33 + $0x3c] sm:%s26]
        %62 = vst [vmem:[%s34 + $0x34] sm:%s26] %v61
        %v63 = vld [vmem:[%s33 + $0x34] sm:%s26]
        %64 = vst [vmem:[%s34 + $0x38] sm:%s26] %v63
        %v65 = vld [vmem:[%s33 + $0x40] sm:%s26]
        %66 = vst [vmem:[%s34 + $0x3c] sm:%s26] %v65
        %v67 = vld [vmem:[%s33 + $0x38] sm:%s26]
        %68 = vst [vmem:[%s34 + $0x40] sm:%s26] %v67
        %v69 = vld [vmem:[%s33 + $0x44] sm:%s26]
        %70 = vst [vmem:[%s34 + $0x44] sm:%s26] %v69
        %v71 = vld [vmem:[%s33 + $0x48] sm:%s26]
        %72 = vst [vmem:[%s34 + $0x48] sm:%s26] %v71
        %v73 = vld [vmem:[%s33 + $0x54] sm:%s26]
        %74 = vst [vmem:[%s34 + $0x4c] sm:%s26] %v73
        %v75 = vld [vmem:[%s33 + $0x4c] sm:%s26]
        %76 = vst [vmem:[%s34 + $0x50] sm:%s26] %v75
        %v77 = vld [vmem:[%s33 + $0x58] sm:%s26]
        %78 = vst [vmem:[%s34 + $0x54] sm:%s26] %v77
        %v79 = vld [vmem:[%s33 + $0x50] sm:%s26]
        %80 = vst [vmem:[%s34 + $0x58] sm:%s26] %v79
        %v81 = vld [vmem:[%s33 + $0x5c] sm:%s26]
        %82 = vst [vmem:[%s34 + $0x5c] sm:%s26] %v81
        %v83 = vld [vmem:[%s33 + $0x60] sm:%s26]
        %84 = vst [vmem:[%s34 + $0x60] sm:%s26] %v83
        %v85 = vld [vmem:[%s33 + $0x6c] sm:%s26]
        %86 = vst [vmem:[%s34 + $0x64] sm:%s26] %v85
        %v87 = vld [vmem:[%s33 + $0x64] sm:%s26]
        %88 = vst [vmem:[%s34 + $0x68] sm:%s26] %v87
        %v89 = vld [vmem:[%s33 + $0x70] sm:%s26]
        %90 = vst [vmem:[%s34 + $0x6c] sm:%s26] %v89
        %v91 = vld [vmem:[%s33 + $0x68] sm:%s26]
        %92 = vst [vmem:[%s34 + $0x70] sm:%s26] %v91
        %v93 = vld [vmem:[%s33 + $0x74] sm:%s26]
        %94 = vst [vmem:[%s34 + $0x74] sm:%s26] %v93
        %v95 = vld [vmem:[%s33 + $0x78] sm:%s26]
        %96 = vst [vmem:[%s34 + $0x78] sm:%s26] %v95
        %v97 = vld [vmem:[%s33 + $0x84] sm:%s26]
        %98 = vst [vmem:[%s34 + $0x7c] sm:%s26] %v97
        %v99 = vld [vmem:[%s33 + $0x7c] sm:%s26]
        %100 = vst [vmem:[%s34 + $0x80] sm:%s26] %v99
        %v101 = vld [vmem:[%s33 + $0x88] sm:%s26]
        %102 = vst [vmem:[%s34 + $0x84] sm:%s26] %v101
        %v103 = vld [vmem:[%s33 + $0x80] sm:%s26]
        %104 = vst [vmem:[%s34 + $0x88] sm:%s26] %v103
        %v105 = vld [vmem:[%s33 + $0x8c] sm:%s26]
        %106 = vst [vmem:[%s34 + $0x8c] sm:%s26] %v105
        %v107 = vld [vmem:[%s33 + $0x90] sm:%s26]
        %108 = vst [vmem:[%s34 + $0x90] sm:%s26] %v107
        %v109 = vld [vmem:[%s33 + $0x9c] sm:%s26]
        %110 = vst [vmem:[%s34 + $0x94] sm:%s26] %v109
        %v111 = vld [vmem:[%s33 + $0x94] sm:%s26]
        %112 = vst [vmem:[%s34 + $0x98] sm:%s26] %v111
        %v113 = vld [vmem:[%s33 + $0xa0] sm:%s26]
        %114 = vst [vmem:[%s34 + $0x9c] sm:%s26] %v113
        %v115 = vld [vmem:[%s33 + $0x98] sm:%s26]
        %116 = vst [vmem:[%s34 + $0xa0] sm:%s26] %v115
        %v117 = vld [vmem:[%s33 + $0xa4] sm:%s26]
        %118 = vst [vmem:[%s34 + $0xa4] sm:%s26] %v117
        %v119 = vld [vmem:[%s33 + $0xa8] sm:%s26]
        %120 = vst [vmem:[%s34 + $0xa8] sm:%s26] %v119
        %v121 = vld [vmem:[%s33 + $0xb4] sm:%s26]
        %122 = vst [vmem:[%s34 + $0xac] sm:%s26] %v121
        %v123 = vld [vmem:[%s33 + $0xac] sm:%s26]
        %124 = vst [vmem:[%s34 + $0xb0] sm:%s26] %v123
        %v125 = vld [vmem:[%s33 + $0xb8] sm:%s26]
        %126 = vst [vmem:[%s34 + $0xb4] sm:%s26] %v125
        %v127 = vld [vmem:[%s33 + $0xb0] sm:%s26]
        %128 = vst [vmem:[%s34 + $0xb8] sm:%s26] %v127
        %v129 = vld [vmem:[%s33 + $0xbc] sm:%s26]
        %130 = vst [vmem:[%s34 + $0xbc] sm:%s26] %v129
      $region26: #{gru_uni_to_linear.3} parent=20 // loop_footer
        %s32 = sadd.s32 1, %s28
      $region27: #{gru_uni_to_linear.3} parent=20 // loop_footer_branch
        %27 = sbr.rel target = $region23
      $region28: #{gru_uni_to_linear.3} parent=20 // loop_exit
        _
    $region21: #{gru_uni_to_linear.3} parent=12 // pred_fallthru
      _
    // Predicated region
    $region47: #{gru_uni_to_linear.3} parent=12 // pred_check
      _
    $region48: #{gru_uni_to_linear.3} parent=12 // pred_check_branch
      %256 = sbr.rel (0) target = $region50
    $region49: #{gru_uni_to_linear.3} parent=12 // pred_region
      %257 = vsyncadd [#allocation4], 3072
    $region50: #{gru_uni_to_linear.3} parent=12 // pred_fallthru
      _
    %s258 = smul.u32 4, 16
    %s259 = smul.u32 %s258, 3
    %s260 = sshll.u32 %s259, 4
    %261 = dma.done [#allocation4], %s260
  $region13: #{gru_uni_to_linear.3} parent=0 // pred_fallthru
    _
  %v262 = vld [vmem:[#allocation3] sm:$0xff]
  %v263 = vld [vmem:[#allocation3 + $0x8] sm:$0xff]
  %v264 = vld [vmem:[#allocation3 + $0x10] sm:$0xff]
  %v265 = vld [vmem:[#allocation3 + $0x18] sm:$0xff]
  %v266 = vld [vmem:[#allocation3 + $0x20] sm:$0xff]
  %v267 = vld [vmem:[#allocation3 + $0x28] sm:$0xff]
  %v268 = vld [vmem:[#allocation3 + $0x30] sm:$0xff]
  %v269 = vld [vmem:[#allocation3 + $0x38] sm:$0xff]
  %v270 = vld [vmem:[#allocation3 + $0x40] sm:$0xff]
  %v271 = vld [vmem:[#allocation3 + $0x48] sm:$0xff]
  %v272 = vld [vmem:[#allocation3 + $0x50] sm:$0xff]
  %v273 = vld [vmem:[#allocation3 + $0x58] sm:$0xff]
  %v274 = vld [vmem:[#allocation3 + $0x60] sm:$0xff]
  %v275 = vld [vmem:[#allocation3 + $0x68] sm:$0xff]
  %v276 = vld [vmem:[#allocation3 + $0x70] sm:$0xff]
  %v277 = vld [vmem:[#allocation3 + $0x78] sm:$0xff]
  %v278 = vld [vmem:[#allocation3 + $0x80] sm:$0xff]
  %v279 = vld [vmem:[#allocation3 + $0x88] sm:$0xff]
  %v280 = vld [vmem:[#allocation3 + $0x90] sm:$0xff]
  %v281 = vld [vmem:[#allocation3 + $0x98] sm:$0xff]
  %v282 = vld [vmem:[#allocation3 + $0xa0] sm:$0xff]
  %v283 = vld [vmem:[#allocation3 + $0xa8] sm:$0xff]
  %v284 = vld [vmem:[#allocation3 + $0xb0] sm:$0xff]
  %v285 = vld [vmem:[#allocation3 + $0xb8] sm:$0xff]
  %v286 = vld [vmem:[%s2] sm:$0x1]
  %v287 = vld [vmem:[#allocation2] sm:$0xff]
  %v288 = vld [vmem:[%s0] sm:$0xff]
  %v289 = vld [vmem:[%s0 + $0x8] sm:$0xff]
  %v290 = vld [vmem:[%s0 + $0x10] sm:$0xff]
  %v291 = vpack.c.bf16 %v287, %v287
  %292 = vmatprep.subr.bf16.mxu0 %v263
  %293 = vmatpush1.bf16.msra.mxu0 %v262
  %294 = vmatprep.subr.bf16.mxu0 %v266
  %295 = vmatpush1.bf16.msra.mxu0 %v265
  %296 = vmatprep.subr.bf16.mxu0 %v269
  %297 = vmatpush1.bf16.msra.mxu0 %v268
  %298 = vmatprep.subr.bf16.mxu0 %v272
  %299 = vmatpush1.bf16.msra.mxu0 %v271
  %300 = vmatprep.subr.bf16.mxu0 %v275
  %301 = vmatpush1.bf16.msra.mxu0 %v274
  %302 = vmatprep.subr.bf16.mxu0 %v278
  %303 = vmatpush1.bf16.msra.mxu0 %v277
  %304 = vmatprep.subr.bf16.mxu0 %v281
  %305 = vmatpush1.bf16.msra.mxu0 %v280
  %306 = vmatprep.subr.bf16.mxu0 %v284
  %307 = vmatpush1.bf16.msra.mxu0 %v283
  %308 = vmatprep.subr.bf16.mxu0 0
  %309 = vmatpush1.bf16.msra.mxu0 0
  %310 = vmatprep.subr.bf16.mxu0 0
  %311 = vmatpush1.bf16.msra.mxu0 0
  %312 = vmatprep.subr.bf16.mxu0 0
  %313 = vmatpush1.bf16.msra.mxu0 0
  %314 = vmatprep.subr.bf16.mxu0 0
  %315 = vmatpush1.bf16.msra.mxu0 0
  %316 = vmatprep.subr.bf16.mxu0 0
  %317 = vmatpush1.bf16.msra.mxu0 0
  %318 = vmatprep.subr.bf16.mxu0 0
  %319 = vmatpush1.bf16.msra.mxu0 0
  %320 = vmatprep.subr.bf16.mxu0 0
  %321 = vmatpush1.bf16.msra.mxu0 0
  %322 = vmatprep.subr.bf16.mxu0 0
  %323 = vmatpush1.bf16.msra.mxu0 0
  %324 = vmatprep.mubr.bf16.mxu0 0
  %325 = vmatmul.mubr.bf16.gmra.mrb[0].mxu0 %v291
  %v326 = vpop.f32.mrb[0].mxu0
  %v327 = vadd.f32 0.0, %v326
  %v328 = vpop.f32.mrb[0].mxu0
  %v329 = vadd.f32 0.0, %v328
  %v330 = vpop.f32.mrb[0].mxu0
  %v331 = vpop.f32.mrb[0].mxu0
  %332 = vdwg.mxu0
  %333 = vmatprep.subr.bf16.mxu0 0
  %334 = vmatpush1.bf16.msra.mxu0 %v264
  %335 = vmatprep.subr.bf16.mxu0 0
  %336 = vmatpush1.bf16.msra.mxu0 %v267
  %337 = vmatprep.subr.bf16.mxu0 0
  %338 = vmatpush1.bf16.msra.mxu0 %v270
  %339 = vmatprep.subr.bf16.mxu0 0
  %340 = vmatpush1.bf16.msra.mxu0 %v273
  %341 = vmatprep.subr.bf16.mxu0 0
  %342 = vmatpush1.bf16.msra.mxu0 %v276
  %343 = vmatprep.subr.bf16.mxu0 0
  %344 = vmatpush1.bf16.msra.mxu0 %v279
  %345 = vmatprep.subr.bf16.mxu0 0
  %346 = vmatpush1.bf16.msra.mxu0 %v282
  %347 = vmatprep.subr.bf16.mxu0 0
  %348 = vmatpush1.bf16.msra.mxu0 %v285
  %349 = vmatprep.subr.bf16.mxu0 0
  %350 = vmatpush1.bf16.msra.mxu0 0
  %351 = vmatprep.subr.bf16.mxu0 0
  %352 = vmatpush1.bf16.msra.mxu0 0
  %353 = vmatprep.subr.bf16.mxu0 0
  %354 = vmatpush1.bf16.msra.mxu0 0
  %355 = vmatprep.subr.bf16.mxu0 0
  %356 = vmatpush1.bf16.msra.mxu0 0
  %357 = vmatprep.subr.bf16.mxu0 0
  %358 = vmatpush1.bf16.msra.mxu0 0
  %359 = vmatprep.subr.bf16.mxu0 0
  %360 = vmatpush1.bf16.msra.mxu0 0
  %361 = vmatprep.subr.bf16.mxu0 0
  %362 = vmatpush1.bf16.msra.mxu0 0
  %363 = vmatprep.subr.bf16.mxu0 0
  %364 = vmatpush1.bf16.msra.mxu0 0
  %365 = vmatprep.mubr.bf16.mxu0 0
  %366 = vmatmul.mubr.bf16.gmra.mrb[0].mxu0 %v291
  %v367 = vpop.f32.mrb[0].mxu0
  %v368 = vadd.f32 0.0, %v367
  %v369 = vpop.f32.mrb[0].mxu0
  %v370 = vpop.f32.mrb[0].mxu0
  %v371 = vpop.f32.mrb[0].mxu0
  %372 = vdwg.mxu0
  %v373 = vadd.f32 %v288, %v327
  %v374 = vxor.u32 %v373, 2147483648
  %v375 = vmul.f32 %v374, 1.442695
  %v376 = vpow.pop %v375
  %v377 = vadd.f32 %v376, 1.0
  %v378 = vrcp.pop %v377
  %v379 = vmul.f32 1.0, %v378
  %v380 = vadd.f32 %v289, %v329
  %v381 = vxor.u32 %v380, 2147483648
  %v382 = vmul.f32 %v381, 1.442695
  %v383 = vpow.pop %v382
  %v384 = vadd.f32 %v383, 1.0
  %v385 = vrcp.pop %v384
  %v386 = vmul.f32 1.0, %v385
  %v388 = vlaneseq
  %v389 = vshrl.u32 %v388, 7
  %v390 = vsub.s32 0, %v389
  %v391 = vrot.slane %v286, %v390
  %v393 = vadd.f32 %v368, %v391
  %v394 = vmul.f32 %v379, %v393
  %v395 = vadd.f32 %v290, %v394
  %v396 = vtanh.pop %v395
  %v397 = vsub.f32 1.0, %v386
  %v398 = vmul.f32 %v397, %v396
  %v399 = vmul.f32 %v386, %v287
  %v400 = vadd.f32 %v398, %v399
  %s401 = scalar_lea.vmem %s0, 24
  %v402 = vld [vmem:[%s401] sm:$0xff]
  %v403 = vld [vmem:[%s401 + $0x8] sm:$0xff]
  %v404 = vld [vmem:[%s401 + $0x10] sm:$0xff]
  %v405 = vpack.c.bf16 %v400, %v400
  %406 = vmatprep.subr.bf16.mxu0 %v263
  %407 = vmatpush1.bf16.msra.mxu0 %v262
  %408 = vmatprep.subr.bf16.mxu0 %v266
  %409 = vmatpush1.bf16.msra.mxu0 %v265
  %410 = vmatprep.subr.bf16.mxu0 %v269
  %411 = vmatpush1.bf16.msra.mxu0 %v268
  %412 = vmatprep.subr.bf16.mxu0 %v272
  %413 = vmatpush1.bf16.msra.mxu0 %v271
  %414 = vmatprep.subr.bf16.mxu0 %v275
  %415 = vmatpush1.bf16.msra.mxu0 %v274
  %416 = vmatprep.subr.bf16.mxu0 %v278
  %417 = vmatpush1.bf16.msra.mxu0 %v277
  %418 = vmatprep.subr.bf16.mxu0 %v281
  %419 = vmatpush1.bf16.msra.mxu0 %v280
  %420 = vmatprep.subr.bf16.mxu0 %v284
  %421 = vmatpush1.bf16.msra.mxu0 %v283
  %422 = vmatprep.subr.bf16.mxu0 0
  %423 = vmatpush1.bf16.msra.mxu0 0
  %424 = vmatprep.subr.bf16.mxu0 0
  %425 = vmatpush1.bf16.msra.mxu0 0
  %426 = vmatprep.subr.bf16.mxu0 0
  %427 = vmatpush1.bf16.msra.mxu0 0
  %428 = vmatprep.subr.bf16.mxu0 0
  %429 = vmatpush1.bf16.msra.mxu0 0
  %430 = vmatprep.subr.bf16.mxu0 0
  %431 = vmatpush1.bf16.msra.mxu0 0
  %432 = vmatprep.subr.bf16.mxu0 0
  %433 = vmatpush1.bf16.msra.mxu0 0
  %434 = vmatprep.subr.bf16.mxu0 0
  %435 = vmatpush1.bf16.msra.mxu0 0
  %436 = vmatprep.subr.bf16.mxu0 0
  %437 = vmatpush1.bf16.msra.mxu0 0
  %438 = vmatprep.mubr.bf16.mxu0 0
  %439 = vmatmul.mubr.bf16.gmra.mrb[0].mxu0 %v405
  %v440 = vpop.f32.mrb[0].mxu0
  %v441 = vadd.f32 0.0, %v440
  %v442 = vpop.f32.mrb[0].mxu0
  %v443 = vadd.f32 0.0, %v442
  %v444 = vpop.f32.mrb[0].mxu0
  %v445 = vpop.f32.mrb[0].mxu0
  %446 = vdwg.mxu0
  %447 = vmatprep.subr.bf16.mxu0 0
  %448 = vmatpush1.bf16.msra.mxu0 %v264
  %449 = vmatprep.subr.bf16.mxu0 0
  %450 = vmatpush1.bf16.msra.mxu0 %v267
  %451 = vmatprep.subr.bf16.mxu0 0
  %452 = vmatpush1.bf16.msra.mxu0 %v270
  %453 = vmatprep.subr.bf16.mxu0 0
  %454 = vmatpush1.bf16.msra.mxu0 %v273
  %455 = vmatprep.subr.bf16.mxu0 0
  %456 = vmatpush1.bf16.msra.mxu0 %v276
  %457 = vmatprep.subr.bf16.mxu0 0
  %458 = vmatpush1.bf16.msra.mxu0 %v279
  %459 = vmatprep.subr.bf16.mxu0 0
  %460 = vmatpush1.bf16.msra.mxu0 %v282
  %461 = vmatprep.subr.bf16.mxu0 0
  %462 = vmatpush1.bf16.msra.mxu0 %v285
  %463 = vmatprep.subr.bf16.mxu0 0
  %464 = vmatpush1.bf16.msra.mxu0 0
  %465 = vmatprep.subr.bf16.mxu0 0
  %466 = vmatpush1.bf16.msra.mxu0 0
  %467 = vmatprep.subr.bf16.mxu0 0
  %468 = vmatpush1.bf16.msra.mxu0 0
  %469 = vmatprep.subr.bf16.mxu0 0
  %470 = vmatpush1.bf16.msra.mxu0 0
  %471 = vmatprep.subr.bf16.mxu0 0
  %472 = vmatpush1.bf16.msra.mxu0 0
  %473 = vmatprep.subr.bf16.mxu0 0
  %474 = vmatpush1.bf16.msra.mxu0 0
  %475 = vmatprep.subr.bf16.mxu0 0
  %476 = vmatpush1.bf16.msra.mxu0 0
  %477 = vmatprep.subr.bf16.mxu0 0
  %478 = vmatpush1.bf16.msra.mxu0 0
  %479 = vmatprep.mubr.bf16.mxu0 0
  %480 = vmatmul.mubr.bf16.gmra.mrb[0].mxu0 %v405
  %v481 = vpop.f32.mrb[0].mxu0
  %v482 = vadd.f32 0.0, %v481
  %v483 = vpop.f32.mrb[0].mxu0
  %v484 = vpop.f32.mrb[0].mxu0
  %v485 = vpop.f32.mrb[0].mxu0
  %486 = vdwg.mxu0
  %v487 = vadd.f32 %v402, %v441
  %v488 = vxor.u32 %v487, 2147483648
  %v489 = vmul.f32 %v488, 1.442695
  %v490 = vpow.pop %v489
  %v491 = vadd.f32 %v490, 1.0
  %v492 = vrcp.pop %v491
  %v493 = vmul.f32 1.0, %v492
  %v494 = vadd.f32 %v403, %v443
  %v495 = vxor.u32 %v494, 2147483648
  %v496 = vmul.f32 %v495, 1.442695
  %v497 = vpow.pop %v496
  %v498 = vadd.f32 %v497, 1.0
  %v499 = vrcp.pop %v498
  %v500 = vmul.f32 1.0, %v499
  %v501 = vadd.f32 %v482, %v391
  %v502 = vmul.f32 %v493, %v501
  %v503 = vadd.f32 %v404, %v502
  %v504 = vtanh.pop %v503
  %v505 = vsub.f32 1.0, %v500
  %v506 = vmul.f32 %v505, %v504
  %v507 = vmul.f32 %v500, %v400
  %v508 = vadd.f32 %v506, %v507
  %s509 = scalar_lea.vmem %s0, 48
  %v510 = vld [vmem:[%s509] sm:$0xff]
  %v511 = vld [vmem:[%s509 + $0x8] sm:$0xff]
  %v512 = vld [vmem:[%s509 + $0x10] sm:$0xff]
  %v513 = vpack.c.bf16 %v508, %v508
  %514 = vmatprep.subr.bf16.mxu0 %v263
  %515 = vmatpush1.bf16.msra.mxu0 %v262
  %516 = vmatprep.subr.bf16.mxu0 %v266
  %517 = vmatpush1.bf16.msra.mxu0 %v265
  %518 = vmatprep.subr.bf16.mxu0 %v269
  %519 = vmatpush1.bf16.msra.mxu0 %v268
  %520 = vmatprep.subr.bf16.mxu0 %v272
  %521 = vmatpush1.bf16.msra.mxu0 %v271
  %522 = vmatprep.subr.bf16.mxu0 %v275
  %523 = vmatpush1.bf16.msra.mxu0 %v274
  %524 = vmatprep.subr.bf16.mxu0 %v278
  %525 = vmatpush1.bf16.msra.mxu0 %v277
  %526 = vmatprep.subr.bf16.mxu0 %v281
  %527 = vmatpush1.bf16.msra.mxu0 %v280
  %528 = vmatprep.subr.bf16.mxu0 %v284
  %529 = vmatpush1.bf16.msra.mxu0 %v283
  %530 = vmatprep.subr.bf16.mxu0 0
  %531 = vmatpush1.bf16.msra.mxu0 0
  %532 = vmatprep.subr.bf16.mxu0 0
  %533 = vmatpush1.bf16.msra.mxu0 0
  %534 = vmatprep.subr.bf16.mxu0 0
  %535 = vmatpush1.bf16.msra.mxu0 0
  %536 = vmatprep.subr.bf16.mxu0 0
  %537 = vmatpush1.bf16.msra.mxu0 0
  %538 = vmatprep.subr.bf16.mxu0 0
  %539 = vmatpush1.bf16.msra.mxu0 0
  %540 = vmatprep.subr.bf16.mxu0 0
  %541 = vmatpush1.bf16.msra.mxu0 0
  %542 = vmatprep.subr.bf16.mxu0 0
  %543 = vmatpush1.bf16.msra.mxu0 0
  %544 = vmatprep.subr.bf16.mxu0 0
  %545 = vmatpush1.bf16.msra.mxu0 0
  %546 = vmatprep.mubr.bf16.mxu0 0
  %547 = vmatmul.mubr.bf16.gmra.mrb[0].mxu0 %v513
  %v548 = vpop.f32.mrb[0].mxu0
  %v549 = vadd.f32 0.0, %v548
  %v550 = vpop.f32.mrb[0].mxu0
  %v551 = vadd.f32 0.0, %v550
  %v552 = vpop.f32.mrb[0].mxu0
  %v553 = vpop.f32.mrb[0].mxu0
  %554 = vdwg.mxu0
  %555 = vmatprep.subr.bf16.mxu0 0
  %556 = vmatpush1.bf16.msra.mxu0 %v264
  %557 = vmatprep.subr.bf16.mxu0 0
  %558 = vmatpush1.bf16.msra.mxu0 %v267
  %559 = vmatprep.subr.bf16.mxu0 0
  %560 = vmatpush1.bf16.msra.mxu0 %v270
  %561 = vmatprep.subr.bf16.mxu0 0
  %562 = vmatpush1.bf16.msra.mxu0 %v273
  %563 = vmatprep.subr.bf16.mxu0 0
  %564 = vmatpush1.bf16.msra.mxu0 %v276
  %565 = vmatprep.subr.bf16.mxu0 0
  %566 = vmatpush1.bf16.msra.mxu0 %v279
  %567 = vmatprep.subr.bf16.mxu0 0
  %568 = vmatpush1.bf16.msra.mxu0 %v282
  %569 = vmatprep.subr.bf16.mxu0 0
  %570 = vmatpush1.bf16.msra.mxu0 %v285
  %571 = vmatprep.subr.bf16.mxu0 0
  %572 = vmatpush1.bf16.msra.mxu0 0
  %573 = vmatprep.subr.bf16.mxu0 0
  %574 = vmatpush1.bf16.msra.mxu0 0
  %575 = vmatprep.subr.bf16.mxu0 0
  %576 = vmatpush1.bf16.msra.mxu0 0
  %577 = vmatprep.subr.bf16.mxu0 0
  %578 = vmatpush1.bf16.msra.mxu0 0
  %579 = vmatprep.subr.bf16.mxu0 0
  %580 = vmatpush1.bf16.msra.mxu0 0
  %581 = vmatprep.subr.bf16.mxu0 0
  %582 = vmatpush1.bf16.msra.mxu0 0
  %583 = vmatprep.subr.bf16.mxu0 0
  %584 = vmatpush1.bf16.msra.mxu0 0
  %585 = vmatprep.subr.bf16.mxu0 0
  %586 = vmatpush1.bf16.msra.mxu0 0
  %587 = vmatprep.mubr.bf16.mxu0 0
  %588 = vmatmul.mubr.bf16.gmra.mrb[0].mxu0 %v513
  %v589 = vpop.f32.mrb[0].mxu0
  %v590 = vadd.f32 0.0, %v589
  %v591 = vpop.f32.mrb[0].mxu0
  %v592 = vpop.f32.mrb[0].mxu0
  %v593 = vpop.f32.mrb[0].mxu0
  %594 = vdwg.mxu0
  %v595 = vadd.f32 %v510, %v549
  %v596 = vxor.u32 %v595, 2147483648
  %v597 = vmul.f32 %v596, 1.442695
  %v598 = vpow.pop %v597
  %v599 = vadd.f32 %v598, 1.0
  %v600 = vrcp.pop %v599
  %v601 = vmul.f32 1.0, %v600
  %v602 = vadd.f32 %v511, %v551
  %v603 = vxor.u32 %v602, 2147483648
  %v604 = vmul.f32 %v603, 1.442695
  %v605 = vpow.pop %v604
  %v606 = vadd.f32 %v605, 1.0
  %v607 = vrcp.pop %v606
  %v608 = vmul.f32 1.0, %v607
  %v609 = vadd.f32 %v590, %v391
  %v610 = vmul.f32 %v601, %v609
  %v611 = vadd.f32 %v512, %v610
  %v612 = vtanh.pop %v611
  %v613 = vsub.f32 1.0, %v608
  %v614 = vmul.f32 %v613, %v612
  %v615 = vmul.f32 %v608, %v508
  %v616 = vadd.f32 %v614, %v615
  %s617 = scalar_lea.vmem %s0, 72
  %v618 = vld [vmem:[%s617] sm:$0xff]
  %v619 = vld [vmem:[%s617 + $0x8] sm:$0xff]
  %v620 = vld [vmem:[%s617 + $0x10] sm:$0xff]
  %v621 = vpack.c.bf16 %v616, %v616
  %622 = vmatprep.subr.bf16.mxu0 %v263
  %623 = vmatpush1.bf16.msra.mxu0 %v262
  %624 = vmatprep.subr.bf16.mxu0 %v266
  %625 = vmatpush1.bf16.msra.mxu0 %v265
  %626 = vmatprep.subr.bf16.mxu0 %v269
  %627 = vmatpush1.bf16.msra.mxu0 %v268
  %628 = vmatprep.subr.bf16.mxu0 %v272
  %629 = vmatpush1.bf16.msra.mxu0 %v271
  %630 = vmatprep.subr.bf16.mxu0 %v275
  %631 = vmatpush1.bf16.msra.mxu0 %v274
  %632 = vmatprep.subr.bf16.mxu0 %v278
  %633 = vmatpush1.bf16.msra.mxu0 %v277
  %634 = vmatprep.subr.bf16.mxu0 %v281
  %635 = vmatpush1.bf16.msra.mxu0 %v280
  %636 = vmatprep.subr.bf16.mxu0 %v284
  %637 = vmatpush1.bf16.msra.mxu0 %v283
  %638 = vmatprep.subr.bf16.mxu0 0
  %639 = vmatpush1.bf16.msra.mxu0 0
  %640 = vmatprep.subr.bf16.mxu0 0
  %641 = vmatpush1.bf16.msra.mxu0 0
  %642 = vmatprep.subr.bf16.mxu0 0
  %643 = vmatpush1.bf16.msra.mxu0 0
  %644 = vmatprep.subr.bf16.mxu0 0
  %645 = vmatpush1.bf16.msra.mxu0 0
  %646 = vmatprep.subr.bf16.mxu0 0
  %647 = vmatpush1.bf16.msra.mxu0 0
  %648 = vmatprep.subr.bf16.mxu0 0
  %649 = vmatpush1.bf16.msra.mxu0 0
  %650 = vmatprep.subr.bf16.mxu0 0
  %651 = vmatpush1.bf16.msra.mxu0 0
  %652 = vmatprep.subr.bf16.mxu0 0
  %653 = vmatpush1.bf16.msra.mxu0 0
  %654 = vmatprep.mubr.bf16.mxu0 0
  %655 = vmatmul.mubr.bf16.gmra.mrb[0].mxu0 %v621
  %v656 = vpop.f32.mrb[0].mxu0
  %v657 = vadd.f32 0.0, %v656
  %v658 = vpop.f32.mrb[0].mxu0
  %v659 = vadd.f32 0.0, %v658
  %v660 = vpop.f32.mrb[0].mxu0
  %v661 = vpop.f32.mrb[0].mxu0
  %662 = vdwg.mxu0
  %663 = vmatprep.subr.bf16.mxu0 0
  %664 = vmatpush1.bf16.msra.mxu0 %v264
  %665 = vmatprep.subr.bf16.mxu0 0
  %666 = vmatpush1.bf16.msra.mxu0 %v267
  %667 = vmatprep.subr.bf16.mxu0 0
  %668 = vmatpush1.bf16.msra.mxu0 %v270
  %669 = vmatprep.subr.bf16.mxu0 0
  %670 = vmatpush1.bf16.msra.mxu0 %v273
  %671 = vmatprep.subr.bf16.mxu0 0
  %672 = vmatpush1.bf16.msra.mxu0 %v276
  %673 = vmatprep.subr.bf16.mxu0 0
  %674 = vmatpush1.bf16.msra.mxu0 %v279
  %675 = vmatprep.subr.bf16.mxu0 0
  %676 = vmatpush1.bf16.msra.mxu0 %v282
  %677 = vmatprep.subr.bf16.mxu0 0
  %678 = vmatpush1.bf16.msra.mxu0 %v285
  %679 = vmatprep.subr.bf16.mxu0 0
  %680 = vmatpush1.bf16.msra.mxu0 0
  %681 = vmatprep.subr.bf16.mxu0 0
  %682 = vmatpush1.bf16.msra.mxu0 0
  %683 = vmatprep.subr.bf16.mxu0 0
  %684 = vmatpush1.bf16.msra.mxu0 0
  %685 = vmatprep.subr.bf16.mxu0 0
  %686 = vmatpush1.bf16.msra.mxu0 0
  %687 = vmatprep.subr.bf16.mxu0 0
  %688 = vmatpush1.bf16.msra.mxu0 0
  %689 = vmatprep.subr.bf16.mxu0 0
  %690 = vmatpush1.bf16.msra.mxu0 0
  %691 = vmatprep.subr.bf16.mxu0 0
  %692 = vmatpush1.bf16.msra.mxu0 0
  %693 = vmatprep.subr.bf16.mxu0 0
  %694 = vmatpush1.bf16.msra.mxu0 0
  %695 = vmatprep.mubr.bf16.mxu0 0
  %696 = vmatmul.mubr.bf16.gmra.mrb[0].mxu0 %v621
  %v697 = vpop.f32.mrb[0].mxu0
  %v698 = vadd.f32 0.0, %v697
  %v699 = vpop.f32.mrb[0].mxu0
  %v700 = vpop.f32.mrb[0].mxu0
  %v701 = vpop.f32.mrb[0].mxu0
  %702 = vdwg.mxu0
  %v703 = vadd.f32 %v618, %v657
  %v704 = vxor.u32 %v703, 2147483648
  %v705 = vmul.f32 %v704, 1.442695
  %v706 = vpow.pop %v705
  %v707 = vadd.f32 %v706, 1.0
  %v708 = vrcp.pop %v707
  %v709 = vmul.f32 1.0, %v708
  %v710 = vadd.f32 %v619, %v659
  %v711 = vxor.u32 %v710, 2147483648
  %v712 = vmul.f32 %v711, 1.442695
  %v713 = vpow.pop %v712
  %v714 = vadd.f32 %v713, 1.0
  %v715 = vrcp.pop %v714
  %v716 = vmul.f32 1.0, %v715
  %v717 = vadd.f32 %v698, %v391
  %v718 = vmul.f32 %v709, %v717
  %v719 = vadd.f32 %v620, %v718
  %v720 = vtanh.pop %v719
  %v721 = vsub.f32 1.0, %v716
  %v722 = vmul.f32 %v721, %v720
  %v723 = vmul.f32 %v716, %v616
  %v724 = vadd.f32 %v722, %v723
  %s725 = scalar_lea.vmem %s0, 96
  %v726 = vld [vmem:[%s725] sm:$0xff]
  %v727 = vld [vmem:[%s725 + $0x8] sm:$0xff]
  %v728 = vld [vmem:[%s725 + $0x10] sm:$0xff]
  %v729 = vpack.c.bf16 %v724, %v724
  %730 = vmatprep.subr.bf16.mxu0 %v263
  %731 = vmatpush1.bf16.msra.mxu0 %v262
  %732 = vmatprep.subr.bf16.mxu0 %v266
  %733 = vmatpush1.bf16.msra.mxu0 %v265
  %734 = vmatprep.subr.bf16.mxu0 %v269
  %735 = vmatpush1.bf16.msra.mxu0 %v268
  %736 = vmatprep.subr.bf16.mxu0 %v272
  %737 = vmatpush1.bf16.msra.mxu0 %v271
  %738 = vmatprep.subr.bf16.mxu0 %v275
  %739 = vmatpush1.bf16.msra.mxu0 %v274
  %740 = vmatprep.subr.bf16.mxu0 %v278
  %741 = vmatpush1.bf16.msra.mxu0 %v277
  %742 = vmatprep.subr.bf16.mxu0 %v281
  %743 = vmatpush1.bf16.msra.mxu0 %v280
  %744 = vmatprep.subr.bf16.mxu0 %v284
  %745 = vmatpush1.bf16.msra.mxu0 %v283
  %746 = vmatprep.subr.bf16.mxu0 0
  %747 = vmatpush1.bf16.msra.mxu0 0
  %748 = vmatprep.subr.bf16.mxu0 0
  %749 = vmatpush1.bf16.msra.mxu0 0
  %750 = vmatprep.subr.bf16.mxu0 0
  %751 = vmatpush1.bf16.msra.mxu0 0
  %752 = vmatprep.subr.bf16.mxu0 0
  %753 = vmatpush1.bf16.msra.mxu0 0
  %754 = vmatprep.subr.bf16.mxu0 0
  %755 = vmatpush1.bf16.msra.mxu0 0
  %756 = vmatprep.subr.bf16.mxu0 0
  %757 = vmatpush1.bf16.msra.mxu0 0
  %758 = vmatprep.subr.bf16.mxu0 0
  %759 = vmatpush1.bf16.msra.mxu0 0
  %760 = vmatprep.subr.bf16.mxu0 0
  %761 = vmatpush1.bf16.msra.mxu0 0
  %762 = vmatprep.mubr.bf16.mxu0 0
  %763 = vmatmul.mubr.bf16.gmra.mrb[0].mxu0 %v729
  %v764 = vpop.f32.mrb[0].mxu0
  %v765 = vadd.f32 0.0, %v764
  %v766 = vpop.f32.mrb[0].mxu0
  %v767 = vadd.f32 0.0, %v766
  %v768 = vpop.f32.mrb[0].mxu0
  %v769 = vpop.f32.mrb[0].mxu0
  %770 = vdwg.mxu0
  %771 = vmatprep.subr.bf16.mxu0 0
  %772 = vmatpush1.bf16.msra.mxu0 %v264
  %773 = vmatprep.subr.bf16.mxu0 0
  %774 = vmatpush1.bf16.msra.mxu0 %v267
  %775 = vmatprep.subr.bf16.mxu0 0
  %776 = vmatpush1.bf16.msra.mxu0 %v270
  %777 = vmatprep.subr.bf16.mxu0 0
  %778 = vmatpush1.bf16.msra.mxu0 %v273
  %779 = vmatprep.subr.bf16.mxu0 0
  %780 = vmatpush1.bf16.msra.mxu0 %v276
  %781 = vmatprep.subr.bf16.mxu0 0
  %782 = vmatpush1.bf16.msra.mxu0 %v279
  %783 = vmatprep.subr.bf16.mxu0 0
  %784 = vmatpush1.bf16.msra.mxu0 %v282
  %785 = vmatprep.subr.bf16.mxu0 0
  %786 = vmatpush1.bf16.msra.mxu0 %v285
  %787 = vmatprep.subr.bf16.mxu0 0
  %788 = vmatpush1.bf16.msra.mxu0 0
  %789 = vmatprep.subr.bf16.mxu0 0
  %790 = vmatpush1.bf16.msra.mxu0 0
  %791 = vmatprep.subr.bf16.mxu0 0
  %792 = vmatpush1.bf16.msra.mxu0 0
  %793 = vmatprep.subr.bf16.mxu0 0
  %794 = vmatpush1.bf16.msra.mxu0 0
  %795 = vmatprep.subr.bf16.mxu0 0
  %796 = vmatpush1.bf16.msra.mxu0 0
  %797 = vmatprep.subr.bf16.mxu0 0
  %798 = vmatpush1.bf16.msra.mxu0 0
  %799 = vmatprep.subr.bf16.mxu0 0
  %800 = vmatpush1.bf16.msra.mxu0 0
  %801 = vmatprep.subr.bf16.mxu0 0
  %802 = vmatpush1.bf16.msra.mxu0 0
  %803 = vmatprep.mubr.bf16.mxu0 0
  %804 = vmatmul.mubr.bf16.gmra.mrb[0].mxu0 %v729
  %v805 = vpop.f32.mrb[0].mxu0
  %v806 = vadd.f32 0.0, %v805
  %v807 = vpop.f32.mrb[0].mxu0
  %v808 = vpop.f32.mrb[0].mxu0
  %v809 = vpop.f32.mrb[0].mxu0
  %810 = vdwg.mxu0
  %v811 = vadd.f32 %v726, %v765
  %v812 = vxor.u32 %v811, 2147483648
  %v813 = vmul.f32 %v812, 1.442695
  %v814 = vpow.pop %v813
  %v815 = vadd.f32 %v814, 1.0
  %v816 = vrcp.pop %v815
  %v817 = vmul.f32 1.0, %v816
  %v818 = vadd.f32 %v727, %v767
  %v819 = vxor.u32 %v818, 2147483648
  %v820 = vmul.f32 %v819, 1.442695
  %v821 = vpow.pop %v820
  %v822 = vadd.f32 %v821, 1.0
  %v823 = vrcp.pop %v822
  %v824 = vmul.f32 1.0, %v823
  %v825 = vadd.f32 %v806, %v391
  %v826 = vmul.f32 %v817, %v825
  %v827 = vadd.f32 %v728, %v826
  %v828 = vtanh.pop %v827
  %v829 = vsub.f32 1.0, %v824
  %v830 = vmul.f32 %v829, %v828
  %v831 = vmul.f32 %v824, %v724
  %v832 = vadd.f32 %v830, %v831
  %s833 = scalar_lea.vmem %s0, 120
  %v834 = vld [vmem:[%s833] sm:$0xff]
  %v835 = vld [vmem:[%s833 + $0x8] sm:$0xff]
  %v836 = vld [vmem:[%s833 + $0x10] sm:$0xff]
  %v837 = vpack.c.bf16 %v832, %v832
  %838 = vmatprep.subr.bf16.mxu0 %v263
  %839 = vmatpush1.bf16.msra.mxu0 %v262
  %840 = vmatprep.subr.bf16.mxu0 %v266
  %841 = vmatpush1.bf16.msra.mxu0 %v265
  %842 = vmatprep.subr.bf16.mxu0 %v269
  %843 = vmatpush1.bf16.msra.mxu0 %v268
  %844 = vmatprep.subr.bf16.mxu0 %v272
  %845 = vmatpush1.bf16.msra.mxu0 %v271
  %846 = vmatprep.subr.bf16.mxu0 %v275
  %847 = vmatpush1.bf16.msra.mxu0 %v274
  %848 = vmatprep.subr.bf16.mxu0 %v278
  %849 = vmatpush1.bf16.msra.mxu0 %v277
  %850 = vmatprep.subr.bf16.mxu0 %v281
  %851 = vmatpush1.bf16.msra.mxu0 %v280
  %852 = vmatprep.subr.bf16.mxu0 %v284
  %853 = vmatpush1.bf16.msra.mxu0 %v283
  %854 = vmatprep.subr.bf16.mxu0 0
  %855 = vmatpush1.bf16.msra.mxu0 0
  %856 = vmatprep.subr.bf16.mxu0 0
  %857 = vmatpush1.bf16.msra.mxu0 0
  %858 = vmatprep.subr.bf16.mxu0 0
  %859 = vmatpush1.bf16.msra.mxu0 0
  %860 = vmatprep.subr.bf16.mxu0 0
  %861 = vmatpush1.bf16.msra.mxu0 0
  %862 = vmatprep.subr.bf16.mxu0 0
  %863 = vmatpush1.bf16.msra.mxu0 0
  %864 = vmatprep.subr.bf16.mxu0 0
  %865 = vmatpush1.bf16.msra.mxu0 0
  %866 = vmatprep.subr.bf16.mxu0 0
  %867 = vmatpush1.bf16.msra.mxu0 0
  %868 = vmatprep.subr.bf16.mxu0 0
  %869 = vmatpush1.bf16.msra.mxu0 0
  %870 = vmatprep.mubr.bf16.mxu0 0
  %871 = vmatmul.mubr.bf16.gmra.mrb[0].mxu0 %v837
  %v872 = vpop.f32.mrb[0].mxu0
  %v873 = vadd.f32 0.0, %v872
  %v874 = vpop.f32.mrb[0].mxu0
  %v875 = vadd.f32 0.0, %v874
  %v876 = vpop.f32.mrb[0].mxu0
  %v877 = vpop.f32.mrb[0].mxu0
  %878 = vdwg.mxu0
  %879 = vmatprep.subr.bf16.mxu0 0
  %880 = vmatpush1.bf16.msra.mxu0 %v264
  %881 = vmatprep.subr.bf16.mxu0 0
  %882 = vmatpush1.bf16.msra.mxu0 %v267
  %883 = vmatprep.subr.bf16.mxu0 0
  %884 = vmatpush1.bf16.msra.mxu0 %v270
  %885 = vmatprep.subr.bf16.mxu0 0
  %886 = vmatpush1.bf16.msra.mxu0 %v273
  %887 = vmatprep.subr.bf16.mxu0 0
  %888 = vmatpush1.bf16.msra.mxu0 %v276
  %889 = vmatprep.subr.bf16.mxu0 0
  %890 = vmatpush1.bf16.msra.mxu0 %v279
  %891 = vmatprep.subr.bf16.mxu0 0
  %892 = vmatpush1.bf16.msra.mxu0 %v282
  %893 = vmatprep.subr.bf16.mxu0 0
  %894 = vmatpush1.bf16.msra.mxu0 %v285
  %895 = vmatprep.subr.bf16.mxu0 0
  %896 = vmatpush1.bf16.msra.mxu0 0
  %897 = vmatprep.subr.bf16.mxu0 0
  %898 = vmatpush1.bf16.msra.mxu0 0
  %899 = vmatprep.subr.bf16.mxu0 0
  %900 = vmatpush1.bf16.msra.mxu0 0
  %901 = vmatprep.subr.bf16.mxu0 0
  %902 = vmatpush1.bf16.msra.mxu0 0
  %903 = vmatprep.subr.bf16.mxu0 0
  %904 = vmatpush1.bf16.msra.mxu0 0
  %905 = vmatprep.subr.bf16.mxu0 0
  %906 = vmatpush1.bf16.msra.mxu0 0
  %907 = vmatprep.subr.bf16.mxu0 0
  %908 = vmatpush1.bf16.msra.mxu0 0
  %909 = vmatprep.subr.bf16.mxu0 0
  %910 = vmatpush1.bf16.msra.mxu0 0
  %911 = vmatprep.mubr.bf16.mxu0 0
  %912 = vmatmul.mubr.bf16.gmra.mrb[0].mxu0 %v837
  %v913 = vpop.f32.mrb[0].mxu0
  %v914 = vadd.f32 0.0, %v913
  %v915 = vpop.f32.mrb[0].mxu0
  %v916 = vpop.f32.mrb[0].mxu0
  %v917 = vpop.f32.mrb[0].mxu0
  %918 = vdwg.mxu0
  %v919 = vadd.f32 %v834, %v873
  %v920 = vxor.u32 %v919, 2147483648
  %v921 = vmul.f32 %v920, 1.442695
  %v922 = vpow.pop %v921
  %v923 = vadd.f32 %v922, 1.0
  %v924 = vrcp.pop %v923
  %v925 = vmul.f32 1.0, %v924
  %v926 = vadd.f32 %v835, %v875
  %v927 = vxor.u32 %v926, 2147483648
  %v928 = vmul.f32 %v927, 1.442695
  %v929 = vpow.pop %v928
  %v930 = vadd.f32 %v929, 1.0
  %v931 = vrcp.pop %v930
  %v932 = vmul.f32 1.0, %v931
  %v933 = vadd.f32 %v914, %v391
  %v934 = vmul.f32 %v925, %v933
  %v935 = vadd.f32 %v836, %v934
  %v936 = vtanh.pop %v935
  %v937 = vsub.f32 1.0, %v932
  %v938 = vmul.f32 %v937, %v936
  %v939 = vmul.f32 %v932, %v832
  %v940 = vadd.f32 %v938, %v939
  %s941 = scalar_lea.vmem %s0, 144
  %v942 = vld [vmem:[%s941] sm:$0xff]
  %v943 = vld [vmem:[%s941 + $0x8] sm:$0xff]
  %v944 = vld [vmem:[%s941 + $0x10] sm:$0xff]
  %v945 = vpack.c.bf16 %v940, %v940
  %946 = vmatprep.subr.bf16.mxu0 %v263
  %947 = vmatpush1.bf16.msra.mxu0 %v262
  %948 = vmatprep.subr.bf16.mxu0 %v266
  %949 = vmatpush1.bf16.msra.mxu0 %v265
  %950 = vmatprep.subr.bf16.mxu0 %v269
  %951 = vmatpush1.bf16.msra.mxu0 %v268
  %952 = vmatprep.subr.bf16.mxu0 %v272
  %953 = vmatpush1.bf16.msra.mxu0 %v271
  %954 = vmatprep.subr.bf16.mxu0 %v275
  %955 = vmatpush1.bf16.msra.mxu0 %v274
  %956 = vmatprep.subr.bf16.mxu0 %v278
  %957 = vmatpush1.bf16.msra.mxu0 %v277
  %958 = vmatprep.subr.bf16.mxu0 %v281
  %959 = vmatpush1.bf16.msra.mxu0 %v280
  %960 = vmatprep.subr.bf16.mxu0 %v284
  %961 = vmatpush1.bf16.msra.mxu0 %v283
  %962 = vmatprep.subr.bf16.mxu0 0
  %963 = vmatpush1.bf16.msra.mxu0 0
  %964 = vmatprep.subr.bf16.mxu0 0
  %965 = vmatpush1.bf16.msra.mxu0 0
  %966 = vmatprep.subr.bf16.mxu0 0
  %967 = vmatpush1.bf16.msra.mxu0 0
  %968 = vmatprep.subr.bf16.mxu0 0
  %969 = vmatpush1.bf16.msra.mxu0 0
  %970 = vmatprep.subr.bf16.mxu0 0
  %971 = vmatpush1.bf16.msra.mxu0 0
  %972 = vmatprep.subr.bf16.mxu0 0
  %973 = vmatpush1.bf16.msra.mxu0 0
  %974 = vmatprep.subr.bf16.mxu0 0
  %975 = vmatpush1.bf16.msra.mxu0 0
  %976 = vmatprep.subr.bf16.mxu0 0
  %977 = vmatpush1.bf16.msra.mxu0 0
  %978 = vmatprep.mubr.bf16.mxu0 0
  %979 = vmatmul.mubr.bf16.gmra.mrb[0].mxu0 %v945
  %v980 = vpop.f32.mrb[0].mxu0
  %v981 = vadd.f32 0.0, %v980
  %v982 = vpop.f32.mrb[0].mxu0
  %v983 = vadd.f32 0.0, %v982
  %v984 = vpop.f32.mrb[0].mxu0
  %v985 = vpop.f32.mrb[0].mxu0
  %986 = vdwg.mxu0
  %987 = vmatprep.subr.bf16.mxu0 0
  %988 = vmatpush1.bf16.msra.mxu0 %v264
  %989 = vmatprep.subr.bf16.mxu0 0
  %990 = vmatpush1.bf16.msra.mxu0 %v267
  %991 = vmatprep.subr.bf16.mxu0 0
  %992 = vmatpush1.bf16.msra.mxu0 %v270
  %993 = vmatprep.subr.bf16.mxu0 0
  %994 = vmatpush1.bf16.msra.mxu0 %v273
  %995 = vmatprep.subr.bf16.mxu0 0
  %996 = vmatpush1.bf16.msra.mxu0 %v276
  %997 = vmatprep.subr.bf16.mxu0 0
  %998 = vmatpush1.bf16.msra.mxu0 %v279
  %999 = vmatprep.subr.bf16.mxu0 0
  %1000 = vmatpush1.bf16.msra.mxu0 %v282
  %1001 = vmatprep.subr.bf16.mxu0 0
  %1002 = vmatpush1.bf16.msra.mxu0 %v285
  %1003 = vmatprep.subr.bf16.mxu0 0
  %1004 = vmatpush1.bf16.msra.mxu0 0
  %1005 = vmatprep.subr.bf16.mxu0 0
  %1006 = vmatpush1.bf16.msra.mxu0 0
  %1007 = vmatprep.subr.bf16.mxu0 0
  %1008 = vmatpush1.bf16.msra.mxu0 0
  %1009 = vmatprep.subr.bf16.mxu0 0
  %1010 = vmatpush1.bf16.msra.mxu0 0
  %1011 = vmatprep.subr.bf16.mxu0 0
  %1012 = vmatpush1.bf16.msra.mxu0 0
  %1013 = vmatprep.subr.bf16.mxu0 0
  %1014 = vmatpush1.bf16.msra.mxu0 0
  %1015 = vmatprep.subr.bf16.mxu0 0
  %1016 = vmatpush1.bf16.msra.mxu0 0
  %1017 = vmatprep.subr.bf16.mxu0 0
  %1018 = vmatpush1.bf16.msra.mxu0 0
  %1019 = vmatprep.mubr.bf16.mxu0 0
  %1020 = vmatmul.mubr.bf16.gmra.mrb[0].mxu0 %v945
  %v1021 = vpop.f32.mrb[0].mxu0
  %v1022 = vadd.f32 0.0, %v1021
  %v1023 = vpop.f32.mrb[0].mxu0
  %v1024 = vpop.f32.mrb[0].mxu0
  %v1025 = vpop.f32.mrb[0].mxu0
  %1026 = vdwg.mxu0
  %v1027 = vadd.f32 %v942, %v981
  %v1028 = vxor.u32 %v1027, 2147483648
  %v1029 = vmul.f32 %v1028, 1.442695
  %v1030 = vpow.pop %v1029
  %v1031 = vadd.f32 %v1030, 1.0
  %v1032 = vrcp.pop %v1031
  %v1033 = vmul.f32 1.0, %v1032
  %v1034 = vadd.f32 %v943, %v983
  %v1035 = vxor.u32 %v1034, 2147483648
  %v1036 = vmul.f32 %v1035, 1.442695
  %v1037 = vpow.pop %v1036
  %v1038 = vadd.f32 %v1037, 1.0
  %v1039 = vrcp.pop %v1038
  %v1040 = vmul.f32 1.0, %v1039
  %v1041 = vadd.f32 %v1022, %v391
  %v1042 = vmul.f32 %v1033, %v1041
  %v1043 = vadd.f32 %v944, %v1042
  %v1044 = vtanh.pop %v1043
  %v1045 = vsub.f32 1.0, %v1040
  %v1046 = vmul.f32 %v1045, %v1044
  %v1047 = vmul.f32 %v1040, %v940
  %v1048 = vadd.f32 %v1046, %v1047
  %s1049 = scalar_lea.vmem %s0, 168
  %v1050 = vld [vmem:[%s1049] sm:$0xff]
  %v1051 = vld [vmem:[%s1049 + $0x8] sm:$0xff]
  %v1052 = vld [vmem:[%s1049 + $0x10] sm:$0xff]
  %v1053 = vpack.c.bf16 %v1048, %v1048
  %1054 = vmatprep.subr.bf16.mxu0 %v263
  %1055 = vmatpush1.bf16.msra.mxu0 %v262
  %1056 = vmatprep.subr.bf16.mxu0 %v266
  %1057 = vmatpush1.bf16.msra.mxu0 %v265
  %1058 = vmatprep.subr.bf16.mxu0 %v269
  %1059 = vmatpush1.bf16.msra.mxu0 %v268
  %1060 = vmatprep.subr.bf16.mxu0 %v272
  %1061 = vmatpush1.bf16.msra.mxu0 %v271
  %1062 = vmatprep.subr.bf16.mxu0 %v275
  %1063 = vmatpush1.bf16.msra.mxu0 %v274
  %1064 = vmatprep.subr.bf16.mxu0 %v278
  %1065 = vmatpush1.bf16.msra.mxu0 %v277
  %1066 = vmatprep.subr.bf16.mxu0 %v281
  %1067 = vmatpush1.bf16.msra.mxu0 %v280
  %1068 = vmatprep.subr.bf16.mxu0 %v284
  %1069 = vmatpush1.bf16.msra.mxu0 %v283
  %1070 = vmatprep.subr.bf16.mxu0 0
  %1071 = vmatpush1.bf16.msra.mxu0 0
  %1072 = vmatprep.subr.bf16.mxu0 0
  %1073 = vmatpush1.bf16.msra.mxu0 0
  %1074 = vmatprep.subr.bf16.mxu0 0
  %1075 = vmatpush1.bf16.msra.mxu0 0
  %1076 = vmatprep.subr.bf16.mxu0 0
  %1077 = vmatpush1.bf16.msra.mxu0 0
  %1078 = vmatprep.subr.bf16.mxu0 0
  %1079 = vmatpush1.bf16.msra.mxu0 0
  %1080 = vmatprep.subr.bf16.mxu0 0
  %1081 = vmatpush1.bf16.msra.mxu0 0
  %1082 = vmatprep.subr.bf16.mxu0 0
  %1083 = vmatpush1.bf16.msra.mxu0 0
  %1084 = vmatprep.subr.bf16.mxu0 0
  %1085 = vmatpush1.bf16.msra.mxu0 0
  %1086 = vmatprep.mubr.bf16.mxu0 0
  %1087 = vmatmul.mubr.bf16.gmra.mrb[0].mxu0 %v1053
  %v1088 = vpop.f32.mrb[0].mxu0
  %v1089 = vadd.f32 0.0, %v1088
  %v1090 = vpop.f32.mrb[0].mxu0
  %v1091 = vadd.f32 0.0, %v1090
  %v1092 = vpop.f32.mrb[0].mxu0
  %v1093 = vpop.f32.mrb[0].mxu0
  %1094 = vdwg.mxu0
  %1095 = vmatprep.subr.bf16.mxu0 0
  %1096 = vmatpush1.bf16.msra.mxu0 %v264
  %1097 = vmatprep.subr.bf16.mxu0 0
  %1098 = vmatpush1.bf16.msra.mxu0 %v267
  %1099 = vmatprep.subr.bf16.mxu0 0
  %1100 = vmatpush1.bf16.msra.mxu0 %v270
  %1101 = vmatprep.subr.bf16.mxu0 0
  %1102 = vmatpush1.bf16.msra.mxu0 %v273
  %1103 = vmatprep.subr.bf16.mxu0 0
  %1104 = vmatpush1.bf16.msra.mxu0 %v276
  %1105 = vmatprep.subr.bf16.mxu0 0
  %1106 = vmatpush1.bf16.msra.mxu0 %v279
  %1107 = vmatprep.subr.bf16.mxu0 0
  %1108 = vmatpush1.bf16.msra.mxu0 %v282
  %1109 = vmatprep.subr.bf16.mxu0 0
  %1110 = vmatpush1.bf16.msra.mxu0 %v285
  %1111 = vmatprep.subr.bf16.mxu0 0
  %1112 = vmatpush1.bf16.msra.mxu0 0
  %1113 = vmatprep.subr.bf16.mxu0 0
  %1114 = vmatpush1.bf16.msra.mxu0 0
  %1115 = vmatprep.subr.bf16.mxu0 0
  %1116 = vmatpush1.bf16.msra.mxu0 0
  %1117 = vmatprep.subr.bf16.mxu0 0
  %1118 = vmatpush1.bf16.msra.mxu0 0
  %1119 = vmatprep.subr.bf16.mxu0 0
  %1120 = vmatpush1.bf16.msra.mxu0 0
  %1121 = vmatprep.subr.bf16.mxu0 0
  %1122 = vmatpush1.bf16.msra.mxu0 0
  %1123 = vmatprep.subr.bf16.mxu0 0
  %1124 = vmatpush1.bf16.msra.mxu0 0
  %1125 = vmatprep.subr.bf16.mxu0 0
  %1126 = vmatpush1.bf16.msra.mxu0 0
  %1127 = vmatprep.mubr.bf16.mxu0 0
  %1128 = vmatmul.mubr.bf16.gmra.mrb[0].mxu0 %v1053
  %v1129 = vpop.f32.mrb[0].mxu0
  %v1130 = vadd.f32 0.0, %v1129
  %v1131 = vpop.f32.mrb[0].mxu0
  %v1132 = vpop.f32.mrb[0].mxu0
  %v1133 = vpop.f32.mrb[0].mxu0
  %1134 = vdwg.mxu0
  %v1135 = vadd.f32 %v1050, %v1089
  %v1136 = vxor.u32 %v1135, 2147483648
  %v1137 = vmul.f32 %v1136, 1.442695
  %v1138 = vpow.pop %v1137
  %v1139 = vadd.f32 %v1138, 1.0
  %v1140 = vrcp.pop %v1139
  %v1141 = vmul.f32 1.0, %v1140
  %v1142 = vadd.f32 %v1051, %v1091
  %v1143 = vxor.u32 %v1142, 2147483648
  %v1144 = vmul.f32 %v1143, 1.442695
  %v1145 = vpow.pop %v1144
  %v1146 = vadd.f32 %v1145, 1.0
  %v1147 = vrcp.pop %v1146
  %v1148 = vmul.f32 1.0, %v1147
  %v1149 = vadd.f32 %v1130, %v391
  %v1150 = vmul.f32 %v1141, %v1149
  %v1151 = vadd.f32 %v1052, %v1150
  %v1152 = vtanh.pop %v1151
  %v1153 = vsub.f32 1.0, %v1148
  %v1154 = vmul.f32 %v1153, %v1152
  %v1155 = vmul.f32 %v1148, %v1048
  %v1156 = vadd.f32 %v1154, %v1155
  %1157 = vst [vmem:[#allocation2] sm:$0xff] %v1156
  // Predicated region
  $region51: #{gru_uni_to_linear.3} parent=0 // pred_check
    %p1158 = pneg %p13
  $region52: #{gru_uni_to_linear.3} parent=0 // pred_check_branch
    %1160 = sbr.rel (%p1158) target = $region54
  $region53: #{gru_uni_to_linear.3} parent=0 // pred_region
    %1161 = vst [vmem:[%s3] sm:$0xff] %v1156
  $region54: #{gru_uni_to_linear.3} parent=0 // pred_fallthru
    _
  // Predicated region
  $region55: #{gru_uni_to_linear.3} parent=0 // pred_check
    _
  $region56: #{gru_uni_to_linear.3} parent=0 // pred_check_branch
    %1163 = sbr.rel (0) target = $region58
  $region57: #{gru_uni_to_linear.3} parent=0 // pred_region
    _
  $region58: #{gru_uni_to_linear.3} parent=0 // pred_fallthru
    _
  // Predicated region
  $region59: #{gru_uni_to_linear.3} parent=0 // pred_check
    _
  $region60: #{gru_uni_to_linear.3} parent=0 // pred_check_branch
    %1165 = sbr.rel (0) target = $region62
  $region61: #{gru_uni_to_linear.3} parent=0 // pred_region
    _
  $region62: #{gru_uni_to_linear.3} parent=0 // pred_fallthru
    _
  %1166 = vsyncmov [#allocation4]
  %s1167 = vpop.sfrf %1166
  %p1168 = scmp.eq.s32.totalorder %s1167, 0
  %p1169 = pneg %p1168
  %1171 = shalt.err (%p1169)

</llo_original>
